<compile_context>
chip_gen: v6e
topology: v6e:2x2x1
jax: 0.10.0
libtpu: 0.0.40
codegen_flags: <defaults>
</compile_context>

<pallas_src>
import functools
import math

import numpy as np
import jax
import jax.numpy as jnp
from jax import lax
from jax.experimental import pallas as pl
from jax.experimental.pallas import tpu as pltpu


def _round_up(x, m):
    return ((x + m - 1) // m) * m


def posenc_kernel(*refs, use_sincos, use_proj, dh):
    if use_sincos and not use_proj:
        (feat_ref, pos_ref, w1_ref, b1_ref, w2_ref, b2_ref,
         fm_ref, out_ref) = refs
    else:
        feat_ref, pos_ref, w1_ref, b1_ref, w2_ref, b2_ref, out_ref = refs
        fm_ref = None

    pos = pos_ref[...].astype(jnp.float32)               # (TR, 3)
    px, py, pz = pos[:, 0:1], pos[:, 1:2], pos[:, 2:3]   # (TR, 1) each

    # ---- first affine layer: K=3 is far too small for the MXU, do it as
    #      three rank-1 broadcasts on the VPU. ------------------------------
    w1 = w1_ref[...]                                      # (3, K1)
    affine = (px * w1[0:1, :] + py * w1[1:2, :] + pz * w1[2:3, :]
              + b1_ref[...])                              # (TR, K1)

    if use_sincos and use_proj:
        # Fused LHS: lanes [0, Dh) = ReLU MLP hidden, lanes [Dh, Dh+6F) =
        # sinusoidal encoding.  cos is folded into sin via the +pi/2 phase
        # already packed into b1 (single jnp.sin, no dual sin/cos work).
        lane = lax.broadcasted_iota(jnp.int32, affine.shape, 1)
        lhs = jnp.where(lane < dh, jnp.maximum(affine, 0.0), jnp.sin(affine))
    else:
        lhs = jnp.maximum(affine, 0.0)                    # plain ReLU hidden

    # ---- single stacked (TR, K2) @ (K2, D) MXU matmul ----------------------
    lhs = lhs.astype(w2_ref.dtype)                        # bf16 MXU if requested
    pe = jnp.dot(lhs, w2_ref[...],
                 preferred_element_type=jnp.float32) + b2_ref[...]

    if use_sincos and not use_proj:
        # 6F == D: sinusoidal encoding is added directly (no projection).
        fm = fm_ref[...]                                  # (4, 6F): rows 0-2 freqs, row 3 = pi/2 phase
        scaled = (px * fm[0:1, :] + py * fm[1:2, :] + pz * fm[2:3, :]
                  + fm[3:4, :])
        pe = pe + jnp.sin(scaled)                         # cos(x) == sin(x + pi/2)

    out_ref[...] = (feat_ref[...].astype(jnp.float32) + pe).astype(out_ref.dtype)


def _build_freq_phase(freqs):
    """freq3: (3, 6F) with freq3[a, a*2F + 2f + {0,1}] = freqs[f], zeros elsewhere.
    phase1: (1, 6F) with pi/2 on odd lanes (cos(x) = sin(x + pi/2))."""
    freqs = np.asarray(freqs, np.float32)
    F = freqs.shape[0]
    freq3 = np.zeros((3, 6 * F), np.float32)
    for a in range(3):
        freq3[a, 2 * F * a + 0:2 * F * (a + 1):2] = freqs
        freq3[a, 2 * F * a + 1:2 * F * (a + 1):2] = freqs
    phase1 = np.zeros((1, 6 * F), np.float32)
    phase1[0, 1::2] = np.float32(math.pi / 2.0)
    return jnp.asarray(freq3), jnp.asarray(phase1)


def positional_encoding_3d_forward(features, positions, params, freqs,
                                   proj_params=None, row_tile=1024,
                                   mxu_dtype=None):
    """Pallas implementation of PositionalEncoding3D.forward.

    features: (..., D), positions: (..., 3).  Returns features + pos_encoding.
    mxu_dtype: optional dtype (e.g. jnp.bfloat16) for the matmul operands;
    accumulation stays float32.
    """
    w1, b1, w2, b2 = params
    *lead, D = features.shape
    assert positions.shape == tuple(lead) + (3,)
    Dh = w1.shape[1]
    assert w1.shape == (3, Dh) and w2.shape == (Dh, D)

    F = int(freqs.shape[0])
    use_sincos = F > 0
    six_f = 6 * F
    use_proj = use_sincos and (six_f != D)
    if use_proj and proj_params is None:
        raise ValueError("hidden_dim not divisible by 6 requires proj_params")

    if use_sincos:
        freq3, phase1 = _build_freq_phase(freqs)

    # ---- wrapper-level parameter packing (fused proj path) -----------------
    if use_proj:
        wp, bp = proj_params
        assert wp.shape == (six_f, D)
        w1k = jnp.concatenate([w1, freq3], axis=1)                  # (3, Dh+6F)
        b1k = jnp.concatenate([b1.reshape(1, Dh), phase1], axis=1)  # (1, Dh+6F)
        w2k = jnp.concatenate([w2, wp], axis=0)                     # (Dh+6F, D)
        b2k = (b2 + bp).reshape(1, D)
    else:
        w1k, b1k = w1, b1.reshape(1, Dh)
        w2k, b2k = w2, b2.reshape(1, D)
    K1 = w1k.shape[1]
    K2 = w2k.shape[0]
    if mxu_dtype is not None:
        w2k = w2k.astype(mxu_dtype)   # bf16 weights: ~3x MXU passes saved, half the DMA

    R = int(np.prod(lead)) if lead else 1
    feat2 = features.reshape(R, D)
    pos2 = positions.reshape(R, 3)

    # ---- row-tile selection -------------------------------------------------
    row_tile = max(8, (int(row_tile) // 8) * 8)          # keep TR a multiple of 8
    TR = min(row_tile, _round_up(R, 8))

    # Cap so 2x(double-buffered streamed blocks) + weights stay well inside the
    # ~32 MiB scoped-VMEM default (v7x has only 64 MiB physical VMEM).
    f_item = features.dtype.itemsize
    p_item = positions.dtype.itemsize
    const_bytes = (w1k.size + b1k.size + b2k.size) * 4 + K2 * D * w2k.dtype.itemsize
    if use_sincos and not use_proj:
        const_bytes += 4 * six_f * 4
    stream_row_bytes = 2 * D * f_item + 3 * p_item       # feat in + out + positions
    budget = (24 << 20) - 2 * const_bytes
    tr_cap = max(8, (budget // (2 * stream_row_bytes)) // 8 * 8)
    TR = min(TR, tr_cap)

    # v7x has 2 TensorCores sharded over the "parallel" axis: keep >= 2 steps.
    if R > 8 and _round_up(R, TR) // TR < 2:
        TR = max(8, _round_up((R + 1) // 2, 8))

    Rpad = _round_up(R, TR)
    if Rpad != R:
        feat2 = jnp.pad(feat2, ((0, Rpad - R), (0, 0)))
        pos2 = jnp.pad(pos2, ((0, Rpad - R), (0, 0)))

    inputs = [feat2, pos2, w1k, b1k, w2k, b2k]
    in_specs = [
        pl.BlockSpec((TR, D), lambda i: (i, 0)),
        pl.BlockSpec((TR, 3), lambda i: (i, 0)),
        # Grid-invariant operands: constant index_maps, fetched once.
        pl.BlockSpec((3, K1), lambda i: (0, 0)),
        pl.BlockSpec((1, K1), lambda i: (0, 0)),
        pl.BlockSpec((K2, D), lambda i: (0, 0)),
        pl.BlockSpec((1, D), lambda i: (0, 0)),
    ]
    if use_sincos and not use_proj:
        fm = jnp.concatenate([freq3, phase1], axis=0)    # (4, 6F)
        inputs.append(fm)
        in_specs.append(pl.BlockSpec((4, six_f), lambda i: (0, 0)))

    kernel = functools.partial(posenc_kernel, use_sincos=use_sincos,
                               use_proj=use_proj, dh=Dh)

    out = pl.pallas_call(
        kernel,
        out_shape=jax.ShapeDtypeStruct((Rpad, D), features.dtype),
        grid_spec=pltpu.PrefetchScalarGridSpec(
            num_scalar_prefetch=0,
            grid=(Rpad // TR,),
            in_specs=in_specs,
            out_specs=pl.BlockSpec((TR, D), lambda i: (i, 0)),
        ),
        compiler_params=pltpu.CompilerParams(
            dimension_semantics=("parallel",)),
    )(*inputs)

    return out[:R].reshape(*lead, D)


# --------------------------- parameter helpers -------------------------------

def make_freqs(hidden_dim, max_freq):
    F = hidden_dim // 6
    if F == 0:
        return jnp.zeros((0,), jnp.float32)
    f = jnp.arange(F, dtype=jnp.float32)
    f = 2.0 * f / F
    return jnp.power(float(max_freq), f)


def init_linear(key, fan_in, fan_out):
    """PyTorch nn.Linear default init; weight stored as (in, out)."""
    kw, kb = jax.random.split(key)
    bound = 1.0 / math.sqrt(fan_in)
    w = jax.random.uniform(kw, (fan_in, fan_out), jnp.float32, -bound, bound)
    b = jax.random.uniform(kb, (fan_out,), jnp.float32, -bound, bound)
    return w, b


def init_mlp_params(key, hidden_dim):
    k1, k2 = jax.random.split(key)
    Dh = hidden_dim // 2
    w1, b1 = init_linear(k1, 3, Dh)
    w2, b2 = init_linear(k2, Dh, hidden_dim)
    return w1, b1, w2, b2


# --------------------------- pure-jnp reference -------------------------------

def reference_forward(features, positions, params, freqs, proj_params=None):
    """Replicates PositionalEncoding3D.forward (torch semantics) in plain jnp."""
    w1, b1, w2, b2 = params
    h = jnp.maximum(jnp.dot(positions, w1, precision=lax.Precision.HIGHEST) + b1, 0.0)
    pe = jnp.dot(h, w2, precision=lax.Precision.HIGHEST) + b2
    F = int(freqs.shape[0])
    if F > 0:
        ps = positions[..., None] * freqs                       # (..., 3, F)
        sc = jnp.stack([jnp.sin(ps), jnp.cos(ps)], axis=-1)     # (..., 3, F, 2)
        sc = sc.reshape(sc.shape[:-2] + (2 * F,))               # (..., 3, 2F)
        sc = sc.reshape(sc.shape[:-2] + (6 * F,))               # (..., 6F)
        if sc.shape[-1] != features.shape[-1]:
            wp, bp = proj_params
            sc = jnp.dot(sc, wp, precision=lax.Precision.HIGHEST) + bp
        pe = pe + sc
    return features + pe


if __name__ == "__main__":
    key = jax.random.PRNGKey(0)
    max_freq = 10

    # ---- Case 1: hidden_dim divisible by 6 (no sincos projection) ----------
    B, N, D = 2, 64, 384
    k1, k2, k3, k4 = jax.random.split(key, 4)
    features = jax.random.normal(k1, (B, N, D), jnp.float32)
    positions = jax.random.uniform(k2, (B, N, 3), jnp.float32, -1.0, 1.0)
    params = init_mlp_params(k3, D)
    freqs = make_freqs(D, max_freq)

    out = positional_encoding_3d_forward(features, positions, params, freqs)
    out = jax.block_until_ready(out)
    ref = reference_forward(features, positions, params, freqs)
    np.testing.assert_allclose(np.asarray(out), np.asarray(ref),
                               rtol=1e-3, atol=1e-3)

    # ---- Case 2: hidden_dim NOT divisible by 6 -> fused sincos_proj path ----
    B2, N2, D2 = 2, 200, 64
    ka, kb, kc, kd = jax.random.split(k4, 4)
    features2 = jax.random.normal(ka, (B2, N2, D2), jnp.float32)
    positions2 = jax.random.uniform(kb, (B2, N2, 3), jnp.float32, -1.0, 1.0)
    params2 = init_mlp_params(kc, D2)
    freqs2 = make_freqs(D2, max_freq)                    # F = 10 -> 6F = 60 != 64
    proj2 = init_linear(kd, 6 * (D2 // 6), D2)

    out2 = positional_encoding_3d_forward(features2, positions2, params2,
                                          freqs2, proj_params=proj2)
    out2 = jax.block_until_ready(out2)
    ref2 = reference_forward(features2, positions2, params2, freqs2,
                             proj_params=proj2)
    np.testing.assert_allclose(np.asarray(out2), np.asarray(ref2),
                               rtol=1e-3, atol=1e-3)

    # ---- Case 3: bf16 feature I/O + bf16 MXU operands (f32 accumulation) ----
    features_bf16 = features.astype(jnp.bfloat16)
    out3 = positional_encoding_3d_forward(features_bf16, positions, params,
                                          freqs, mxu_dtype=jnp.bfloat16)
    out3 = jax.block_until_ready(out3)
    ref3 = reference_forward(features_bf16.astype(jnp.float32), positions,
                             params, freqs)
    np.testing.assert_allclose(np.asarray(out3.astype(jnp.float32)),
                               np.asarray(ref3), rtol=3e-2, atol=3e-2)

    print("KERNEL_OK")
</pallas_src>

<mosaic_0001>
module attributes {stable_mosaic.version = 11 : i64} {
  func.func @posenc_kernel(%arg0: i32, %arg1: memref<64x384xf32, #tpu.memory_space<vmem>>, %arg2: memref<64x3xf32, #tpu.memory_space<vmem>>, %arg3: memref<3x192xf32, #tpu.memory_space<vmem>>, %arg4: memref<1x192xf32, #tpu.memory_space<vmem>>, %arg5: memref<192x384xf32, #tpu.memory_space<vmem>>, %arg6: memref<1x384xf32, #tpu.memory_space<vmem>>, %arg7: memref<4x384xf32, #tpu.memory_space<vmem>>, %arg8: memref<64x384xf32, #tpu.memory_space<vmem>>) attributes {dimension_semantics = [#tpu.dimension_semantics<parallel>], iteration_bounds = array<i64: 2>, scalar_prefetch = 0 : i64, scratch_operands = 0 : i64, tpu.core_type = #tpu.core_type<tc>, window_params = [{transform_indices = @transform_0, window_bounds = array<i64: 64, 384>}, {transform_indices = @transform_1, window_bounds = array<i64: 64, 3>}, {pipeline_mode = #tpu.pipeline_mode<synchronous>, transform_indices = @transform_2, window_bounds = array<i64: 3, 192>}, {pipeline_mode = #tpu.pipeline_mode<synchronous>, transform_indices = @transform_3, window_bounds = array<i64: 1, 192>}, {pipeline_mode = #tpu.pipeline_mode<synchronous>, transform_indices = @transform_4, window_bounds = array<i64: 192, 384>}, {pipeline_mode = #tpu.pipeline_mode<synchronous>, transform_indices = @transform_5, window_bounds = array<i64: 1, 384>}, {pipeline_mode = #tpu.pipeline_mode<synchronous>, transform_indices = @transform_6, window_bounds = array<i64: 4, 384>}, {transform_indices = @transform_7, window_bounds = array<i64: 64, 384>}]} {
    %c0 = arith.constant 0 : index
    %c0_0 = arith.constant 0 : index
    %0 = vector.load %arg2[%c0, %c0_0] : memref<64x3xf32, #tpu.memory_space<vmem>>, vector<64x3xf32>
    %1 = vector.extract_strided_slice %0 {offsets = [0, 0], sizes = [64, 1], strides = [1, 1]} : vector<64x3xf32> to vector<64x1xf32>
    %2 = vector.extract_strided_slice %0 {offsets = [0, 1], sizes = [64, 1], strides = [1, 1]} : vector<64x3xf32> to vector<64x1xf32>
    %3 = vector.extract_strided_slice %0 {offsets = [0, 2], sizes = [64, 1], strides = [1, 1]} : vector<64x3xf32> to vector<64x1xf32>
    %c0_1 = arith.constant 0 : index
    %c0_2 = arith.constant 0 : index
    %4 = vector.load %arg3[%c0_1, %c0_2] : memref<3x192xf32, #tpu.memory_space<vmem>>, vector<3x192xf32>
    %5 = vector.extract_strided_slice %4 {offsets = [0, 0], sizes = [1, 192], strides = [1, 1]} : vector<3x192xf32> to vector<1x192xf32>
    %6 = vector.broadcast %1 : vector<64x1xf32> to vector<64x192xf32>
    %7 = vector.broadcast %5 : vector<1x192xf32> to vector<64x192xf32>
    %8 = arith.mulf %6, %7 : vector<64x192xf32>
    %9 = vector.extract_strided_slice %4 {offsets = [1, 0], sizes = [1, 192], strides = [1, 1]} : vector<3x192xf32> to vector<1x192xf32>
    %10 = vector.broadcast %2 : vector<64x1xf32> to vector<64x192xf32>
    %11 = vector.broadcast %9 : vector<1x192xf32> to vector<64x192xf32>
    %12 = arith.mulf %10, %11 : vector<64x192xf32>
    %13 = arith.addf %8, %12 : vector<64x192xf32>
    %14 = vector.extract_strided_slice %4 {offsets = [2, 0], sizes = [1, 192], strides = [1, 1]} : vector<3x192xf32> to vector<1x192xf32>
    %15 = vector.broadcast %3 : vector<64x1xf32> to vector<64x192xf32>
    %16 = vector.broadcast %14 : vector<1x192xf32> to vector<64x192xf32>
    %17 = arith.mulf %15, %16 : vector<64x192xf32>
    %18 = arith.addf %13, %17 : vector<64x192xf32>
    %c0_3 = arith.constant 0 : index
    %c0_4 = arith.constant 0 : index
    %19 = vector.load %arg4[%c0_3, %c0_4] : memref<1x192xf32, #tpu.memory_space<vmem>>, vector<1x192xf32>
    %20 = vector.broadcast %19 : vector<1x192xf32> to vector<64x192xf32>
    %21 = arith.addf %18, %20 : vector<64x192xf32>
    %cst = arith.constant 0.000000e+00 : f32
    %22 = vector.broadcast %cst : f32 to vector<64x192xf32>
    %23 = arith.maximumf %21, %22 : vector<64x192xf32>
    %c0_5 = arith.constant 0 : index
    %c0_6 = arith.constant 0 : index
    %24 = vector.load %arg5[%c0_5, %c0_6] : memref<192x384xf32, #tpu.memory_space<vmem>>, vector<192x384xf32>
    %cst_7 = arith.constant dense<0.000000e+00> : vector<64x384xf32>
    %25 = tpu.matmul %23, %24, %cst_7 {dimension_numbers = #tpu.dot_dimension_numbers<[1], [0], [0], [1], [0, 0, 1, 1], [], []>} : vector<64x192xf32>, vector<192x384xf32>, vector<64x384xf32> -> vector<64x384xf32>
    %c0_8 = arith.constant 0 : index
    %c0_9 = arith.constant 0 : index
    %26 = vector.load %arg6[%c0_8, %c0_9] : memref<1x384xf32, #tpu.memory_space<vmem>>, vector<1x384xf32>
    %27 = vector.broadcast %26 : vector<1x384xf32> to vector<64x384xf32>
    %28 = arith.addf %25, %27 : vector<64x384xf32>
    %c0_10 = arith.constant 0 : index
    %c0_11 = arith.constant 0 : index
    %29 = vector.load %arg7[%c0_10, %c0_11] : memref<4x384xf32, #tpu.memory_space<vmem>>, vector<4x384xf32>
    %30 = vector.extract_strided_slice %29 {offsets = [0, 0], sizes = [1, 384], strides = [1, 1]} : vector<4x384xf32> to vector<1x384xf32>
    %31 = vector.broadcast %1 : vector<64x1xf32> to vector<64x384xf32>
    %32 = vector.broadcast %30 : vector<1x384xf32> to vector<64x384xf32>
    %33 = arith.mulf %31, %32 : vector<64x384xf32>
    %34 = vector.extract_strided_slice %29 {offsets = [1, 0], sizes = [1, 384], strides = [1, 1]} : vector<4x384xf32> to vector<1x384xf32>
    %35 = vector.broadcast %2 : vector<64x1xf32> to vector<64x384xf32>
    %36 = vector.broadcast %34 : vector<1x384xf32> to vector<64x384xf32>
    %37 = arith.mulf %35, %36 : vector<64x384xf32>
    %38 = arith.addf %33, %37 : vector<64x384xf32>
    %39 = vector.extract_strided_slice %29 {offsets = [2, 0], sizes = [1, 384], strides = [1, 1]} : vector<4x384xf32> to vector<1x384xf32>
    %40 = vector.broadcast %3 : vector<64x1xf32> to vector<64x384xf32>
    %41 = vector.broadcast %39 : vector<1x384xf32> to vector<64x384xf32>
    %42 = arith.mulf %40, %41 : vector<64x384xf32>
    %43 = arith.addf %38, %42 : vector<64x384xf32>
    %44 = vector.extract_strided_slice %29 {offsets = [3, 0], sizes = [1, 384], strides = [1, 1]} : vector<4x384xf32> to vector<1x384xf32>
    %45 = vector.broadcast %44 : vector<1x384xf32> to vector<64x384xf32>
    %46 = arith.addf %43, %45 : vector<64x384xf32>
    %47 = math.sin %46 : vector<64x384xf32>
    %48 = arith.addf %28, %47 : vector<64x384xf32>
    %c0_12 = arith.constant 0 : index
    %c0_13 = arith.constant 0 : index
    %49 = vector.load %arg1[%c0_12, %c0_13] : memref<64x384xf32, #tpu.memory_space<vmem>>, vector<64x384xf32>
    %50 = arith.addf %49, %48 : vector<64x384xf32>
    %c0_14 = arith.constant 0 : index
    %c0_15 = arith.constant 0 : index
    %51 = vector.load %arg8[%c0_14, %c0_15] : memref<64x384xf32, #tpu.memory_space<vmem>>, vector<64x384xf32>
    tpu.vector_store %arg8[%c0_14, %c0_15], %50 {strides = array<i32>} : memref<64x384xf32, #tpu.memory_space<vmem>>, vector<64x384xf32>,
    return
  }
  func.func @transform_0(%arg0: i32) -> (i32, i32) {
    %c0_i32 = arith.constant 0 : i32
    %c0_i32_0 = arith.constant 0 : i32
    return %arg0, %c0_i32 : i32, i32
  }
  func.func @transform_1(%arg0: i32) -> (i32, i32) {
    %c0_i32 = arith.constant 0 : i32
    %c0_i32_0 = arith.constant 0 : i32
    return %arg0, %c0_i32 : i32, i32
  }
  func.func @transform_2(%arg0: i32) -> (i32, i32) {
    %c0_i32 = arith.constant 0 : i32
    %c0_i32_0 = arith.constant 0 : i32
    %c0_i32_1 = arith.constant 0 : i32
    return %c0_i32, %c0_i32_0 : i32, i32
  }
  func.func @transform_3(%arg0: i32) -> (i32, i32) {
    %c0_i32 = arith.constant 0 : i32
    %c0_i32_0 = arith.constant 0 : i32
    %c0_i32_1 = arith.constant 0 : i32
    return %c0_i32, %c0_i32_0 : i32, i32
  }
  func.func @transform_4(%arg0: i32) -> (i32, i32) {
    %c0_i32 = arith.constant 0 : i32
    %c0_i32_0 = arith.constant 0 : i32
    %c0_i32_1 = arith.constant 0 : i32
    return %c0_i32, %c0_i32_0 : i32, i32
  }
  func.func @transform_5(%arg0: i32) -> (i32, i32) {
    %c0_i32 = arith.constant 0 : i32
    %c0_i32_0 = arith.constant 0 : i32
    %c0_i32_1 = arith.constant 0 : i32
    return %c0_i32, %c0_i32_0 : i32, i32
  }
  func.func @transform_6(%arg0: i32) -> (i32, i32) {
    %c0_i32 = arith.constant 0 : i32
    %c0_i32_0 = arith.constant 0 : i32
    %c0_i32_1 = arith.constant 0 : i32
    return %c0_i32, %c0_i32_0 : i32, i32
  }
  func.func @transform_7(%arg0: i32) -> (i32, i32) {
    %c0_i32 = arith.constant 0 : i32
    %c0_i32_0 = arith.constant 0 : i32
    return %arg0, %c0_i32 : i32, i32
  }
}

</mosaic_0001>

<llo_original>
// kernel: tpu_custom_call.1
$region0: #{tpu_custom_call.1}
  #allocation0 [shape = 'u32[]', space=smem, size = 0x4, offset = 0x4, fixed_abs, tag = 'smem constant byte address 0x4 - core index']
  #allocation1 [shape = 'u32[144,128]{1,0:T(1,128)}', space=vmem, size = 0x12000, scoped, tag = 'internal scratch']
  %s0 = inlined_call_operand.hbm [shape: f32[128,384], index: 0, kind: input, shape index: {}]
  %s1 = inlined_call_operand.vmem [shape: f32[128,3], index: 1, kind: input, shape index: {}]
  %s2 = inlined_call_operand.vmem [shape: f32[3,192], index: 2, kind: input, shape index: {}]
  %s3 = inlined_call_operand.vmem [shape: f32[1,192], index: 3, kind: input, shape index: {}]
  %s4 = inlined_call_operand.hbm [shape: f32[192,384], index: 4, kind: input, shape index: {}]
  %s5 = inlined_call_operand.vmem [shape: f32[1,384], index: 5, kind: input, shape index: {}]
  %s6 = inlined_call_operand.vmem [shape: f32[4,384], index: 6, kind: input, shape index: {}]
  %s7 = inlined_call_operand.hbm [shape: f32[128,384], index: 7, kind: output, shape index: {}]
  %s8 = sld [smem:[#allocation0]]
  $region69: #{tpu_custom_call.1} parent=0
    _
  %s10 = ssub.s32 1, %s8
  %s11 = scalar_select 0, %s10, %s8
  $region1: #{tpu_custom_call.1} parent=0
    #allocation2 [shape = 'u8[196608]{0}', space=vmem, size = 0x30000, scoped, tag = 'input window, operand 0']
    #allocation3 [shape = 's32[2]{0}', space=sflag, size = 0x8, scoped, tag = 'scoped memory for tpu_custom_call.1']
    #allocation4 [shape = 's32[2]{0}', space=sflag, size = 0x8, scoped, tag = 'scoped memory for tpu_custom_call.1']
    #allocation5 [shape = 'u8[294912]{0}', space=vmem, size = 0x48000, scoped, tag = 'input window, operand 4, single buffered']
    #allocation6 [shape = 's32[1]{0}', space=sflag, size = 0x4, scoped, tag = 'scoped memory for tpu_custom_call.1']
    #allocation7 [shape = 'u8[196608]{0}', space=vmem, size = 0x30000, scoped, tag = 'output window, operand 0']
    %12 = vsyncpa [#allocation3], 0
    %s13 = scalar_lea.sflag [#allocation3], 1
    %14 = vsyncpa %s13, 0
    %15 = vsyncpa [#allocation6], 0
    %16 = vsyncpa [#allocation4], 0
    %s17 = scalar_lea.sflag [#allocation4], 1
    %18 = vsyncpa %s17, 0
    loop: start=0, step=1, limit=4
    $region2: #{tpu_custom_call.1} parent=1 // loop_pre_header
      _
    $region3: #{tpu_custom_call.1} parent=1 // loop_header
      %s20 = sphi 0, %s24
      %p21 = scmp.ge.s32.totalorder %s20, 4
      %s30 = sphi 0, %s32
      %s33 = sphi 0, %s30
      %s34 = sphi 0, %s33
      %s50 = sphi 0, %s34
      %s56 = sphi 0, %s58
      %s59 = sphi 0, %s56
      %s60 = sphi 0, %s59
      %s76 = sphi 0, %s60
      %s80 = sphi 0, %s80
      %s82 = sphi 0, %s80
      %s83 = sphi 0, %s82
      %s97 = sphi 0, %s83
      %s101 = sphi 0, %s101
      %s103 = sphi 0, %s101
      %s104 = sphi 0, %s103
      %s118 = sphi 0, %s104
      %s122 = sphi 0, %s122
      %s124 = sphi 0, %s122
      %s125 = sphi 0, %s124
      %s139 = sphi 0, %s125
      %s143 = sphi 0, %s143
      %s145 = sphi 0, %s143
      %s146 = sphi 0, %s145
      %s160 = sphi 0, %s146
      %s164 = sphi 0, %s164
      %s166 = sphi 0, %s164
      %s167 = sphi 0, %s166
      %s181 = sphi 0, %s167
      %s187 = sphi 0, %s189
      %s190 = sphi 0, %s187
      %s191 = sphi 0, %s190
      %s207 = sphi 0, %s191
    $region4: #{tpu_custom_call.1} parent=1 // loop_header_branch
      %23 = sbr.rel (%p21) target = $region8
    $region5: #{tpu_custom_call.1} parent=1 // loop_body
      %s25 = ssub.s32 %s20, 1
      %s26 = ssub.s32 %s20, 2
      %s27 = sadd.s32 %s20, 1
      %s28 = ssub.s32 %s20, %s27
      %p29 = scmp.eq.s32.totalorder %s28, 0
      %s31 = sadd.s32 %s30, 1
      %s32 = scalar_select %p29, %s30, %s31
      %p35 = pneg %p29
      %p36 = scmp.eq.s32.totalorder %s20, 1
      %p37 = por %p35, %p36
      %p38 = scmp.ne.s32.totalorder %s30, %s33
      %p39 = scmp.eq.s32.totalorder %s20, 0
      %p40 = por %p38, %p39
      %p41 = scmp.ne.s32.totalorder %s30, %s33
      %p42 = scmp.eq.s32.totalorder %s25, 1
      %p43 = por %p41, %p42
      %p44 = scmp.ne.s32.totalorder %s33, %s34
      %p45 = scmp.eq.s32.totalorder %s25, 0
      %p46 = por %p44, %p45
      %p47 = scmp.ne.s32.totalorder %s33, %s34
      %p48 = scmp.eq.s32.totalorder %s26, 1
      %p49 = por %p47, %p48
      %p51 = scmp.ne.s32.totalorder %s34, %s50
      %p52 = scmp.eq.s32.totalorder %s26, 0
      %p53 = por %p51, %p52
      %s54 = ssub.s32 %s20, %s27
      %p55 = scmp.eq.s32.totalorder %s54, 0
      %s57 = sadd.s32 %s56, 1
      %s58 = scalar_select %p55, %s56, %s57
      %p61 = pneg %p55
      %p62 = scmp.eq.s32.totalorder %s20, 1
      %p63 = por %p61, %p62
      %p64 = scmp.ne.s32.totalorder %s56, %s59
      %p65 = scmp.eq.s32.totalorder %s20, 0
      %p66 = por %p64, %p65
      %p67 = scmp.ne.s32.totalorder %s56, %s59
      %p68 = scmp.eq.s32.totalorder %s25, 1
      %p69 = por %p67, %p68
      %p70 = scmp.ne.s32.totalorder %s59, %s60
      %p71 = scmp.eq.s32.totalorder %s25, 0
      %p72 = por %p70, %p71
      %p73 = scmp.ne.s32.totalorder %s59, %s60
      %p74 = scmp.eq.s32.totalorder %s26, 1
      %p75 = por %p73, %p74
      %p77 = scmp.ne.s32.totalorder %s60, %s76
      %p78 = scmp.eq.s32.totalorder %s26, 0
      %p79 = por %p77, %p78
      %s81 = sadd.s32 %s80, 1
      %p84 = scmp.eq.s32.totalorder %s20, 1
      %p85 = scmp.ne.s32.totalorder %s80, %s82
      %p86 = scmp.eq.s32.totalorder %s20, 0
      %p87 = por %p85, %p86
      %p88 = scmp.ne.s32.totalorder %s80, %s82
      %p89 = scmp.eq.s32.totalorder %s25, 1
      %p90 = por %p88, %p89
      %p91 = scmp.ne.s32.totalorder %s82, %s83
      %p92 = scmp.eq.s32.totalorder %s25, 0
      %p93 = por %p91, %p92
      %p94 = scmp.ne.s32.totalorder %s82, %s83
      %p95 = scmp.eq.s32.totalorder %s26, 1
      %p96 = por %p94, %p95
      %p98 = scmp.ne.s32.totalorder %s83, %s97
      %p99 = scmp.eq.s32.totalorder %s26, 0
      %p100 = por %p98, %p99
      %s102 = sadd.s32 %s101, 1
      %p105 = scmp.eq.s32.totalorder %s20, 1
      %p106 = scmp.ne.s32.totalorder %s101, %s103
      %p107 = scmp.eq.s32.totalorder %s20, 0
      %p108 = por %p106, %p107
      %p109 = scmp.ne.s32.totalorder %s101, %s103
      %p110 = scmp.eq.s32.totalorder %s25, 1
      %p111 = por %p109, %p110
      %p112 = scmp.ne.s32.totalorder %s103, %s104
      %p113 = scmp.eq.s32.totalorder %s25, 0
      %p114 = por %p112, %p113
      %p115 = scmp.ne.s32.totalorder %s103, %s104
      %p116 = scmp.eq.s32.totalorder %s26, 1
      %p117 = por %p115, %p116
      %p119 = scmp.ne.s32.totalorder %s104, %s118
      %p120 = scmp.eq.s32.totalorder %s26, 0
      %p121 = por %p119, %p120
      %s123 = sadd.s32 %s122, 1
      %p126 = scmp.eq.s32.totalorder %s20, 1
      %p127 = scmp.ne.s32.totalorder %s122, %s124
      %p128 = scmp.eq.s32.totalorder %s20, 0
      %p129 = por %p127, %p128
      %p130 = scmp.ne.s32.totalorder %s122, %s124
      %p131 = scmp.eq.s32.totalorder %s25, 1
      %p132 = por %p130, %p131
      %p133 = scmp.ne.s32.totalorder %s124, %s125
      %p134 = scmp.eq.s32.totalorder %s25, 0
      %p135 = por %p133, %p134
      %p136 = scmp.ne.s32.totalorder %s124, %s125
      %p137 = scmp.eq.s32.totalorder %s26, 1
      %p138 = por %p136, %p137
      %p140 = scmp.ne.s32.totalorder %s125, %s139
      %p141 = scmp.eq.s32.totalorder %s26, 0
      %p142 = por %p140, %p141
      %s144 = sadd.s32 %s143, 1
      %p147 = scmp.eq.s32.totalorder %s20, 1
      %p148 = scmp.ne.s32.totalorder %s143, %s145
      %p149 = scmp.eq.s32.totalorder %s20, 0
      %p150 = por %p148, %p149
      %p151 = scmp.ne.s32.totalorder %s143, %s145
      %p152 = scmp.eq.s32.totalorder %s25, 1
      %p153 = por %p151, %p152
      %p154 = scmp.ne.s32.totalorder %s145, %s146
      %p155 = scmp.eq.s32.totalorder %s25, 0
      %p156 = por %p154, %p155
      %p157 = scmp.ne.s32.totalorder %s145, %s146
      %p158 = scmp.eq.s32.totalorder %s26, 1
      %p159 = por %p157, %p158
      %p161 = scmp.ne.s32.totalorder %s146, %s160
      %p162 = scmp.eq.s32.totalorder %s26, 0
      %p163 = por %p161, %p162
      %s165 = sadd.s32 %s164, 1
      %p168 = scmp.eq.s32.totalorder %s20, 1
      %p169 = scmp.ne.s32.totalorder %s164, %s166
      %p170 = scmp.eq.s32.totalorder %s20, 0
      %p171 = por %p169, %p170
      %p172 = scmp.ne.s32.totalorder %s164, %s166
      %p173 = scmp.eq.s32.totalorder %s25, 1
      %p174 = por %p172, %p173
      %p175 = scmp.ne.s32.totalorder %s166, %s167
      %p176 = scmp.eq.s32.totalorder %s25, 0
      %p177 = por %p175, %p176
      %p178 = scmp.ne.s32.totalorder %s166, %s167
      %p179 = scmp.eq.s32.totalorder %s26, 1
      %p180 = por %p178, %p179
      %p182 = scmp.ne.s32.totalorder %s167, %s181
      %p183 = scmp.eq.s32.totalorder %s26, 0
      %p184 = por %p182, %p183
      %s185 = ssub.s32 %s20, %s27
      %p186 = scmp.eq.s32.totalorder %s185, 0
      %s188 = sadd.s32 %s187, 1
      %s189 = scalar_select %p186, %s187, %s188
      %p192 = pneg %p186
      %p193 = scmp.eq.s32.totalorder %s20, 1
      %p194 = por %p192, %p193
      %p195 = scmp.ne.s32.totalorder %s187, %s190
      %p196 = scmp.eq.s32.totalorder %s20, 0
      %p197 = por %p195, %p196
      %p198 = scmp.ne.s32.totalorder %s187, %s190
      %p199 = scmp.eq.s32.totalorder %s25, 1
      %p200 = por %p198, %p199
      %p201 = scmp.ne.s32.totalorder %s190, %s191
      %p202 = scmp.eq.s32.totalorder %s25, 0
      %p203 = por %p201, %p202
      %p204 = scmp.ne.s32.totalorder %s190, %s191
      %p205 = scmp.eq.s32.totalorder %s26, 1
      %p206 = por %p204, %p205
      %p208 = scmp.ne.s32.totalorder %s191, %s207
      %p209 = scmp.eq.s32.totalorder %s26, 0
      %p210 = por %p208, %p209
      %p211 = scmp.le.s32.totalorder 1, %s20
      %p212 = scmp.lt.s32.totalorder %s20, 3
      %p213 = pnand %p211, %p212
      %p214 = pneg %p213
      // Predicated region
      $region9: #{tpu_custom_call.1} parent=5 // pred_check
        _
      $region10: #{tpu_custom_call.1} parent=5 // pred_check_branch
        %216 = sbr.rel (%p213) target = $region12
      $region11: #{tpu_custom_call.1} parent=5 // pred_region
        %s217 = ssub.s32 %s20, 1
        // Predicated region
        $region13: #{tpu_custom_call.1} parent=11 // pred_check
          %p218 = pneg %p93
        $region14: #{tpu_custom_call.1} parent=11 // pred_check_branch
          %220 = sbr.rel (%p218) target = $region16
        $region15: #{tpu_custom_call.1} parent=11 // pred_region
          _
        $region16: #{tpu_custom_call.1} parent=11 // pred_fallthru
          _
        // Predicated region
        $region17: #{tpu_custom_call.1} parent=11 // pred_check
          %p221 = pneg %p114
        $region18: #{tpu_custom_call.1} parent=11 // pred_check_branch
          %223 = sbr.rel (%p221) target = $region20
        $region19: #{tpu_custom_call.1} parent=11 // pred_region
          _
        $region20: #{tpu_custom_call.1} parent=11 // pred_fallthru
          _
        // Predicated region
        $region21: #{tpu_custom_call.1} parent=11 // pred_check
          %p224 = pneg %p135
        $region22: #{tpu_custom_call.1} parent=11 // pred_check_branch
          %226 = sbr.rel (%p224) target = $region24
        $region23: #{tpu_custom_call.1} parent=11 // pred_region
          %s228 = ssub.s32 9216, 9216
          %229 = vsyncadd [#allocation6], %s228
          %s230 = sshll.u32 [#allocation5], 4
          %s231 = int_to_ptr.vmem [resolvable:$true] %s230
          %236 = dma.hbm_to_vmem [thread:$0]  %s4, 9216, %s231, [#allocation6], 384, 384, 24
        $region24: #{tpu_custom_call.1} parent=11 // pred_fallthru
          _
        // Predicated region
        $region25: #{tpu_custom_call.1} parent=11 // pred_check
          %p237 = pneg %p156
        $region26: #{tpu_custom_call.1} parent=11 // pred_check_branch
          %239 = sbr.rel (%p237) target = $region28
        $region27: #{tpu_custom_call.1} parent=11 // pred_region
          _
        $region28: #{tpu_custom_call.1} parent=11 // pred_fallthru
          _
        // Predicated region
        $region29: #{tpu_custom_call.1} parent=11 // pred_check
          %p240 = pneg %p177
        $region30: #{tpu_custom_call.1} parent=11 // pred_check_branch
          %242 = sbr.rel (%p240) target = $region32
        $region31: #{tpu_custom_call.1} parent=11 // pred_region
          _
        $region32: #{tpu_custom_call.1} parent=11 // pred_fallthru
          _
      $region12: #{tpu_custom_call.1} parent=5 // pred_fallthru
        _
      %p243 = scmp.lt.s32.totalorder %s20, 2
      // Predicated region
      $region33: #{tpu_custom_call.1} parent=5 // pred_check
        %p244 = pneg %p243
      $region34: #{tpu_custom_call.1} parent=5 // pred_check_branch
        %246 = sbr.rel (%p244) target = $region36
      $region35: #{tpu_custom_call.1} parent=5 // pred_region
        // Predicated region
        $region37: #{tpu_custom_call.1} parent=35 // pred_check
          %p247 = pneg %p40
        $region38: #{tpu_custom_call.1} parent=35 // pred_check_branch
          %249 = sbr.rel (%p247) target = $region40
        $region39: #{tpu_custom_call.1} parent=35 // pred_region
          %s250 = sand.u32 %s30, 1
          %s251 = scalar_lea.sflag [#allocation3], %s250
          %s252 = sand.u32 %s30, 1
          %s253 = smul.addr %s252, 192
          %s254 = scalar_lea.vmem [#allocation2], %s253
          %s255 = smul.u32 8, %s20
          %s257 = ssub.s32 3072, 3072
          %258 = vsyncadd %s251, %s257
          %s259 = smul.addr %s255, 3
          %s260 = smul.addr %s259, 128
          %s261 = scalar_lea.hbm %s0, %s260
          %s262 = sshll.u32 %s254, 4
          %s263 = int_to_ptr.vmem [resolvable:$true] %s262
          %268 = dma.hbm_to_vmem [thread:$0]  %s261, 3072, %s263, %s251, 384, 384, 24
        $region40: #{tpu_custom_call.1} parent=35 // pred_fallthru
          _
        // Predicated region
        $region41: #{tpu_custom_call.1} parent=35 // pred_check
          %p269 = pneg %p66
        $region42: #{tpu_custom_call.1} parent=35 // pred_check_branch
          %271 = sbr.rel (%p269) target = $region44
        $region43: #{tpu_custom_call.1} parent=35 // pred_region
          %s272 = smul.u32 8, %s20
          %p273 = scmp.lt.s32.totalorder %s272, 15
          %s274 = scalar_select %p273, %s272, 15
          %s275 = smul.addr %s274, 8
          %s276 = scalar_lea.vmem %s1, %s275
          %s277 = smul.u32 8, %s20
        $region44: #{tpu_custom_call.1} parent=35 // pred_fallthru
          _
      $region36: #{tpu_custom_call.1} parent=5 // pred_fallthru
        _
      %p278 = scmp.le.s32.totalorder 1, %s20
      %p279 = scmp.lt.s32.totalorder %s20, 3
      %p280 = pnand %p278, %p279
      %p281 = pneg %p280
      // Predicated region
      $region45: #{tpu_custom_call.1} parent=5 // pred_check
        _
      $region46: #{tpu_custom_call.1} parent=5 // pred_check_branch
        %283 = sbr.rel (%p280) target = $region48
      $region47: #{tpu_custom_call.1} parent=5 // pred_region
        %s284 = ssub.s32 %s20, 1
        %s285 = sand.u32 %s33, 1
        %s286 = scalar_lea.sflag [#allocation3], %s285
        %s287 = sand.u32 %s33, 1
        %s288 = smul.addr %s287, 192
        %s289 = scalar_lea.vmem [#allocation2], %s288
        // Predicated region
        $region49: #{tpu_custom_call.1} parent=47 // pred_check
          %p290 = pneg %p46
        $region50: #{tpu_custom_call.1} parent=47 // pred_check_branch
          %292 = sbr.rel (%p290) target = $region52
        $region51: #{tpu_custom_call.1} parent=47 // pred_region
          %293 = dma.done %s286, 3072
        $region52: #{tpu_custom_call.1} parent=47 // pred_fallthru
          _
        // Predicated region
        $region53: #{tpu_custom_call.1} parent=47 // pred_check
          %p294 = pneg %p135
        $region54: #{tpu_custom_call.1} parent=47 // pred_check_branch
          %296 = sbr.rel (%p294) target = $region56
        $region55: #{tpu_custom_call.1} parent=47 // pred_region
          %297 = dma.done [#allocation6], 9216
        $region56: #{tpu_custom_call.1} parent=47 // pred_fallthru
          _
        %s298 = sand.u32 %s33, 1
        %s299 = scalar_lea.sflag [#allocation3], %s298
        %s300 = sand.u32 %s33, 1
        %s301 = smul.addr %s300, 192
        %s302 = scalar_lea.vmem [#allocation2], %s301
        %p303 = pneg %p46
        %p304 = pneg %p43
        %s305 = smul.u32 8, %s25
        %p306 = scmp.lt.s32.totalorder %s305, 15
        %s307 = scalar_select %p306, %s305, 15
        %s308 = smul.addr %s307, 8
        %s309 = scalar_lea.vmem %s1, %s308
        %p310 = pneg %p72
        %p311 = pneg %p69
        %p312 = pneg %p93
        %p313 = pneg %p90
        %p314 = pneg %p114
        %p315 = pneg %p111
        %p316 = pneg %p135
        %p317 = pneg %p132
        %p318 = pneg %p156
        %p319 = pneg %p153
        %p320 = pneg %p177
        %p321 = pneg %p174
        %p322 = pneg %p203
        %p323 = pneg %p200
        %s324 = sand.u32 %s190, 1
        %s325 = scalar_lea.sflag [#allocation4], %s324
        %s326 = sand.u32 %s190, 1
        %s327 = smul.addr %s326, 192
        %s328 = scalar_lea.vmem [#allocation7], %s327
        %s329 = smul.u32 8, %s25
        %s330 = smul.u32 8, %s25
        %p331 = scmp.lt.s32.totalorder %s330, 15
        %s332 = scalar_select %p331, %s330, 15
        %s333 = smul.addr %s332, 8
        %s334 = scalar_lea.vmem %s1, %s333
        %s335 = smul.u32 8, %s25
        %s336 = smul.u32 8, %s25
        %v337 = vld [vmem:[%s334] sm:$0xff]
        %v338 = vld [vmem:[%s334 + $0x8] sm:$0xff]
        %v339 = vld [vmem:[%s334 + $0x10] sm:$0xff]
        %v340 = vld [vmem:[%s334 + $0x18] sm:$0xff]
        %v341 = vld [vmem:[%s334 + $0x20] sm:$0xff]
        %v342 = vld [vmem:[%s334 + $0x28] sm:$0xff]
        %v343 = vld [vmem:[%s334 + $0x30] sm:$0xff]
        %v344 = vld [vmem:[%s334 + $0x38] sm:$0xff]
        %v345 = vld [vmem:[%s2] sm:$0x77]
        %347 = vset.pattern.permute.xlu0 0
        %348 = vperm.xlu0 %347, %v337
        %v349 = vpop.permute.xlu0 %348
        %352 = vset.pattern.permute.xlu0 0
        %353 = vperm.xlu0 %352, %v338
        %v354 = vpop.permute.xlu0 %353
        %357 = vset.pattern.permute.xlu0 0
        %358 = vperm.xlu0 %357, %v339
        %v359 = vpop.permute.xlu0 %358
        %362 = vset.pattern.permute.xlu0 0
        %363 = vperm.xlu0 %362, %v340
        %v364 = vpop.permute.xlu0 %363
        %367 = vset.pattern.permute.xlu0 0
        %368 = vperm.xlu0 %367, %v341
        %v369 = vpop.permute.xlu0 %368
        %372 = vset.pattern.permute.xlu0 0
        %373 = vperm.xlu0 %372, %v342
        %v374 = vpop.permute.xlu0 %373
        %377 = vset.pattern.permute.xlu0 0
        %378 = vperm.xlu0 %377, %v343
        %v379 = vpop.permute.xlu0 %378
        %382 = vset.pattern.permute.xlu0 0
        %383 = vperm.xlu0 %382, %v344
        %v384 = vpop.permute.xlu0 %383
        %v387 = vlaneseq
        %v388 = vshrl.u32 %v387, 7
        %v389 = vsub.s32 0, %v388
        %v390 = vrot.slane %v345, %v389
        %v391 = vlaneseq
        %v392 = vshrl.u32 %v391, 7
        %v393 = vsub.s32 4, %v392
        %v394 = vrot.slane %v345, %v393
        %v397 = vlaneseq
        %v398 = vshrl.u32 %v397, 7
        %v399 = vsub.s32 0, %v398
        %v400 = vrot.slane %v390, %v399
        %v401 = vlaneseq
        %v402 = vshrl.u32 %v401, 7
        %v403 = vsub.s32 0, %v402
        %v404 = vrot.slane %v394, %v403
        %v405 = vmul.f32 %v349, %v400
        %v406 = vmul.f32 %v349, %v404
        %v407 = vmul.f32 %v354, %v400
        %v408 = vmul.f32 %v354, %v404
        %v409 = vmul.f32 %v359, %v400
        %v410 = vmul.f32 %v359, %v404
        %v411 = vmul.f32 %v364, %v400
        %v412 = vmul.f32 %v364, %v404
        %v413 = vmul.f32 %v369, %v400
        %v414 = vmul.f32 %v369, %v404
        %v415 = vmul.f32 %v374, %v400
        %v416 = vmul.f32 %v374, %v404
        %v417 = vmul.f32 %v379, %v400
        %v418 = vmul.f32 %v379, %v404
        %v419 = vmul.f32 %v384, %v400
        %v420 = vmul.f32 %v384, %v404
        %421 = vset.pattern.permute.xlu0 1
        %422 = vperm.xlu0 %421, %v337
        %v423 = vpop.permute.xlu0 %422
        %425 = vset.pattern.permute.xlu0 1
        %426 = vperm.xlu0 %425, %v338
        %v427 = vpop.permute.xlu0 %426
        %429 = vset.pattern.permute.xlu0 1
        %430 = vperm.xlu0 %429, %v339
        %v431 = vpop.permute.xlu0 %430
        %433 = vset.pattern.permute.xlu0 1
        %434 = vperm.xlu0 %433, %v340
        %v435 = vpop.permute.xlu0 %434
        %437 = vset.pattern.permute.xlu0 1
        %438 = vperm.xlu0 %437, %v341
        %v439 = vpop.permute.xlu0 %438
        %441 = vset.pattern.permute.xlu0 1
        %442 = vperm.xlu0 %441, %v342
        %v443 = vpop.permute.xlu0 %442
        %445 = vset.pattern.permute.xlu0 1
        %446 = vperm.xlu0 %445, %v343
        %v447 = vpop.permute.xlu0 %446
        %449 = vset.pattern.permute.xlu0 1
        %450 = vperm.xlu0 %449, %v344
        %v451 = vpop.permute.xlu0 %450
        %v453 = vlaneseq
        %v454 = vshrl.u32 %v453, 7
        %v455 = vsub.s32 1, %v454
        %v456 = vrot.slane %v345, %v455
        %v457 = vlaneseq
        %v458 = vshrl.u32 %v457, 7
        %v459 = vsub.s32 5, %v458
        %v460 = vrot.slane %v345, %v459
        %v463 = vlaneseq
        %v464 = vshrl.u32 %v463, 7
        %v465 = vsub.s32 1, %v464
        %v466 = vrot.slane %v456, %v465
        %v467 = vlaneseq
        %v468 = vshrl.u32 %v467, 7
        %v469 = vsub.s32 1, %v468
        %v470 = vrot.slane %v460, %v469
        %v471 = vmul.f32 %v423, %v466
        %v472 = vmul.f32 %v423, %v470
        %v473 = vmul.f32 %v427, %v466
        %v474 = vmul.f32 %v427, %v470
        %v475 = vmul.f32 %v431, %v466
        %v476 = vmul.f32 %v431, %v470
        %v477 = vmul.f32 %v435, %v466
        %v478 = vmul.f32 %v435, %v470
        %v479 = vmul.f32 %v439, %v466
        %v480 = vmul.f32 %v439, %v470
        %v481 = vmul.f32 %v443, %v466
        %v482 = vmul.f32 %v443, %v470
        %v483 = vmul.f32 %v447, %v466
        %v484 = vmul.f32 %v447, %v470
        %v485 = vmul.f32 %v451, %v466
        %v486 = vmul.f32 %v451, %v470
        %v487 = vadd.f32 %v405, %v471
        %v488 = vadd.f32 %v406, %v472
        %v489 = vadd.f32 %v407, %v473
        %v490 = vadd.f32 %v408, %v474
        %v491 = vadd.f32 %v409, %v475
        %v492 = vadd.f32 %v410, %v476
        %v493 = vadd.f32 %v411, %v477
        %v494 = vadd.f32 %v412, %v478
        %v495 = vadd.f32 %v413, %v479
        %v496 = vadd.f32 %v414, %v480
        %v497 = vadd.f32 %v415, %v481
        %v498 = vadd.f32 %v416, %v482
        %v499 = vadd.f32 %v417, %v483
        %v500 = vadd.f32 %v418, %v484
        %v501 = vadd.f32 %v419, %v485
        %v502 = vadd.f32 %v420, %v486
        %503 = vset.pattern.permute.xlu0 2
        %504 = vperm.xlu0 %503, %v337
        %v505 = vpop.permute.xlu0 %504
        %507 = vset.pattern.permute.xlu0 2
        %508 = vperm.xlu0 %507, %v338
        %v509 = vpop.permute.xlu0 %508
        %511 = vset.pattern.permute.xlu0 2
        %512 = vperm.xlu0 %511, %v339
        %v513 = vpop.permute.xlu0 %512
        %515 = vset.pattern.permute.xlu0 2
        %516 = vperm.xlu0 %515, %v340
        %v517 = vpop.permute.xlu0 %516
        %519 = vset.pattern.permute.xlu0 2
        %520 = vperm.xlu0 %519, %v341
        %v521 = vpop.permute.xlu0 %520
        %523 = vset.pattern.permute.xlu0 2
        %524 = vperm.xlu0 %523, %v342
        %v525 = vpop.permute.xlu0 %524
        %527 = vset.pattern.permute.xlu0 2
        %528 = vperm.xlu0 %527, %v343
        %v529 = vpop.permute.xlu0 %528
        %531 = vset.pattern.permute.xlu0 2
        %532 = vperm.xlu0 %531, %v344
        %v533 = vpop.permute.xlu0 %532
        %v535 = vlaneseq
        %v536 = vshrl.u32 %v535, 7
        %v537 = vsub.s32 2, %v536
        %v538 = vrot.slane %v345, %v537
        %v539 = vlaneseq
        %v540 = vshrl.u32 %v539, 7
        %v541 = vsub.s32 6, %v540
        %v542 = vrot.slane %v345, %v541
        %v545 = vlaneseq
        %v546 = vshrl.u32 %v545, 7
        %v547 = vsub.s32 2, %v546
        %v548 = vrot.slane %v538, %v547
        %v549 = vlaneseq
        %v550 = vshrl.u32 %v549, 7
        %v551 = vsub.s32 2, %v550
        %v552 = vrot.slane %v542, %v551
        %v553 = vmul.f32 %v505, %v548
        %v554 = vmul.f32 %v505, %v552
        %v555 = vmul.f32 %v509, %v548
        %v556 = vmul.f32 %v509, %v552
        %v557 = vmul.f32 %v513, %v548
        %v558 = vmul.f32 %v513, %v552
        %v559 = vmul.f32 %v517, %v548
        %v560 = vmul.f32 %v517, %v552
        %v561 = vmul.f32 %v521, %v548
        %v562 = vmul.f32 %v521, %v552
        %v563 = vmul.f32 %v525, %v548
        %v564 = vmul.f32 %v525, %v552
        %v565 = vmul.f32 %v529, %v548
        %v566 = vmul.f32 %v529, %v552
        %v567 = vmul.f32 %v533, %v548
        %v568 = vmul.f32 %v533, %v552
        %v569 = vadd.f32 %v487, %v553
        %v570 = vadd.f32 %v488, %v554
        %v571 = vadd.f32 %v489, %v555
        %v572 = vadd.f32 %v490, %v556
        %v573 = vadd.f32 %v491, %v557
        %v574 = vadd.f32 %v492, %v558
        %v575 = vadd.f32 %v493, %v559
        %v576 = vadd.f32 %v494, %v560
        %v577 = vadd.f32 %v495, %v561
        %v578 = vadd.f32 %v496, %v562
        %v579 = vadd.f32 %v497, %v563
        %v580 = vadd.f32 %v498, %v564
        %v581 = vadd.f32 %v499, %v565
        %v582 = vadd.f32 %v500, %v566
        %v583 = vadd.f32 %v501, %v567
        %v584 = vadd.f32 %v502, %v568
        %v585 = vld [vmem:[%s3] sm:$0x3]
        %v587 = vlaneseq
        %v588 = vshrl.u32 %v587, 7
        %v589 = vsub.s32 0, %v588
        %v590 = vrot.slane %v585, %v589
        %v591 = vlaneseq
        %v592 = vshrl.u32 %v591, 7
        %v593 = vsub.s32 1, %v592
        %v594 = vrot.slane %v585, %v593
        %v597 = vadd.f32 %v569, %v590
        %v598 = vadd.f32 %v570, %v594
        %v599 = vadd.f32 %v571, %v590
        %v600 = vadd.f32 %v572, %v594
        %v601 = vadd.f32 %v573, %v590
        %v602 = vadd.f32 %v574, %v594
        %v603 = vadd.f32 %v575, %v590
        %v604 = vadd.f32 %v576, %v594
        %v605 = vadd.f32 %v577, %v590
        %v606 = vadd.f32 %v578, %v594
        %v607 = vadd.f32 %v579, %v590
        %v608 = vadd.f32 %v580, %v594
        %v609 = vadd.f32 %v581, %v590
        %v610 = vadd.f32 %v582, %v594
        %v611 = vadd.f32 %v583, %v590
        %v612 = vadd.f32 %v584, %v594
        %v613 = vmax.f32 %v597, 0.0
        %v614 = vmax.f32 %v598, 0.0
        %v615 = vmax.f32 %v599, 0.0
        %v616 = vmax.f32 %v600, 0.0
        %v617 = vmax.f32 %v601, 0.0
        %v618 = vmax.f32 %v602, 0.0
        %v619 = vmax.f32 %v603, 0.0
        %v620 = vmax.f32 %v604, 0.0
        %v621 = vmax.f32 %v605, 0.0
        %v622 = vmax.f32 %v606, 0.0
        %v623 = vmax.f32 %v607, 0.0
        %v624 = vmax.f32 %v608, 0.0
        %v625 = vmax.f32 %v609, 0.0
        %v626 = vmax.f32 %v610, 0.0
        %v627 = vmax.f32 %v611, 0.0
        %v628 = vmax.f32 %v612, 0.0
        %v629 = vld [vmem:[#allocation5] sm:$0xff]
        %v630 = vld [vmem:[#allocation5 + $0x8] sm:$0xff]
        %v631 = vld [vmem:[#allocation5 + $0x10] sm:$0xff]
        %v632 = vld [vmem:[#allocation5 + $0x18] sm:$0xff]
        %v633 = vld [vmem:[#allocation5 + $0x20] sm:$0xff]
        %v634 = vld [vmem:[#allocation5 + $0x28] sm:$0xff]
        %v635 = vld [vmem:[#allocation5 + $0x30] sm:$0xff]
        %v636 = vld [vmem:[#allocation5 + $0x38] sm:$0xff]
        %v637 = vld [vmem:[#allocation5 + $0x40] sm:$0xff]
        %v638 = vld [vmem:[#allocation5 + $0x48] sm:$0xff]
        %v639 = vld [vmem:[#allocation5 + $0x50] sm:$0xff]
        %v640 = vld [vmem:[#allocation5 + $0x58] sm:$0xff]
        %v641 = vld [vmem:[#allocation5 + $0x60] sm:$0xff]
        %v642 = vld [vmem:[#allocation5 + $0x68] sm:$0xff]
        %v643 = vld [vmem:[#allocation5 + $0x70] sm:$0xff]
        %v644 = vld [vmem:[#allocation5 + $0x78] sm:$0xff]
        %v645 = vld [vmem:[#allocation5 + $0x80] sm:$0xff]
        %v646 = vld [vmem:[#allocation5 + $0x88] sm:$0xff]
        %v647 = vld [vmem:[#allocation5 + $0x90] sm:$0xff]
        %v648 = vld [vmem:[#allocation5 + $0x98] sm:$0xff]
        %v649 = vld [vmem:[#allocation5 + $0xa0] sm:$0xff]
        %v650 = vld [vmem:[#allocation5 + $0xa8] sm:$0xff]
        %v651 = vld [vmem:[#allocation5 + $0xb0] sm:$0xff]
        %v652 = vld [vmem:[#allocation5 + $0xb8] sm:$0xff]
        %v653 = vld [vmem:[#allocation5 + $0xc0] sm:$0xff]
        %v654 = vld [vmem:[#allocation5 + $0xc8] sm:$0xff]
        %v655 = vld [vmem:[#allocation5 + $0xd0] sm:$0xff]
        %v656 = vld [vmem:[#allocation5 + $0xd8] sm:$0xff]
        %v657 = vld [vmem:[#allocation5 + $0xe0] sm:$0xff]
        %v658 = vld [vmem:[#allocation5 + $0xe8] sm:$0xff]
        %v659 = vld [vmem:[#allocation5 + $0xf0] sm:$0xff]
        %v660 = vld [vmem:[#allocation5 + $0xf8] sm:$0xff]
        %v661 = vld [vmem:[#allocation5 + $0x100] sm:$0xff]
        %v662 = vld [vmem:[#allocation5 + $0x108] sm:$0xff]
        %v663 = vld [vmem:[#allocation5 + $0x110] sm:$0xff]
        %v664 = vld [vmem:[#allocation5 + $0x118] sm:$0xff]
        %v665 = vld [vmem:[#allocation5 + $0x120] sm:$0xff]
        %v666 = vld [vmem:[#allocation5 + $0x128] sm:$0xff]
        %v667 = vld [vmem:[#allocation5 + $0x130] sm:$0xff]
        %v668 = vld [vmem:[#allocation5 + $0x138] sm:$0xff]
        %v669 = vld [vmem:[#allocation5 + $0x140] sm:$0xff]
        %v670 = vld [vmem:[#allocation5 + $0x148] sm:$0xff]
        %v671 = vld [vmem:[#allocation5 + $0x150] sm:$0xff]
        %v672 = vld [vmem:[#allocation5 + $0x158] sm:$0xff]
        %v673 = vld [vmem:[#allocation5 + $0x160] sm:$0xff]
        %v674 = vld [vmem:[#allocation5 + $0x168] sm:$0xff]
        %v675 = vld [vmem:[#allocation5 + $0x170] sm:$0xff]
        %v676 = vld [vmem:[#allocation5 + $0x178] sm:$0xff]
        %v677 = vld [vmem:[#allocation5 + $0x180] sm:$0xff]
        %v678 = vld [vmem:[#allocation5 + $0x188] sm:$0xff]
        %v679 = vld [vmem:[#allocation5 + $0x190] sm:$0xff]
        %v680 = vld [vmem:[#allocation5 + $0x198] sm:$0xff]
        %v681 = vld [vmem:[#allocation5 + $0x1a0] sm:$0xff]
        %v682 = vld [vmem:[#allocation5 + $0x1a8] sm:$0xff]
        %v683 = vld [vmem:[#allocation5 + $0x1b0] sm:$0xff]
        %v684 = vld [vmem:[#allocation5 + $0x1b8] sm:$0xff]
        %v685 = vld [vmem:[#allocation5 + $0x1c0] sm:$0xff]
        %v686 = vld [vmem:[#allocation5 + $0x1c8] sm:$0xff]
        %v687 = vld [vmem:[#allocation5 + $0x1d0] sm:$0xff]
        %v688 = vld [vmem:[#allocation5 + $0x1d8] sm:$0xff]
        %v689 = vld [vmem:[#allocation5 + $0x1e0] sm:$0xff]
        %v690 = vld [vmem:[#allocation5 + $0x1e8] sm:$0xff]
        %v691 = vld [vmem:[#allocation5 + $0x1f0] sm:$0xff]
        %v692 = vld [vmem:[#allocation5 + $0x1f8] sm:$0xff]
        %v693 = vld [vmem:[#allocation5 + $0x200] sm:$0xff]
        %v694 = vld [vmem:[#allocation5 + $0x208] sm:$0xff]
        %v695 = vld [vmem:[#allocation5 + $0x210] sm:$0xff]
        %v696 = vld [vmem:[#allocation5 + $0x218] sm:$0xff]
        %v697 = vld [vmem:[#allocation5 + $0x220] sm:$0xff]
        %v698 = vld [vmem:[#allocation5 + $0x228] sm:$0xff]
        %v699 = vld [vmem:[#allocation5 + $0x230] sm:$0xff]
        %v700 = vld [vmem:[#allocation5 + $0x238] sm:$0xff]
        %v701 = vld [vmem:[%s5] sm:$0x7]
        %v703 = vlaneseq
        %v704 = vshrl.u32 %v703, 7
        %v705 = vsub.s32 0, %v704
        %v706 = vrot.slane %v701, %v705
        %v707 = vlaneseq
        %v708 = vshrl.u32 %v707, 7
        %v709 = vsub.s32 1, %v708
        %v710 = vrot.slane %v701, %v709
        %v711 = vlaneseq
        %v712 = vshrl.u32 %v711, 7
        %v713 = vsub.s32 2, %v712
        %v714 = vrot.slane %v701, %v713
        %vm718 = vcmask 523264
        %v720 = vsel %vm718, %v614, 0
        %v723 = vsel %vm718, %v616, 0
        %v726 = vsel %vm718, %v618, 0
        %v729 = vsel %vm718, %v620, 0
        %v732 = vsel %vm718, %v622, 0
        %v735 = vsel %vm718, %v624, 0
        %v738 = vsel %vm718, %v626, 0
        %v741 = vsel %vm718, %v628, 0
        %743 = vmatprep.subr.mxu0 %v675
        %744 = vmatpush1.msra.mxu0 %v674
        %745 = vmatprep.subr.mxu0 %v672
        %746 = vmatpush1.msra.mxu0 %v671
        %747 = vmatprep.subr.mxu0 %v669
        %748 = vmatpush1.msra.mxu0 %v668
        %749 = vmatprep.subr.mxu0 %v666
        %750 = vmatpush1.msra.mxu0 %v665
        %751 = vmatprep.subr.mxu0 %v663
        %752 = vmatpush1.msra.mxu0 %v662
        %753 = vmatprep.subr.mxu0 %v660
        %754 = vmatpush1.msra.mxu0 %v659
        %755 = vmatprep.subr.mxu0 %v657
        %756 = vmatpush1.msra.mxu0 %v656
        %757 = vmatprep.subr.mxu0 %v654
        %758 = vmatpush1.msra.mxu0 %v653
        %759 = vmatprep.subr.mxu0 %v651
        %760 = vmatpush1.msra.mxu0 %v650
        %761 = vmatprep.subr.mxu0 %v648
        %762 = vmatpush1.msra.mxu0 %v647
        %763 = vmatprep.subr.mxu0 %v645
        %764 = vmatpush1.msra.mxu0 %v644
        %765 = vmatprep.subr.mxu0 %v642
        %766 = vmatpush1.msra.mxu0 %v641
        %767 = vmatprep.subr.mxu0 %v639
        %768 = vmatpush1.msra.mxu0 %v638
        %769 = vmatprep.subr.mxu0 %v636
        %770 = vmatpush1.msra.mxu0 %v635
        %771 = vmatprep.subr.mxu0 %v633
        %772 = vmatpush1.msra.mxu0 %v632
        %773 = vmatprep.subr.mxu0 %v630
        %774 = vmatpush1.msra.mxu0 %v629
        %775 = vmatprep.subr.mxu0 0.0
        %776 = vmatpush2.msra.mxu0 0.0
        %777 = vmatprep.subr.mxu0 0.0
        %778 = vmatpush2.msra.mxu0 0.0
        %779 = vmatprep.subr.mxu0 0.0
        %780 = vmatpush2.msra.mxu0 0.0
        %781 = vmatprep.subr.mxu0 0.0
        %782 = vmatpush2.msra.mxu0 0.0
        %783 = vmatprep.subr.mxu0 0.0
        %784 = vmatpush2.msra.mxu0 0.0
        %785 = vmatprep.subr.mxu0 0.0
        %786 = vmatpush2.msra.mxu0 0.0
        %787 = vmatprep.subr.mxu0 0.0
        %788 = vmatpush2.msra.mxu0 0.0
        %789 = vmatprep.subr.mxu0 0.0
        %790 = vmatpush2.msra.mxu0 0.0
        %791 = vmatprep.subr.mxu0 %v699
        %792 = vmatpush2.msra.mxu0 %v698
        %793 = vmatprep.subr.mxu0 %v696
        %794 = vmatpush2.msra.mxu0 %v695
        %795 = vmatprep.subr.mxu0 %v693
        %796 = vmatpush2.msra.mxu0 %v692
        %797 = vmatprep.subr.mxu0 %v690
        %798 = vmatpush2.msra.mxu0 %v689
        %799 = vmatprep.subr.mxu0 %v687
        %800 = vmatpush2.msra.mxu0 %v686
        %801 = vmatprep.subr.mxu0 %v684
        %802 = vmatpush2.msra.mxu0 %v683
        %803 = vmatprep.subr.mxu0 %v681
        %804 = vmatpush2.msra.mxu0 %v680
        %805 = vmatprep.subr.mxu0 %v678
        %806 = vmatpush2.msra.mxu0 %v677
        %807 = vmatprep.mubr.f32.mxu0 %v720
        %808 = vmatmul.mubr.f32.gmra.mxu0 %v613
        %v809 = vpop.f32.mrf.mxu0
        %v810 = vadd.f32 %v706, %v809
        %v811 = vpop.f32.mrf.mxu0
        %v812 = vadd.f32 %v710, %v811
        %813 = vmatprep.mubr.f32.mxu0 %v723
        %814 = vmatmul.mubr.f32.gmra.mxu0 %v615
        %v815 = vpop.f32.mrf.mxu0
        %v816 = vadd.f32 %v706, %v815
        %v817 = vpop.f32.mrf.mxu0
        %v818 = vadd.f32 %v710, %v817
        %819 = vmatprep.mubr.f32.mxu0 %v726
        %820 = vmatmul.mubr.f32.gmra.mxu0 %v617
        %v821 = vpop.f32.mrf.mxu0
        %v822 = vadd.f32 %v706, %v821
        %v823 = vpop.f32.mrf.mxu0
        %v824 = vadd.f32 %v710, %v823
        %825 = vmatprep.mubr.f32.mxu0 %v729
        %826 = vmatmul.mubr.f32.gmra.mxu0 %v619
        %v827 = vpop.f32.mrf.mxu0
        %v828 = vadd.f32 %v706, %v827
        %v829 = vpop.f32.mrf.mxu0
        %v830 = vadd.f32 %v710, %v829
        %831 = vmatprep.mubr.f32.mxu0 %v732
        %832 = vmatmul.mubr.f32.gmra.mxu0 %v621
        %v833 = vpop.f32.mrf.mxu0
        %v834 = vadd.f32 %v706, %v833
        %v835 = vpop.f32.mrf.mxu0
        %v836 = vadd.f32 %v710, %v835
        %837 = vmatprep.mubr.f32.mxu0 %v735
        %838 = vmatmul.mubr.f32.gmra.mxu0 %v623
        %v839 = vpop.f32.mrf.mxu0
        %v840 = vadd.f32 %v706, %v839
        %v841 = vpop.f32.mrf.mxu0
        %v842 = vadd.f32 %v710, %v841
        %843 = vmatprep.mubr.f32.mxu0 %v738
        %844 = vmatmul.mubr.f32.gmra.mxu0 %v625
        %v845 = vpop.f32.mrf.mxu0
        %v846 = vadd.f32 %v706, %v845
        %v847 = vpop.f32.mrf.mxu0
        %v848 = vadd.f32 %v710, %v847
        %849 = vmatprep.mubr.f32.mxu0 %v741
        %850 = vmatmul.mubr.f32.gmra.mxu0 %v627
        %v851 = vpop.f32.mrf.mxu0
        %v852 = vadd.f32 %v706, %v851
        %v853 = vpop.f32.mrf.mxu0
        %v854 = vadd.f32 %v710, %v853
        %855 = vdwg.mxu0
        %856 = vmatprep.subr.mxu0 0.0
        %857 = vmatpush1.msra.mxu0 %v676
        %858 = vmatprep.subr.mxu0 0.0
        %859 = vmatpush1.msra.mxu0 %v673
        %860 = vmatprep.subr.mxu0 0.0
        %861 = vmatpush1.msra.mxu0 %v670
        %862 = vmatprep.subr.mxu0 0.0
        %863 = vmatpush1.msra.mxu0 %v667
        %864 = vmatprep.subr.mxu0 0.0
        %865 = vmatpush1.msra.mxu0 %v664
        %866 = vmatprep.subr.mxu0 0.0
        %867 = vmatpush1.msra.mxu0 %v661
        %868 = vmatprep.subr.mxu0 0.0
        %869 = vmatpush1.msra.mxu0 %v658
        %870 = vmatprep.subr.mxu0 0.0
        %871 = vmatpush1.msra.mxu0 %v655
        %872 = vmatprep.subr.mxu0 0.0
        %873 = vmatpush1.msra.mxu0 %v652
        %874 = vmatprep.subr.mxu0 0.0
        %875 = vmatpush1.msra.mxu0 %v649
        %876 = vmatprep.subr.mxu0 0.0
        %877 = vmatpush1.msra.mxu0 %v646
        %878 = vmatprep.subr.mxu0 0.0
        %879 = vmatpush1.msra.mxu0 %v643
        %880 = vmatprep.subr.mxu0 0.0
        %881 = vmatpush1.msra.mxu0 %v640
        %882 = vmatprep.subr.mxu0 0.0
        %883 = vmatpush1.msra.mxu0 %v637
        %884 = vmatprep.subr.mxu0 0.0
        %885 = vmatpush1.msra.mxu0 %v634
        %886 = vmatprep.subr.mxu0 0.0
        %887 = vmatpush1.msra.mxu0 %v631
        %888 = vmatprep.subr.mxu0 0.0
        %889 = vmatpush2.msra.mxu0 0.0
        %890 = vmatprep.subr.mxu0 0.0
        %891 = vmatpush2.msra.mxu0 0.0
        %892 = vmatprep.subr.mxu0 0.0
        %893 = vmatpush2.msra.mxu0 0.0
        %894 = vmatprep.subr.mxu0 0.0
        %895 = vmatpush2.msra.mxu0 0.0
        %896 = vmatprep.subr.mxu0 0.0
        %897 = vmatpush2.msra.mxu0 0.0
        %898 = vmatprep.subr.mxu0 0.0
        %899 = vmatpush2.msra.mxu0 0.0
        %900 = vmatprep.subr.mxu0 0.0
        %901 = vmatpush2.msra.mxu0 0.0
        %902 = vmatprep.subr.mxu0 0.0
        %903 = vmatpush2.msra.mxu0 0.0
        %904 = vmatprep.subr.mxu0 0.0
        %905 = vmatpush2.msra.mxu0 %v700
        %906 = vmatprep.subr.mxu0 0.0
        %907 = vmatpush2.msra.mxu0 %v697
        %908 = vmatprep.subr.mxu0 0.0
        %909 = vmatpush2.msra.mxu0 %v694
        %910 = vmatprep.subr.mxu0 0.0
        %911 = vmatpush2.msra.mxu0 %v691
        %912 = vmatprep.subr.mxu0 0.0
        %913 = vmatpush2.msra.mxu0 %v688
        %914 = vmatprep.subr.mxu0 0.0
        %915 = vmatpush2.msra.mxu0 %v685
        %916 = vmatprep.subr.mxu0 0.0
        %917 = vmatpush2.msra.mxu0 %v682
        %918 = vmatprep.subr.mxu0 0.0
        %919 = vmatpush2.msra.mxu0 %v679
        %920 = vmatprep.mubr.f32.mxu0 %v720
        %921 = vmatmul.mubr.f32.gmra.mxu0 %v613
        %v922 = vpop.f32.mrf.mxu0
        %v923 = vadd.f32 %v714, %v922
        %v924 = vpop.f32.mrf.mxu0
        %925 = vmatprep.mubr.f32.mxu0 %v723
        %926 = vmatmul.mubr.f32.gmra.mxu0 %v615
        %v927 = vpop.f32.mrf.mxu0
        %v928 = vadd.f32 %v714, %v927
        %v929 = vpop.f32.mrf.mxu0
        %930 = vmatprep.mubr.f32.mxu0 %v726
        %931 = vmatmul.mubr.f32.gmra.mxu0 %v617
        %v932 = vpop.f32.mrf.mxu0
        %v933 = vadd.f32 %v714, %v932
        %v934 = vpop.f32.mrf.mxu0
        %935 = vmatprep.mubr.f32.mxu0 %v729
        %936 = vmatmul.mubr.f32.gmra.mxu0 %v619
        %v937 = vpop.f32.mrf.mxu0
        %v938 = vadd.f32 %v714, %v937
        %v939 = vpop.f32.mrf.mxu0
        %940 = vmatprep.mubr.f32.mxu0 %v732
        %941 = vmatmul.mubr.f32.gmra.mxu0 %v621
        %v942 = vpop.f32.mrf.mxu0
        %v943 = vadd.f32 %v714, %v942
        %v944 = vpop.f32.mrf.mxu0
        %945 = vmatprep.mubr.f32.mxu0 %v735
        %946 = vmatmul.mubr.f32.gmra.mxu0 %v623
        %v947 = vpop.f32.mrf.mxu0
        %v948 = vadd.f32 %v714, %v947
        %v949 = vpop.f32.mrf.mxu0
        %950 = vmatprep.mubr.f32.mxu0 %v738
        %951 = vmatmul.mubr.f32.gmra.mxu0 %v625
        %v952 = vpop.f32.mrf.mxu0
        %v953 = vadd.f32 %v714, %v952
        %v954 = vpop.f32.mrf.mxu0
        %955 = vmatprep.mubr.f32.mxu0 %v741
        %956 = vmatmul.mubr.f32.gmra.mxu0 %v627
        %v957 = vpop.f32.mrf.mxu0
        %v958 = vadd.f32 %v714, %v957
        %v959 = vpop.f32.mrf.mxu0
        %960 = vdwg.mxu0
        %v961 = vld [vmem:[%s6] sm:$0xff]
        %v962 = vld [vmem:[%s6 + $0x8] sm:$0xf]
        %v965 = vlaneseq
        %v966 = vshrl.u32 %v965, 7
        %v967 = vsub.s32 0, %v966
        %v968 = vrot.slane %v961, %v967
        %v969 = vlaneseq
        %v970 = vshrl.u32 %v969, 7
        %v971 = vsub.s32 4, %v970
        %v972 = vrot.slane %v961, %v971
        %v973 = vlaneseq
        %v974 = vshrl.u32 %v973, 7
        %v975 = vsub.s32 0, %v974
        %v976 = vrot.slane %v962, %v975
        %v980 = vlaneseq
        %v981 = vshrl.u32 %v980, 7
        %v982 = vsub.s32 0, %v981
        %v983 = vrot.slane %v968, %v982
        %v984 = vlaneseq
        %v985 = vshrl.u32 %v984, 7
        %v986 = vsub.s32 0, %v985
        %v987 = vrot.slane %v972, %v986
        %v988 = vlaneseq
        %v989 = vshrl.u32 %v988, 7
        %v990 = vsub.s32 0, %v989
        %v991 = vrot.slane %v976, %v990
        %v992 = vmul.f32 %v349, %v983
        %v993 = vmul.f32 %v349, %v987
        %v994 = vmul.f32 %v349, %v991
        %v995 = vmul.f32 %v354, %v983
        %v996 = vmul.f32 %v354, %v987
        %v997 = vmul.f32 %v354, %v991
        %v998 = vmul.f32 %v359, %v983
        %v999 = vmul.f32 %v359, %v987
        %v1000 = vmul.f32 %v359, %v991
        %v1001 = vmul.f32 %v364, %v983
        %v1002 = vmul.f32 %v364, %v987
        %v1003 = vmul.f32 %v364, %v991
        %v1004 = vmul.f32 %v369, %v983
        %v1005 = vmul.f32 %v369, %v987
        %v1006 = vmul.f32 %v369, %v991
        %v1007 = vmul.f32 %v374, %v983
        %v1008 = vmul.f32 %v374, %v987
        %v1009 = vmul.f32 %v374, %v991
        %v1010 = vmul.f32 %v379, %v983
        %v1011 = vmul.f32 %v379, %v987
        %v1012 = vmul.f32 %v379, %v991
        %v1013 = vmul.f32 %v384, %v983
        %v1014 = vmul.f32 %v384, %v987
        %v1015 = vmul.f32 %v384, %v991
        %v1016 = vlaneseq
        %v1017 = vshrl.u32 %v1016, 7
        %v1018 = vsub.s32 1, %v1017
        %v1019 = vrot.slane %v961, %v1018
        %v1020 = vlaneseq
        %v1021 = vshrl.u32 %v1020, 7
        %v1022 = vsub.s32 5, %v1021
        %v1023 = vrot.slane %v961, %v1022
        %v1024 = vlaneseq
        %v1025 = vshrl.u32 %v1024, 7
        %v1026 = vsub.s32 1, %v1025
        %v1027 = vrot.slane %v962, %v1026
        %v1031 = vlaneseq
        %v1032 = vshrl.u32 %v1031, 7
        %v1033 = vsub.s32 1, %v1032
        %v1034 = vrot.slane %v1019, %v1033
        %v1035 = vlaneseq
        %v1036 = vshrl.u32 %v1035, 7
        %v1037 = vsub.s32 1, %v1036
        %v1038 = vrot.slane %v1023, %v1037
        %v1039 = vlaneseq
        %v1040 = vshrl.u32 %v1039, 7
        %v1041 = vsub.s32 1, %v1040
        %v1042 = vrot.slane %v1027, %v1041
        %v1043 = vmul.f32 %v423, %v1034
        %v1044 = vmul.f32 %v423, %v1038
        %v1045 = vmul.f32 %v423, %v1042
        %v1046 = vmul.f32 %v427, %v1034
        %v1047 = vmul.f32 %v427, %v1038
        %v1048 = vmul.f32 %v427, %v1042
        %v1049 = vmul.f32 %v431, %v1034
        %v1050 = vmul.f32 %v431, %v1038
        %v1051 = vmul.f32 %v431, %v1042
        %v1052 = vmul.f32 %v435, %v1034
        %v1053 = vmul.f32 %v435, %v1038
        %v1054 = vmul.f32 %v435, %v1042
        %v1055 = vmul.f32 %v439, %v1034
        %v1056 = vmul.f32 %v439, %v1038
        %v1057 = vmul.f32 %v439, %v1042
        %v1058 = vmul.f32 %v443, %v1034
        %v1059 = vmul.f32 %v443, %v1038
        %v1060 = vmul.f32 %v443, %v1042
        %v1061 = vmul.f32 %v447, %v1034
        %v1062 = vmul.f32 %v447, %v1038
        %v1063 = vmul.f32 %v447, %v1042
        %v1064 = vmul.f32 %v451, %v1034
        %v1065 = vmul.f32 %v451, %v1038
        %v1066 = vmul.f32 %v451, %v1042
        %v1067 = vadd.f32 %v992, %v1043
        %v1068 = vadd.f32 %v993, %v1044
        %v1069 = vadd.f32 %v994, %v1045
        %v1070 = vadd.f32 %v995, %v1046
        %v1071 = vadd.f32 %v996, %v1047
        %v1072 = vadd.f32 %v997, %v1048
        %v1073 = vadd.f32 %v998, %v1049
        %v1074 = vadd.f32 %v999, %v1050
        %v1075 = vadd.f32 %v1000, %v1051
        %v1076 = vadd.f32 %v1001, %v1052
        %v1077 = vadd.f32 %v1002, %v1053
        %v1078 = vadd.f32 %v1003, %v1054
        %v1079 = vadd.f32 %v1004, %v1055
        %v1080 = vadd.f32 %v1005, %v1056
        %v1081 = vadd.f32 %v1006, %v1057
        %v1082 = vadd.f32 %v1007, %v1058
        %v1083 = vadd.f32 %v1008, %v1059
        %v1084 = vadd.f32 %v1009, %v1060
        %v1085 = vadd.f32 %v1010, %v1061
        %v1086 = vadd.f32 %v1011, %v1062
        %v1087 = vadd.f32 %v1012, %v1063
        %v1088 = vadd.f32 %v1013, %v1064
        %v1089 = vadd.f32 %v1014, %v1065
        %v1090 = vadd.f32 %v1015, %v1066
        %v1091 = vlaneseq
        %v1092 = vshrl.u32 %v1091, 7
        %v1093 = vsub.s32 2, %v1092
        %v1094 = vrot.slane %v961, %v1093
        %v1095 = vlaneseq
        %v1096 = vshrl.u32 %v1095, 7
        %v1097 = vsub.s32 6, %v1096
        %v1098 = vrot.slane %v961, %v1097
        %v1099 = vlaneseq
        %v1100 = vshrl.u32 %v1099, 7
        %v1101 = vsub.s32 2, %v1100
        %v1102 = vrot.slane %v962, %v1101
        %v1106 = vlaneseq
        %v1107 = vshrl.u32 %v1106, 7
        %v1108 = vsub.s32 2, %v1107
        %v1109 = vrot.slane %v1094, %v1108
        %v1110 = vlaneseq
        %v1111 = vshrl.u32 %v1110, 7
        %v1112 = vsub.s32 2, %v1111
        %v1113 = vrot.slane %v1098, %v1112
        %v1114 = vlaneseq
        %v1115 = vshrl.u32 %v1114, 7
        %v1116 = vsub.s32 2, %v1115
        %v1117 = vrot.slane %v1102, %v1116
        %v1118 = vmul.f32 %v505, %v1109
        %v1119 = vmul.f32 %v505, %v1113
        %v1120 = vmul.f32 %v505, %v1117
        %v1121 = vmul.f32 %v509, %v1109
        %v1122 = vmul.f32 %v509, %v1113
        %v1123 = vmul.f32 %v509, %v1117
        %v1124 = vmul.f32 %v513, %v1109
        %v1125 = vmul.f32 %v513, %v1113
        %v1126 = vmul.f32 %v513, %v1117
        %v1127 = vmul.f32 %v517, %v1109
        %v1128 = vmul.f32 %v517, %v1113
        %v1129 = vmul.f32 %v517, %v1117
        %v1130 = vmul.f32 %v521, %v1109
        %v1131 = vmul.f32 %v521, %v1113
        %v1132 = vmul.f32 %v521, %v1117
        %v1133 = vmul.f32 %v525, %v1109
        %v1134 = vmul.f32 %v525, %v1113
        %v1135 = vmul.f32 %v525, %v1117
        %v1136 = vmul.f32 %v529, %v1109
        %v1137 = vmul.f32 %v529, %v1113
        %v1138 = vmul.f32 %v529, %v1117
        %v1139 = vmul.f32 %v533, %v1109
        %v1140 = vmul.f32 %v533, %v1113
        %v1141 = vmul.f32 %v533, %v1117
        %v1142 = vadd.f32 %v1067, %v1118
        %v1143 = vadd.f32 %v1068, %v1119
        %v1144 = vadd.f32 %v1069, %v1120
        %v1145 = vadd.f32 %v1070, %v1121
        %v1146 = vadd.f32 %v1071, %v1122
        %v1147 = vadd.f32 %v1072, %v1123
        %v1148 = vadd.f32 %v1073, %v1124
        %v1149 = vadd.f32 %v1074, %v1125
        %v1150 = vadd.f32 %v1075, %v1126
        %v1151 = vadd.f32 %v1076, %v1127
        %v1152 = vadd.f32 %v1077, %v1128
        %v1153 = vadd.f32 %v1078, %v1129
        %v1154 = vadd.f32 %v1079, %v1130
        %v1155 = vadd.f32 %v1080, %v1131
        %v1156 = vadd.f32 %v1081, %v1132
        %v1157 = vadd.f32 %v1082, %v1133
        %v1158 = vadd.f32 %v1083, %v1134
        %v1159 = vadd.f32 %v1084, %v1135
        %v1160 = vadd.f32 %v1085, %v1136
        %v1161 = vadd.f32 %v1086, %v1137
        %v1162 = vadd.f32 %v1087, %v1138
        %v1163 = vadd.f32 %v1088, %v1139
        %v1164 = vadd.f32 %v1089, %v1140
        %v1165 = vadd.f32 %v1090, %v1141
        %v1166 = vlaneseq
        %v1167 = vshrl.u32 %v1166, 7
        %v1168 = vsub.s32 3, %v1167
        %v1169 = vrot.slane %v961, %v1168
        %v1170 = vlaneseq
        %v1171 = vshrl.u32 %v1170, 7
        %v1172 = vsub.s32 7, %v1171
        %v1173 = vrot.slane %v961, %v1172
        %v1174 = vlaneseq
        %v1175 = vshrl.u32 %v1174, 7
        %v1176 = vsub.s32 3, %v1175
        %v1177 = vrot.slane %v962, %v1176
        %v1181 = vlaneseq
        %v1182 = vshrl.u32 %v1181, 7
        %v1183 = vsub.s32 3, %v1182
        %v1184 = vrot.slane %v1169, %v1183
        %v1185 = vlaneseq
        %v1186 = vshrl.u32 %v1185, 7
        %v1187 = vsub.s32 3, %v1186
        %v1188 = vrot.slane %v1173, %v1187
        %v1189 = vlaneseq
        %v1190 = vshrl.u32 %v1189, 7
        %v1191 = vsub.s32 3, %v1190
        %v1192 = vrot.slane %v1177, %v1191
        %v1193 = vadd.f32 %v1142, %v1184
        %v1194 = vadd.f32 %v1143, %v1188
        %v1195 = vadd.f32 %v1144, %v1192
        %v1196 = vadd.f32 %v1145, %v1184
        %v1197 = vadd.f32 %v1146, %v1188
        %v1198 = vadd.f32 %v1147, %v1192
        %v1199 = vadd.f32 %v1148, %v1184
        %v1200 = vadd.f32 %v1149, %v1188
        %v1201 = vadd.f32 %v1150, %v1192
        %v1202 = vadd.f32 %v1151, %v1184
        %v1203 = vadd.f32 %v1152, %v1188
        %v1204 = vadd.f32 %v1153, %v1192
        %v1205 = vadd.f32 %v1154, %v1184
        %v1206 = vadd.f32 %v1155, %v1188
        %v1207 = vadd.f32 %v1156, %v1192
        %v1208 = vadd.f32 %v1157, %v1184
        %v1209 = vadd.f32 %v1158, %v1188
        %v1210 = vadd.f32 %v1159, %v1192
        %v1211 = vadd.f32 %v1160, %v1184
        %v1212 = vadd.f32 %v1161, %v1188
        %v1213 = vadd.f32 %v1162, %v1192
        %v1214 = vadd.f32 %v1163, %v1184
        %v1215 = vadd.f32 %v1164, %v1188
        %v1216 = vadd.f32 %v1165, %v1192
        %v1217 = vand.u32 2147483647, %v1193
        %vm1218 = vcmp.le.f32.partialorder %v1217, 0.7853982
        %vm1219 = vcmp.lt.s32.totalorder %v1193, 0
        %v1220 = vand.u32 %v1193, 2139095040
        %v1221 = vshrl.u32 %v1220, 23
        %v1222 = vsub.s32 %v1221, 127
        %v1223 = vand.u32 2147483647, %v1193
        %v1224 = vand.u32 %v1223, 8388607
        %v1225 = vor.u32 %v1224, 8388608
        %v1226 = vsub.s32 0, %v1225
        %v1227 = vadd.s32 %v1222, 1
        %vm1228 = vcmp.gt.s32.totalorder %v1227, 0
        %v1229 = vsel %vm1228, %v1227, 0
        %v1230 = vshrl.u32 %v1229, 5
        %v1231 = vand.u32 %v1229, 31
        %v1232 = vsub.s32 32, %v1231
        %v1233 = vshrl.u32 683565275, %v1232
        %v1234 = vshll.u32 683565275, %v1231
        %v1235 = vshrl.u32 2475754826, %v1232
        %v1236 = vor.u32 %v1234, %v1235
        %v1237 = vshll.u32 2475754826, %v1231
        %v1238 = vshrl.u32 2131351028, %v1232
        %v1239 = vor.u32 %v1237, %v1238
        %v1240 = vshll.u32 2131351028, %v1231
        %v1241 = vshrl.u32 2102212464, %v1232
        %v1242 = vor.u32 %v1240, %v1241
        %v1243 = vshll.u32 2102212464, %v1231
        %v1244 = vshrl.u32 920167782, %v1232
        %v1245 = vor.u32 %v1243, %v1244
        %v1246 = vshll.u32 920167782, %v1231
        %v1247 = vshrl.u32 1326507024, %v1232
        %v1248 = vor.u32 %v1246, %v1247
        %vm1249 = vcmp.lt.s32.totalorder %v1230, 1
        %vm1250 = vcmp.lt.s32.totalorder %v1230, 2
        %vm1251 = vcmp.lt.s32.totalorder %v1230, 3
        %vm1252 = vcmp.lt.s32.totalorder %v1230, 4
        %v1253 = vsel %vm1249, %v1233, %v1236
        %v1254 = vsel %vm1252, %v1242, 2102212464
        %v1255 = vsel %vm1251, %v1239, %v1254
        %v1256 = vsel %vm1250, %v1253, %v1255
        %v1257 = vsel %vm1249, %v1236, %v1239
        %v1258 = vsel %vm1252, %v1245, 920167782
        %v1259 = vsel %vm1251, %v1242, %v1258
        %v1260 = vsel %vm1250, %v1257, %v1259
        %v1261 = vsel %vm1249, %v1239, %v1242
        %v1262 = vsel %vm1252, %v1248, 1326507024
        %v1263 = vsel %vm1251, %v1245, %v1262
        %v1264 = vsel %vm1250, %v1261, %v1263
        %v1265 = vshll.u32 %v1225, 8
        %v1266 = vmul.u32.u64.compose %v1265, %v1264
        %v1267 = vextract.low.u32 %v1266
        %v1268 = vextract.high.u32 %v1266
        %v1269 = vmul.u32.u64.compose %v1265, %v1260
        %v1270 = vextract.low.u32 %v1269
        %v1271 = vextract.high.u32 %v1269
        %v1272 = vmul.u32 %v1265, %v1256
        %v1273 = vadd.s32 %v1268, %v1270
        %vm1274 = vc.u32 %v1268, %v1270
        %v1275 = vadd.s32 %v1271, 1
        %v1276 = vsel %vm1274, %v1275, %v1271
        %v1277 = vadd.s32 %v1272, %v1276
        %v1278 = vadd.s32 %v1277, 536870912
        %v1279 = vshrl.u32 %v1278, 30
        %v1280 = vshll.u32 %v1279, 30
        %v1281 = vsub.s32 %v1277, %v1280
        %vm1282 = vcmp.lt.s32.totalorder %v1281, 0
        %v1283 = vsub.s32 0, %v1281
        %v1284 = vsel %vm1282, %v1283, %v1281
        %v1285 = vclz %v1284
        %v1286 = vsub.s32 %v1285, 2
        %vm1287 = vcmp.gt.s32.totalorder 0, %v1286
        %v1288 = vsel %vm1287, 0, %v1286
        %v1289 = vsub.s32 32, %v1288
        %v1290 = vshll.u32 %v1281, %v1288
        %v1291 = vshrl.u32 %v1273, %v1289
        %v1292 = vor.u32 %v1290, %v1291
        %v1293 = vsub.s32 4294967266, %v1288
        %v1294 = vadd.s32 %v1293, 127
        %v1295 = vshll.u32 %v1294, 23
        %v1296 = vor.u32 4788187, %v1295
        %v1297 = vand.u32 2147483647, %v1296
        %v1299 = vcvt.s32.f32 %v1292
        %v1300 = vmul.f32 %v1299, %v1297
        %v1301 = vxor.u32 %v1300, 2147483648
        %v1302 = vsel %vm1219, %v1301, %v1300
        %v1303 = vsub.s32 4, %v1279
        %v1304 = vsel %vm1219, %v1303, %v1279
        %v1305 = vsel %vm1218, %v1193, %v1302
        %v1306 = vsel %vm1218, 0, %v1304
        %v1307 = vcosq.f32.pop %v1305
        %v1308 = vsinq.f32.pop %v1305
        %vm1309 = vweird.f32 %v1193
        %v1310 = vadd.s32 %v1306, 3
        %v1311 = vand.u32 %v1310, 3
        %vm1312 = vcmp.lt.s32.totalorder %v1311, 2
        %vm1313 = vcmp.eq.s32.totalorder %v1311, 0
        %v1314 = vxor.u32 %v1308, 2147483648
        %v1315 = vsel %vm1313, %v1307, %v1314
        %vm1316 = vcmp.eq.s32.totalorder %v1311, 2
        %v1317 = vxor.u32 %v1307, 2147483648
        %v1318 = vsel %vm1316, %v1317, %v1308
        %v1319 = vsel %vm1312, %v1315, %v1318
        %v1320 = vsel %vm1309, nan, %v1319
        %v1321 = vand.u32 2147483647, %v1194
        %vm1322 = vcmp.le.f32.partialorder %v1321, 0.7853982
        %vm1323 = vcmp.lt.s32.totalorder %v1194, 0
        %v1324 = vand.u32 %v1194, 2139095040
        %v1325 = vshrl.u32 %v1324, 23
        %v1326 = vsub.s32 %v1325, 127
        %v1327 = vand.u32 2147483647, %v1194
        %v1328 = vand.u32 %v1327, 8388607
        %v1329 = vor.u32 %v1328, 8388608
        %v1330 = vsub.s32 0, %v1329
        %v1331 = vadd.s32 %v1326, 1
        %vm1332 = vcmp.gt.s32.totalorder %v1331, 0
        %v1333 = vsel %vm1332, %v1331, 0
        %v1334 = vshrl.u32 %v1333, 5
        %v1335 = vand.u32 %v1333, 31
        %v1336 = vsub.s32 32, %v1335
        %v1337 = vshrl.u32 683565275, %v1336
        %v1338 = vshll.u32 683565275, %v1335
        %v1339 = vshrl.u32 2475754826, %v1336
        %v1340 = vor.u32 %v1338, %v1339
        %v1341 = vshll.u32 2475754826, %v1335
        %v1342 = vshrl.u32 2131351028, %v1336
        %v1343 = vor.u32 %v1341, %v1342
        %v1344 = vshll.u32 2131351028, %v1335
        %v1345 = vshrl.u32 2102212464, %v1336
        %v1346 = vor.u32 %v1344, %v1345
        %v1347 = vshll.u32 2102212464, %v1335
        %v1348 = vshrl.u32 920167782, %v1336
        %v1349 = vor.u32 %v1347, %v1348
        %v1350 = vshll.u32 920167782, %v1335
        %v1351 = vshrl.u32 1326507024, %v1336
        %v1352 = vor.u32 %v1350, %v1351
        %vm1353 = vcmp.lt.s32.totalorder %v1334, 1
        %vm1354 = vcmp.lt.s32.totalorder %v1334, 2
        %vm1355 = vcmp.lt.s32.totalorder %v1334, 3
        %vm1356 = vcmp.lt.s32.totalorder %v1334, 4
        %v1357 = vsel %vm1353, %v1337, %v1340
        %v1358 = vsel %vm1356, %v1346, 2102212464
        %v1359 = vsel %vm1355, %v1343, %v1358
        %v1360 = vsel %vm1354, %v1357, %v1359
        %v1361 = vsel %vm1353, %v1340, %v1343
        %v1362 = vsel %vm1356, %v1349, 920167782
        %v1363 = vsel %vm1355, %v1346, %v1362
        %v1364 = vsel %vm1354, %v1361, %v1363
        %v1365 = vsel %vm1353, %v1343, %v1346
        %v1366 = vsel %vm1356, %v1352, 1326507024
        %v1367 = vsel %vm1355, %v1349, %v1366
        %v1368 = vsel %vm1354, %v1365, %v1367
        %v1369 = vshll.u32 %v1329, 8
        %v1370 = vmul.u32.u64.compose %v1369, %v1368
        %v1371 = vextract.low.u32 %v1370
        %v1372 = vextract.high.u32 %v1370
        %v1373 = vmul.u32.u64.compose %v1369, %v1364
        %v1374 = vextract.low.u32 %v1373
        %v1375 = vextract.high.u32 %v1373
        %v1376 = vmul.u32 %v1369, %v1360
        %v1377 = vadd.s32 %v1372, %v1374
        %vm1378 = vc.u32 %v1372, %v1374
        %v1379 = vadd.s32 %v1375, 1
        %v1380 = vsel %vm1378, %v1379, %v1375
        %v1381 = vadd.s32 %v1376, %v1380
        %v1382 = vadd.s32 %v1381, 536870912
        %v1383 = vshrl.u32 %v1382, 30
        %v1384 = vshll.u32 %v1383, 30
        %v1385 = vsub.s32 %v1381, %v1384
        %vm1386 = vcmp.lt.s32.totalorder %v1385, 0
        %v1387 = vsub.s32 0, %v1385
        %v1388 = vsel %vm1386, %v1387, %v1385
        %v1389 = vclz %v1388
        %v1390 = vsub.s32 %v1389, 2
        %vm1391 = vcmp.gt.s32.totalorder 0, %v1390
        %v1392 = vsel %vm1391, 0, %v1390
        %v1393 = vsub.s32 32, %v1392
        %v1394 = vshll.u32 %v1385, %v1392
        %v1395 = vshrl.u32 %v1377, %v1393
        %v1396 = vor.u32 %v1394, %v1395
        %v1397 = vsub.s32 4294967266, %v1392
        %v1398 = vadd.s32 %v1397, 127
        %v1399 = vshll.u32 %v1398, 23
        %v1400 = vor.u32 4788187, %v1399
        %v1401 = vand.u32 2147483647, %v1400
        %v1403 = vcvt.s32.f32 %v1396
        %v1404 = vmul.f32 %v1403, %v1401
        %v1405 = vxor.u32 %v1404, 2147483648
        %v1406 = vsel %vm1323, %v1405, %v1404
        %v1407 = vsub.s32 4, %v1383
        %v1408 = vsel %vm1323, %v1407, %v1383
        %v1409 = vsel %vm1322, %v1194, %v1406
        %v1410 = vsel %vm1322, 0, %v1408
        %v1411 = vcosq.f32.pop %v1409
        %v1412 = vsinq.f32.pop %v1409
        %vm1413 = vweird.f32 %v1194
        %v1414 = vadd.s32 %v1410, 3
        %v1415 = vand.u32 %v1414, 3
        %vm1416 = vcmp.lt.s32.totalorder %v1415, 2
        %vm1417 = vcmp.eq.s32.totalorder %v1415, 0
        %v1418 = vxor.u32 %v1412, 2147483648
        %v1419 = vsel %vm1417, %v1411, %v1418
        %vm1420 = vcmp.eq.s32.totalorder %v1415, 2
        %v1421 = vxor.u32 %v1411, 2147483648
        %v1422 = vsel %vm1420, %v1421, %v1412
        %v1423 = vsel %vm1416, %v1419, %v1422
        %v1424 = vsel %vm1413, nan, %v1423
        %v1425 = vand.u32 2147483647, %v1195
        %vm1426 = vcmp.le.f32.partialorder %v1425, 0.7853982
        %vm1427 = vcmp.lt.s32.totalorder %v1195, 0
        %v1428 = vand.u32 %v1195, 2139095040
        %v1429 = vshrl.u32 %v1428, 23
        %v1430 = vsub.s32 %v1429, 127
        %v1431 = vand.u32 2147483647, %v1195
        %v1432 = vand.u32 %v1431, 8388607
        %v1433 = vor.u32 %v1432, 8388608
        %v1434 = vsub.s32 0, %v1433
        %v1435 = vadd.s32 %v1430, 1
        %vm1436 = vcmp.gt.s32.totalorder %v1435, 0
        %v1437 = vsel %vm1436, %v1435, 0
        %v1438 = vshrl.u32 %v1437, 5
        %v1439 = vand.u32 %v1437, 31
        %v1440 = vsub.s32 32, %v1439
        %v1441 = vshrl.u32 683565275, %v1440
        %v1442 = vshll.u32 683565275, %v1439
        %v1443 = vshrl.u32 2475754826, %v1440
        %v1444 = vor.u32 %v1442, %v1443
        %v1445 = vshll.u32 2475754826, %v1439
        %v1446 = vshrl.u32 2131351028, %v1440
        %v1447 = vor.u32 %v1445, %v1446
        %v1448 = vshll.u32 2131351028, %v1439
        %v1449 = vshrl.u32 2102212464, %v1440
        %v1450 = vor.u32 %v1448, %v1449
        %v1451 = vshll.u32 2102212464, %v1439
        %v1452 = vshrl.u32 920167782, %v1440
        %v1453 = vor.u32 %v1451, %v1452
        %v1454 = vshll.u32 920167782, %v1439
        %v1455 = vshrl.u32 1326507024, %v1440
        %v1456 = vor.u32 %v1454, %v1455
        %vm1457 = vcmp.lt.s32.totalorder %v1438, 1
        %vm1458 = vcmp.lt.s32.totalorder %v1438, 2
        %vm1459 = vcmp.lt.s32.totalorder %v1438, 3
        %vm1460 = vcmp.lt.s32.totalorder %v1438, 4
        %v1461 = vsel %vm1457, %v1441, %v1444
        %v1462 = vsel %vm1460, %v1450, 2102212464
        %v1463 = vsel %vm1459, %v1447, %v1462
        %v1464 = vsel %vm1458, %v1461, %v1463
        %v1465 = vsel %vm1457, %v1444, %v1447
        %v1466 = vsel %vm1460, %v1453, 920167782
        %v1467 = vsel %vm1459, %v1450, %v1466
        %v1468 = vsel %vm1458, %v1465, %v1467
        %v1469 = vsel %vm1457, %v1447, %v1450
        %v1470 = vsel %vm1460, %v1456, 1326507024
        %v1471 = vsel %vm1459, %v1453, %v1470
        %v1472 = vsel %vm1458, %v1469, %v1471
        %v1473 = vshll.u32 %v1433, 8
        %v1474 = vmul.u32.u64.compose %v1473, %v1472
        %v1475 = vextract.low.u32 %v1474
        %v1476 = vextract.high.u32 %v1474
        %v1477 = vmul.u32.u64.compose %v1473, %v1468
        %v1478 = vextract.low.u32 %v1477
        %v1479 = vextract.high.u32 %v1477
        %v1480 = vmul.u32 %v1473, %v1464
        %v1481 = vadd.s32 %v1476, %v1478
        %vm1482 = vc.u32 %v1476, %v1478
        %v1483 = vadd.s32 %v1479, 1
        %v1484 = vsel %vm1482, %v1483, %v1479
        %v1485 = vadd.s32 %v1480, %v1484
        %v1486 = vadd.s32 %v1485, 536870912
        %v1487 = vshrl.u32 %v1486, 30
        %v1488 = vshll.u32 %v1487, 30
        %v1489 = vsub.s32 %v1485, %v1488
        %vm1490 = vcmp.lt.s32.totalorder %v1489, 0
        %v1491 = vsub.s32 0, %v1489
        %v1492 = vsel %vm1490, %v1491, %v1489
        %v1493 = vclz %v1492
        %v1494 = vsub.s32 %v1493, 2
        %vm1495 = vcmp.gt.s32.totalorder 0, %v1494
        %v1496 = vsel %vm1495, 0, %v1494
        %v1497 = vsub.s32 32, %v1496
        %v1498 = vshll.u32 %v1489, %v1496
        %v1499 = vshrl.u32 %v1481, %v1497
        %v1500 = vor.u32 %v1498, %v1499
        %v1501 = vsub.s32 4294967266, %v1496
        %v1502 = vadd.s32 %v1501, 127
        %v1503 = vshll.u32 %v1502, 23
        %v1504 = vor.u32 4788187, %v1503
        %v1505 = vand.u32 2147483647, %v1504
        %v1507 = vcvt.s32.f32 %v1500
        %v1508 = vmul.f32 %v1507, %v1505
        %v1509 = vxor.u32 %v1508, 2147483648
        %v1510 = vsel %vm1427, %v1509, %v1508
        %v1511 = vsub.s32 4, %v1487
        %v1512 = vsel %vm1427, %v1511, %v1487
        %v1513 = vsel %vm1426, %v1195, %v1510
        %v1514 = vsel %vm1426, 0, %v1512
        %v1515 = vcosq.f32.pop %v1513
        %v1516 = vsinq.f32.pop %v1513
        %vm1517 = vweird.f32 %v1195
        %v1518 = vadd.s32 %v1514, 3
        %v1519 = vand.u32 %v1518, 3
        %vm1520 = vcmp.lt.s32.totalorder %v1519, 2
        %vm1521 = vcmp.eq.s32.totalorder %v1519, 0
        %v1522 = vxor.u32 %v1516, 2147483648
        %v1523 = vsel %vm1521, %v1515, %v1522
        %vm1524 = vcmp.eq.s32.totalorder %v1519, 2
        %v1525 = vxor.u32 %v1515, 2147483648
        %v1526 = vsel %vm1524, %v1525, %v1516
        %v1527 = vsel %vm1520, %v1523, %v1526
        %v1528 = vsel %vm1517, nan, %v1527
        %v1529 = vand.u32 2147483647, %v1196
        %vm1530 = vcmp.le.f32.partialorder %v1529, 0.7853982
        %vm1531 = vcmp.lt.s32.totalorder %v1196, 0
        %v1532 = vand.u32 %v1196, 2139095040
        %v1533 = vshrl.u32 %v1532, 23
        %v1534 = vsub.s32 %v1533, 127
        %v1535 = vand.u32 2147483647, %v1196
        %v1536 = vand.u32 %v1535, 8388607
        %v1537 = vor.u32 %v1536, 8388608
        %v1538 = vsub.s32 0, %v1537
        %v1539 = vadd.s32 %v1534, 1
        %vm1540 = vcmp.gt.s32.totalorder %v1539, 0
        %v1541 = vsel %vm1540, %v1539, 0
        %v1542 = vshrl.u32 %v1541, 5
        %v1543 = vand.u32 %v1541, 31
        %v1544 = vsub.s32 32, %v1543
        %v1545 = vshrl.u32 683565275, %v1544
        %v1546 = vshll.u32 683565275, %v1543
        %v1547 = vshrl.u32 2475754826, %v1544
        %v1548 = vor.u32 %v1546, %v1547
        %v1549 = vshll.u32 2475754826, %v1543
        %v1550 = vshrl.u32 2131351028, %v1544
        %v1551 = vor.u32 %v1549, %v1550
        %v1552 = vshll.u32 2131351028, %v1543
        %v1553 = vshrl.u32 2102212464, %v1544
        %v1554 = vor.u32 %v1552, %v1553
        %v1555 = vshll.u32 2102212464, %v1543
        %v1556 = vshrl.u32 920167782, %v1544
        %v1557 = vor.u32 %v1555, %v1556
        %v1558 = vshll.u32 920167782, %v1543
        %v1559 = vshrl.u32 1326507024, %v1544
        %v1560 = vor.u32 %v1558, %v1559
        %vm1561 = vcmp.lt.s32.totalorder %v1542, 1
        %vm1562 = vcmp.lt.s32.totalorder %v1542, 2
        %vm1563 = vcmp.lt.s32.totalorder %v1542, 3
        %vm1564 = vcmp.lt.s32.totalorder %v1542, 4
        %v1565 = vsel %vm1561, %v1545, %v1548
        %v1566 = vsel %vm1564, %v1554, 2102212464
        %v1567 = vsel %vm1563, %v1551, %v1566
        %v1568 = vsel %vm1562, %v1565, %v1567
        %v1569 = vsel %vm1561, %v1548, %v1551
        %v1570 = vsel %vm1564, %v1557, 920167782
        %v1571 = vsel %vm1563, %v1554, %v1570
        %v1572 = vsel %vm1562, %v1569, %v1571
        %v1573 = vsel %vm1561, %v1551, %v1554
        %v1574 = vsel %vm1564, %v1560, 1326507024
        %v1575 = vsel %vm1563, %v1557, %v1574
        %v1576 = vsel %vm1562, %v1573, %v1575
        %v1577 = vshll.u32 %v1537, 8
        %v1578 = vmul.u32.u64.compose %v1577, %v1576
        %v1579 = vextract.low.u32 %v1578
        %v1580 = vextract.high.u32 %v1578
        %v1581 = vmul.u32.u64.compose %v1577, %v1572
        %v1582 = vextract.low.u32 %v1581
        %v1583 = vextract.high.u32 %v1581
        %v1584 = vmul.u32 %v1577, %v1568
        %v1585 = vadd.s32 %v1580, %v1582
        %vm1586 = vc.u32 %v1580, %v1582
        %v1587 = vadd.s32 %v1583, 1
        %v1588 = vsel %vm1586, %v1587, %v1583
        %v1589 = vadd.s32 %v1584, %v1588
        %v1590 = vadd.s32 %v1589, 536870912
        %v1591 = vshrl.u32 %v1590, 30
        %v1592 = vshll.u32 %v1591, 30
        %v1593 = vsub.s32 %v1589, %v1592
        %vm1594 = vcmp.lt.s32.totalorder %v1593, 0
        %v1595 = vsub.s32 0, %v1593
        %v1596 = vsel %vm1594, %v1595, %v1593
        %v1597 = vclz %v1596
        %v1598 = vsub.s32 %v1597, 2
        %vm1599 = vcmp.gt.s32.totalorder 0, %v1598
        %v1600 = vsel %vm1599, 0, %v1598
        %v1601 = vsub.s32 32, %v1600
        %v1602 = vshll.u32 %v1593, %v1600
        %v1603 = vshrl.u32 %v1585, %v1601
        %v1604 = vor.u32 %v1602, %v1603
        %v1605 = vsub.s32 4294967266, %v1600
        %v1606 = vadd.s32 %v1605, 127
        %v1607 = vshll.u32 %v1606, 23
        %v1608 = vor.u32 4788187, %v1607
        %v1609 = vand.u32 2147483647, %v1608
        %v1611 = vcvt.s32.f32 %v1604
        %v1612 = vmul.f32 %v1611, %v1609
        %v1613 = vxor.u32 %v1612, 2147483648
        %v1614 = vsel %vm1531, %v1613, %v1612
        %v1615 = vsub.s32 4, %v1591
        %v1616 = vsel %vm1531, %v1615, %v1591
        %v1617 = vsel %vm1530, %v1196, %v1614
        %v1618 = vsel %vm1530, 0, %v1616
        %v1619 = vcosq.f32.pop %v1617
        %v1620 = vsinq.f32.pop %v1617
        %vm1621 = vweird.f32 %v1196
        %v1622 = vadd.s32 %v1618, 3
        %v1623 = vand.u32 %v1622, 3
        %vm1624 = vcmp.lt.s32.totalorder %v1623, 2
        %vm1625 = vcmp.eq.s32.totalorder %v1623, 0
        %v1626 = vxor.u32 %v1620, 2147483648
        %v1627 = vsel %vm1625, %v1619, %v1626
        %vm1628 = vcmp.eq.s32.totalorder %v1623, 2
        %v1629 = vxor.u32 %v1619, 2147483648
        %v1630 = vsel %vm1628, %v1629, %v1620
        %v1631 = vsel %vm1624, %v1627, %v1630
        %v1632 = vsel %vm1621, nan, %v1631
        %v1633 = vand.u32 2147483647, %v1197
        %vm1634 = vcmp.le.f32.partialorder %v1633, 0.7853982
        %vm1635 = vcmp.lt.s32.totalorder %v1197, 0
        %v1636 = vand.u32 %v1197, 2139095040
        %v1637 = vshrl.u32 %v1636, 23
        %v1638 = vsub.s32 %v1637, 127
        %v1639 = vand.u32 2147483647, %v1197
        %v1640 = vand.u32 %v1639, 8388607
        %v1641 = vor.u32 %v1640, 8388608
        %v1642 = vsub.s32 0, %v1641
        %v1643 = vadd.s32 %v1638, 1
        %vm1644 = vcmp.gt.s32.totalorder %v1643, 0
        %v1645 = vsel %vm1644, %v1643, 0
        %v1646 = vshrl.u32 %v1645, 5
        %v1647 = vand.u32 %v1645, 31
        %v1648 = vsub.s32 32, %v1647
        %v1649 = vshrl.u32 683565275, %v1648
        %v1650 = vshll.u32 683565275, %v1647
        %v1651 = vshrl.u32 2475754826, %v1648
        %v1652 = vor.u32 %v1650, %v1651
        %v1653 = vshll.u32 2475754826, %v1647
        %v1654 = vshrl.u32 2131351028, %v1648
        %v1655 = vor.u32 %v1653, %v1654
        %v1656 = vshll.u32 2131351028, %v1647
        %v1657 = vshrl.u32 2102212464, %v1648
        %v1658 = vor.u32 %v1656, %v1657
        %v1659 = vshll.u32 2102212464, %v1647
        %v1660 = vshrl.u32 920167782, %v1648
        %v1661 = vor.u32 %v1659, %v1660
        %v1662 = vshll.u32 920167782, %v1647
        %v1663 = vshrl.u32 1326507024, %v1648
        %v1664 = vor.u32 %v1662, %v1663
        %vm1665 = vcmp.lt.s32.totalorder %v1646, 1
        %vm1666 = vcmp.lt.s32.totalorder %v1646, 2
        %vm1667 = vcmp.lt.s32.totalorder %v1646, 3
        %vm1668 = vcmp.lt.s32.totalorder %v1646, 4
        %v1669 = vsel %vm1665, %v1649, %v1652
        %v1670 = vsel %vm1668, %v1658, 2102212464
        %v1671 = vsel %vm1667, %v1655, %v1670
        %v1672 = vsel %vm1666, %v1669, %v1671
        %v1673 = vsel %vm1665, %v1652, %v1655
        %v1674 = vsel %vm1668, %v1661, 920167782
        %v1675 = vsel %vm1667, %v1658, %v1674
        %v1676 = vsel %vm1666, %v1673, %v1675
        %v1677 = vsel %vm1665, %v1655, %v1658
        %v1678 = vsel %vm1668, %v1664, 1326507024
        %v1679 = vsel %vm1667, %v1661, %v1678
        %v1680 = vsel %vm1666, %v1677, %v1679
        %v1681 = vshll.u32 %v1641, 8
        %v1682 = vmul.u32.u64.compose %v1681, %v1680
        %v1683 = vextract.low.u32 %v1682
        %v1684 = vextract.high.u32 %v1682
        %v1685 = vmul.u32.u64.compose %v1681, %v1676
        %v1686 = vextract.low.u32 %v1685
        %v1687 = vextract.high.u32 %v1685
        %v1688 = vmul.u32 %v1681, %v1672
        %v1689 = vadd.s32 %v1684, %v1686
        %vm1690 = vc.u32 %v1684, %v1686
        %v1691 = vadd.s32 %v1687, 1
        %v1692 = vsel %vm1690, %v1691, %v1687
        %v1693 = vadd.s32 %v1688, %v1692
        %v1694 = vadd.s32 %v1693, 536870912
        %v1695 = vshrl.u32 %v1694, 30
        %v1696 = vshll.u32 %v1695, 30
        %v1697 = vsub.s32 %v1693, %v1696
        %vm1698 = vcmp.lt.s32.totalorder %v1697, 0
        %v1699 = vsub.s32 0, %v1697
        %v1700 = vsel %vm1698, %v1699, %v1697
        %v1701 = vclz %v1700
        %v1702 = vsub.s32 %v1701, 2
        %vm1703 = vcmp.gt.s32.totalorder 0, %v1702
        %v1704 = vsel %vm1703, 0, %v1702
        %v1705 = vsub.s32 32, %v1704
        %v1706 = vshll.u32 %v1697, %v1704
        %v1707 = vshrl.u32 %v1689, %v1705
        %v1708 = vor.u32 %v1706, %v1707
        %v1709 = vsub.s32 4294967266, %v1704
        %v1710 = vadd.s32 %v1709, 127
        %v1711 = vshll.u32 %v1710, 23
        %v1712 = vor.u32 4788187, %v1711
        %v1713 = vand.u32 2147483647, %v1712
        %v1715 = vcvt.s32.f32 %v1708
        %v1716 = vmul.f32 %v1715, %v1713
        %v1717 = vxor.u32 %v1716, 2147483648
        %v1718 = vsel %vm1635, %v1717, %v1716
        %v1719 = vsub.s32 4, %v1695
        %v1720 = vsel %vm1635, %v1719, %v1695
        %v1721 = vsel %vm1634, %v1197, %v1718
        %v1722 = vsel %vm1634, 0, %v1720
        %v1723 = vcosq.f32.pop %v1721
        %v1724 = vsinq.f32.pop %v1721
        %vm1725 = vweird.f32 %v1197
        %v1726 = vadd.s32 %v1722, 3
        %v1727 = vand.u32 %v1726, 3
        %vm1728 = vcmp.lt.s32.totalorder %v1727, 2
        %vm1729 = vcmp.eq.s32.totalorder %v1727, 0
        %v1730 = vxor.u32 %v1724, 2147483648
        %v1731 = vsel %vm1729, %v1723, %v1730
        %vm1732 = vcmp.eq.s32.totalorder %v1727, 2
        %v1733 = vxor.u32 %v1723, 2147483648
        %v1734 = vsel %vm1732, %v1733, %v1724
        %v1735 = vsel %vm1728, %v1731, %v1734
        %v1736 = vsel %vm1725, nan, %v1735
        %v1737 = vand.u32 2147483647, %v1198
        %vm1738 = vcmp.le.f32.partialorder %v1737, 0.7853982
        %vm1739 = vcmp.lt.s32.totalorder %v1198, 0
        %v1740 = vand.u32 %v1198, 2139095040
        %v1741 = vshrl.u32 %v1740, 23
        %v1742 = vsub.s32 %v1741, 127
        %v1743 = vand.u32 2147483647, %v1198
        %v1744 = vand.u32 %v1743, 8388607
        %v1745 = vor.u32 %v1744, 8388608
        %v1746 = vsub.s32 0, %v1745
        %v1747 = vadd.s32 %v1742, 1
        %vm1748 = vcmp.gt.s32.totalorder %v1747, 0
        %v1749 = vsel %vm1748, %v1747, 0
        %v1750 = vshrl.u32 %v1749, 5
        %v1751 = vand.u32 %v1749, 31
        %v1752 = vsub.s32 32, %v1751
        %v1753 = vshrl.u32 683565275, %v1752
        %v1754 = vshll.u32 683565275, %v1751
        %v1755 = vshrl.u32 2475754826, %v1752
        %v1756 = vor.u32 %v1754, %v1755
        %v1757 = vshll.u32 2475754826, %v1751
        %v1758 = vshrl.u32 2131351028, %v1752
        %v1759 = vor.u32 %v1757, %v1758
        %v1760 = vshll.u32 2131351028, %v1751
        %v1761 = vshrl.u32 2102212464, %v1752
        %v1762 = vor.u32 %v1760, %v1761
        %v1763 = vshll.u32 2102212464, %v1751
        %v1764 = vshrl.u32 920167782, %v1752
        %v1765 = vor.u32 %v1763, %v1764
        %v1766 = vshll.u32 920167782, %v1751
        %v1767 = vshrl.u32 1326507024, %v1752
        %v1768 = vor.u32 %v1766, %v1767
        %vm1769 = vcmp.lt.s32.totalorder %v1750, 1
        %vm1770 = vcmp.lt.s32.totalorder %v1750, 2
        %vm1771 = vcmp.lt.s32.totalorder %v1750, 3
        %vm1772 = vcmp.lt.s32.totalorder %v1750, 4
        %v1773 = vsel %vm1769, %v1753, %v1756
        %v1774 = vsel %vm1772, %v1762, 2102212464
        %v1775 = vsel %vm1771, %v1759, %v1774
        %v1776 = vsel %vm1770, %v1773, %v1775
        %v1777 = vsel %vm1769, %v1756, %v1759
        %v1778 = vsel %vm1772, %v1765, 920167782
        %v1779 = vsel %vm1771, %v1762, %v1778
        %v1780 = vsel %vm1770, %v1777, %v1779
        %v1781 = vsel %vm1769, %v1759, %v1762
        %v1782 = vsel %vm1772, %v1768, 1326507024
        %v1783 = vsel %vm1771, %v1765, %v1782
        %v1784 = vsel %vm1770, %v1781, %v1783
        %v1785 = vshll.u32 %v1745, 8
        %v1786 = vmul.u32.u64.compose %v1785, %v1784
        %v1787 = vextract.low.u32 %v1786
        %v1788 = vextract.high.u32 %v1786
        %v1789 = vmul.u32.u64.compose %v1785, %v1780
        %v1790 = vextract.low.u32 %v1789
        %v1791 = vextract.high.u32 %v1789
        %v1792 = vmul.u32 %v1785, %v1776
        %v1793 = vadd.s32 %v1788, %v1790
        %vm1794 = vc.u32 %v1788, %v1790
        %v1795 = vadd.s32 %v1791, 1
        %v1796 = vsel %vm1794, %v1795, %v1791
        %v1797 = vadd.s32 %v1792, %v1796
        %v1798 = vadd.s32 %v1797, 536870912
        %v1799 = vshrl.u32 %v1798, 30
        %v1800 = vshll.u32 %v1799, 30
        %v1801 = vsub.s32 %v1797, %v1800
        %vm1802 = vcmp.lt.s32.totalorder %v1801, 0
        %v1803 = vsub.s32 0, %v1801
        %v1804 = vsel %vm1802, %v1803, %v1801
        %v1805 = vclz %v1804
        %v1806 = vsub.s32 %v1805, 2
        %vm1807 = vcmp.gt.s32.totalorder 0, %v1806
        %v1808 = vsel %vm1807, 0, %v1806
        %v1809 = vsub.s32 32, %v1808
        %v1810 = vshll.u32 %v1801, %v1808
        %v1811 = vshrl.u32 %v1793, %v1809
        %v1812 = vor.u32 %v1810, %v1811
        %v1813 = vsub.s32 4294967266, %v1808
        %v1814 = vadd.s32 %v1813, 127
        %v1815 = vshll.u32 %v1814, 23
        %v1816 = vor.u32 4788187, %v1815
        %v1817 = vand.u32 2147483647, %v1816
        %v1819 = vcvt.s32.f32 %v1812
        %v1820 = vmul.f32 %v1819, %v1817
        %v1821 = vxor.u32 %v1820, 2147483648
        %v1822 = vsel %vm1739, %v1821, %v1820
        %v1823 = vsub.s32 4, %v1799
        %v1824 = vsel %vm1739, %v1823, %v1799
        %v1825 = vsel %vm1738, %v1198, %v1822
        %v1826 = vsel %vm1738, 0, %v1824
        %v1827 = vcosq.f32.pop %v1825
        %v1828 = vsinq.f32.pop %v1825
        %vm1829 = vweird.f32 %v1198
        %v1830 = vadd.s32 %v1826, 3
        %v1831 = vand.u32 %v1830, 3
        %vm1832 = vcmp.lt.s32.totalorder %v1831, 2
        %vm1833 = vcmp.eq.s32.totalorder %v1831, 0
        %v1834 = vxor.u32 %v1828, 2147483648
        %v1835 = vsel %vm1833, %v1827, %v1834
        %vm1836 = vcmp.eq.s32.totalorder %v1831, 2
        %v1837 = vxor.u32 %v1827, 2147483648
        %v1838 = vsel %vm1836, %v1837, %v1828
        %v1839 = vsel %vm1832, %v1835, %v1838
        %v1840 = vsel %vm1829, nan, %v1839
        %v1841 = vand.u32 2147483647, %v1199
        %vm1842 = vcmp.le.f32.partialorder %v1841, 0.7853982
        %vm1843 = vcmp.lt.s32.totalorder %v1199, 0
        %v1844 = vand.u32 %v1199, 2139095040
        %v1845 = vshrl.u32 %v1844, 23
        %v1846 = vsub.s32 %v1845, 127
        %v1847 = vand.u32 2147483647, %v1199
        %v1848 = vand.u32 %v1847, 8388607
        %v1849 = vor.u32 %v1848, 8388608
        %v1850 = vsub.s32 0, %v1849
        %v1851 = vadd.s32 %v1846, 1
        %vm1852 = vcmp.gt.s32.totalorder %v1851, 0
        %v1853 = vsel %vm1852, %v1851, 0
        %v1854 = vshrl.u32 %v1853, 5
        %v1855 = vand.u32 %v1853, 31
        %v1856 = vsub.s32 32, %v1855
        %v1857 = vshrl.u32 683565275, %v1856
        %v1858 = vshll.u32 683565275, %v1855
        %v1859 = vshrl.u32 2475754826, %v1856
        %v1860 = vor.u32 %v1858, %v1859
        %v1861 = vshll.u32 2475754826, %v1855
        %v1862 = vshrl.u32 2131351028, %v1856
        %v1863 = vor.u32 %v1861, %v1862
        %v1864 = vshll.u32 2131351028, %v1855
        %v1865 = vshrl.u32 2102212464, %v1856
        %v1866 = vor.u32 %v1864, %v1865
        %v1867 = vshll.u32 2102212464, %v1855
        %v1868 = vshrl.u32 920167782, %v1856
        %v1869 = vor.u32 %v1867, %v1868
        %v1870 = vshll.u32 920167782, %v1855
        %v1871 = vshrl.u32 1326507024, %v1856
        %v1872 = vor.u32 %v1870, %v1871
        %vm1873 = vcmp.lt.s32.totalorder %v1854, 1
        %vm1874 = vcmp.lt.s32.totalorder %v1854, 2
        %vm1875 = vcmp.lt.s32.totalorder %v1854, 3
        %vm1876 = vcmp.lt.s32.totalorder %v1854, 4
        %v1877 = vsel %vm1873, %v1857, %v1860
        %v1878 = vsel %vm1876, %v1866, 2102212464
        %v1879 = vsel %vm1875, %v1863, %v1878
        %v1880 = vsel %vm1874, %v1877, %v1879
        %v1881 = vsel %vm1873, %v1860, %v1863
        %v1882 = vsel %vm1876, %v1869, 920167782
        %v1883 = vsel %vm1875, %v1866, %v1882
        %v1884 = vsel %vm1874, %v1881, %v1883
        %v1885 = vsel %vm1873, %v1863, %v1866
        %v1886 = vsel %vm1876, %v1872, 1326507024
        %v1887 = vsel %vm1875, %v1869, %v1886
        %v1888 = vsel %vm1874, %v1885, %v1887
        %v1889 = vshll.u32 %v1849, 8
        %v1890 = vmul.u32.u64.compose %v1889, %v1888
        %v1891 = vextract.low.u32 %v1890
        %v1892 = vextract.high.u32 %v1890
        %v1893 = vmul.u32.u64.compose %v1889, %v1884
        %v1894 = vextract.low.u32 %v1893
        %v1895 = vextract.high.u32 %v1893
        %v1896 = vmul.u32 %v1889, %v1880
        %v1897 = vadd.s32 %v1892, %v1894
        %vm1898 = vc.u32 %v1892, %v1894
        %v1899 = vadd.s32 %v1895, 1
        %v1900 = vsel %vm1898, %v1899, %v1895
        %v1901 = vadd.s32 %v1896, %v1900
        %v1902 = vadd.s32 %v1901, 536870912
        %v1903 = vshrl.u32 %v1902, 30
        %v1904 = vshll.u32 %v1903, 30
        %v1905 = vsub.s32 %v1901, %v1904
        %vm1906 = vcmp.lt.s32.totalorder %v1905, 0
        %v1907 = vsub.s32 0, %v1905
        %v1908 = vsel %vm1906, %v1907, %v1905
        %v1909 = vclz %v1908
        %v1910 = vsub.s32 %v1909, 2
        %vm1911 = vcmp.gt.s32.totalorder 0, %v1910
        %v1912 = vsel %vm1911, 0, %v1910
        %v1913 = vsub.s32 32, %v1912
        %v1914 = vshll.u32 %v1905, %v1912
        %v1915 = vshrl.u32 %v1897, %v1913
        %v1916 = vor.u32 %v1914, %v1915
        %v1917 = vsub.s32 4294967266, %v1912
        %v1918 = vadd.s32 %v1917, 127
        %v1919 = vshll.u32 %v1918, 23
        %v1920 = vor.u32 4788187, %v1919
        %v1921 = vand.u32 2147483647, %v1920
        %v1923 = vcvt.s32.f32 %v1916
        %v1924 = vmul.f32 %v1923, %v1921
        %v1925 = vxor.u32 %v1924, 2147483648
        %v1926 = vsel %vm1843, %v1925, %v1924
        %v1927 = vsub.s32 4, %v1903
        %v1928 = vsel %vm1843, %v1927, %v1903
        %v1929 = vsel %vm1842, %v1199, %v1926
        %v1930 = vsel %vm1842, 0, %v1928
        %v1931 = vcosq.f32.pop %v1929
        %v1932 = vsinq.f32.pop %v1929
        %vm1933 = vweird.f32 %v1199
        %v1934 = vadd.s32 %v1930, 3
        %v1935 = vand.u32 %v1934, 3
        %vm1936 = vcmp.lt.s32.totalorder %v1935, 2
        %vm1937 = vcmp.eq.s32.totalorder %v1935, 0
        %v1938 = vxor.u32 %v1932, 2147483648
        %v1939 = vsel %vm1937, %v1931, %v1938
        %vm1940 = vcmp.eq.s32.totalorder %v1935, 2
        %v1941 = vxor.u32 %v1931, 2147483648
        %v1942 = vsel %vm1940, %v1941, %v1932
        %v1943 = vsel %vm1936, %v1939, %v1942
        %v1944 = vsel %vm1933, nan, %v1943
        %v1945 = vand.u32 2147483647, %v1200
        %vm1946 = vcmp.le.f32.partialorder %v1945, 0.7853982
        %vm1947 = vcmp.lt.s32.totalorder %v1200, 0
        %v1948 = vand.u32 %v1200, 2139095040
        %v1949 = vshrl.u32 %v1948, 23
        %v1950 = vsub.s32 %v1949, 127
        %v1951 = vand.u32 2147483647, %v1200
        %v1952 = vand.u32 %v1951, 8388607
        %v1953 = vor.u32 %v1952, 8388608
        %v1954 = vsub.s32 0, %v1953
        %v1955 = vadd.s32 %v1950, 1
        %vm1956 = vcmp.gt.s32.totalorder %v1955, 0
        %v1957 = vsel %vm1956, %v1955, 0
        %v1958 = vshrl.u32 %v1957, 5
        %v1959 = vand.u32 %v1957, 31
        %v1960 = vsub.s32 32, %v1959
        %v1961 = vshrl.u32 683565275, %v1960
        %v1962 = vshll.u32 683565275, %v1959
        %v1963 = vshrl.u32 2475754826, %v1960
        %v1964 = vor.u32 %v1962, %v1963
        %v1965 = vshll.u32 2475754826, %v1959
        %v1966 = vshrl.u32 2131351028, %v1960
        %v1967 = vor.u32 %v1965, %v1966
        %v1968 = vshll.u32 2131351028, %v1959
        %v1969 = vshrl.u32 2102212464, %v1960
        %v1970 = vor.u32 %v1968, %v1969
        %v1971 = vshll.u32 2102212464, %v1959
        %v1972 = vshrl.u32 920167782, %v1960
        %v1973 = vor.u32 %v1971, %v1972
        %v1974 = vshll.u32 920167782, %v1959
        %v1975 = vshrl.u32 1326507024, %v1960
        %v1976 = vor.u32 %v1974, %v1975
        %vm1977 = vcmp.lt.s32.totalorder %v1958, 1
        %vm1978 = vcmp.lt.s32.totalorder %v1958, 2
        %vm1979 = vcmp.lt.s32.totalorder %v1958, 3
        %vm1980 = vcmp.lt.s32.totalorder %v1958, 4
        %v1981 = vsel %vm1977, %v1961, %v1964
        %v1982 = vsel %vm1980, %v1970, 2102212464
        %v1983 = vsel %vm1979, %v1967, %v1982
        %v1984 = vsel %vm1978, %v1981, %v1983
        %v1985 = vsel %vm1977, %v1964, %v1967
        %v1986 = vsel %vm1980, %v1973, 920167782
        %v1987 = vsel %vm1979, %v1970, %v1986
        %v1988 = vsel %vm1978, %v1985, %v1987
        %v1989 = vsel %vm1977, %v1967, %v1970
        %v1990 = vsel %vm1980, %v1976, 1326507024
        %v1991 = vsel %vm1979, %v1973, %v1990
        %v1992 = vsel %vm1978, %v1989, %v1991
        %v1993 = vshll.u32 %v1953, 8
        %v1994 = vmul.u32.u64.compose %v1993, %v1992
        %v1995 = vextract.low.u32 %v1994
        %v1996 = vextract.high.u32 %v1994
        %v1997 = vmul.u32.u64.compose %v1993, %v1988
        %v1998 = vextract.low.u32 %v1997
        %v1999 = vextract.high.u32 %v1997
        %v2000 = vmul.u32 %v1993, %v1984
        %v2001 = vadd.s32 %v1996, %v1998
        %vm2002 = vc.u32 %v1996, %v1998
        %v2003 = vadd.s32 %v1999, 1
        %v2004 = vsel %vm2002, %v2003, %v1999
        %v2005 = vadd.s32 %v2000, %v2004
        %v2006 = vadd.s32 %v2005, 536870912
        %v2007 = vshrl.u32 %v2006, 30
        %v2008 = vshll.u32 %v2007, 30
        %v2009 = vsub.s32 %v2005, %v2008
        %vm2010 = vcmp.lt.s32.totalorder %v2009, 0
        %v2011 = vsub.s32 0, %v2009
        %v2012 = vsel %vm2010, %v2011, %v2009
        %v2013 = vclz %v2012
        %v2014 = vsub.s32 %v2013, 2
        %vm2015 = vcmp.gt.s32.totalorder 0, %v2014
        %v2016 = vsel %vm2015, 0, %v2014
        %v2017 = vsub.s32 32, %v2016
        %v2018 = vshll.u32 %v2009, %v2016
        %v2019 = vshrl.u32 %v2001, %v2017
        %v2020 = vor.u32 %v2018, %v2019
        %v2021 = vsub.s32 4294967266, %v2016
        %v2022 = vadd.s32 %v2021, 127
        %v2023 = vshll.u32 %v2022, 23
        %v2024 = vor.u32 4788187, %v2023
        %v2025 = vand.u32 2147483647, %v2024
        %v2027 = vcvt.s32.f32 %v2020
        %v2028 = vmul.f32 %v2027, %v2025
        %v2029 = vxor.u32 %v2028, 2147483648
        %v2030 = vsel %vm1947, %v2029, %v2028
        %v2031 = vsub.s32 4, %v2007
        %v2032 = vsel %vm1947, %v2031, %v2007
        %v2033 = vsel %vm1946, %v1200, %v2030
        %v2034 = vsel %vm1946, 0, %v2032
        %v2035 = vcosq.f32.pop %v2033
        %v2036 = vsinq.f32.pop %v2033
        %vm2037 = vweird.f32 %v1200
        %v2038 = vadd.s32 %v2034, 3
        %v2039 = vand.u32 %v2038, 3
        %vm2040 = vcmp.lt.s32.totalorder %v2039, 2
        %vm2041 = vcmp.eq.s32.totalorder %v2039, 0
        %v2042 = vxor.u32 %v2036, 2147483648
        %v2043 = vsel %vm2041, %v2035, %v2042
        %vm2044 = vcmp.eq.s32.totalorder %v2039, 2
        %v2045 = vxor.u32 %v2035, 2147483648
        %v2046 = vsel %vm2044, %v2045, %v2036
        %v2047 = vsel %vm2040, %v2043, %v2046
        %v2048 = vsel %vm2037, nan, %v2047
        %v2049 = vand.u32 2147483647, %v1201
        %vm2050 = vcmp.le.f32.partialorder %v2049, 0.7853982
        %vm2051 = vcmp.lt.s32.totalorder %v1201, 0
        %v2052 = vand.u32 %v1201, 2139095040
        %v2053 = vshrl.u32 %v2052, 23
        %v2054 = vsub.s32 %v2053, 127
        %v2055 = vand.u32 2147483647, %v1201
        %v2056 = vand.u32 %v2055, 8388607
        %v2057 = vor.u32 %v2056, 8388608
        %v2058 = vsub.s32 0, %v2057
        %v2059 = vadd.s32 %v2054, 1
        %vm2060 = vcmp.gt.s32.totalorder %v2059, 0
        %v2061 = vsel %vm2060, %v2059, 0
        %v2062 = vshrl.u32 %v2061, 5
        %v2063 = vand.u32 %v2061, 31
        %v2064 = vsub.s32 32, %v2063
        %v2065 = vshrl.u32 683565275, %v2064
        %v2066 = vshll.u32 683565275, %v2063
        %v2067 = vshrl.u32 2475754826, %v2064
        %v2068 = vor.u32 %v2066, %v2067
        %v2069 = vshll.u32 2475754826, %v2063
        %v2070 = vshrl.u32 2131351028, %v2064
        %v2071 = vor.u32 %v2069, %v2070
        %v2072 = vshll.u32 2131351028, %v2063
        %v2073 = vshrl.u32 2102212464, %v2064
        %v2074 = vor.u32 %v2072, %v2073
        %v2075 = vshll.u32 2102212464, %v2063
        %v2076 = vshrl.u32 920167782, %v2064
        %v2077 = vor.u32 %v2075, %v2076
        %v2078 = vshll.u32 920167782, %v2063
        %v2079 = vshrl.u32 1326507024, %v2064
        %v2080 = vor.u32 %v2078, %v2079
        %vm2081 = vcmp.lt.s32.totalorder %v2062, 1
        %vm2082 = vcmp.lt.s32.totalorder %v2062, 2
        %vm2083 = vcmp.lt.s32.totalorder %v2062, 3
        %vm2084 = vcmp.lt.s32.totalorder %v2062, 4
        %v2085 = vsel %vm2081, %v2065, %v2068
        %v2086 = vsel %vm2084, %v2074, 2102212464
        %v2087 = vsel %vm2083, %v2071, %v2086
        %v2088 = vsel %vm2082, %v2085, %v2087
        %v2089 = vsel %vm2081, %v2068, %v2071
        %v2090 = vsel %vm2084, %v2077, 920167782
        %v2091 = vsel %vm2083, %v2074, %v2090
        %v2092 = vsel %vm2082, %v2089, %v2091
        %v2093 = vsel %vm2081, %v2071, %v2074
        %v2094 = vsel %vm2084, %v2080, 1326507024
        %v2095 = vsel %vm2083, %v2077, %v2094
        %v2096 = vsel %vm2082, %v2093, %v2095
        %v2097 = vshll.u32 %v2057, 8
        %v2098 = vmul.u32.u64.compose %v2097, %v2096
        %v2099 = vextract.low.u32 %v2098
        %v2100 = vextract.high.u32 %v2098
        %v2101 = vmul.u32.u64.compose %v2097, %v2092
        %v2102 = vextract.low.u32 %v2101
        %v2103 = vextract.high.u32 %v2101
        %v2104 = vmul.u32 %v2097, %v2088
        %v2105 = vadd.s32 %v2100, %v2102
        %vm2106 = vc.u32 %v2100, %v2102
        %v2107 = vadd.s32 %v2103, 1
        %v2108 = vsel %vm2106, %v2107, %v2103
        %v2109 = vadd.s32 %v2104, %v2108
        %v2110 = vadd.s32 %v2109, 536870912
        %v2111 = vshrl.u32 %v2110, 30
        %v2112 = vshll.u32 %v2111, 30
        %v2113 = vsub.s32 %v2109, %v2112
        %vm2114 = vcmp.lt.s32.totalorder %v2113, 0
        %v2115 = vsub.s32 0, %v2113
        %v2116 = vsel %vm2114, %v2115, %v2113
        %v2117 = vclz %v2116
        %v2118 = vsub.s32 %v2117, 2
        %vm2119 = vcmp.gt.s32.totalorder 0, %v2118
        %v2120 = vsel %vm2119, 0, %v2118
        %v2121 = vsub.s32 32, %v2120
        %v2122 = vshll.u32 %v2113, %v2120
        %v2123 = vshrl.u32 %v2105, %v2121
        %v2124 = vor.u32 %v2122, %v2123
        %v2125 = vsub.s32 4294967266, %v2120
        %v2126 = vadd.s32 %v2125, 127
        %v2127 = vshll.u32 %v2126, 23
        %v2128 = vor.u32 4788187, %v2127
        %v2129 = vand.u32 2147483647, %v2128
        %v2131 = vcvt.s32.f32 %v2124
        %v2132 = vmul.f32 %v2131, %v2129
        %v2133 = vxor.u32 %v2132, 2147483648
        %v2134 = vsel %vm2051, %v2133, %v2132
        %v2135 = vsub.s32 4, %v2111
        %v2136 = vsel %vm2051, %v2135, %v2111
        %v2137 = vsel %vm2050, %v1201, %v2134
        %v2138 = vsel %vm2050, 0, %v2136
        %v2139 = vcosq.f32.pop %v2137
        %v2140 = vsinq.f32.pop %v2137
        %vm2141 = vweird.f32 %v1201
        %v2142 = vadd.s32 %v2138, 3
        %v2143 = vand.u32 %v2142, 3
        %vm2144 = vcmp.lt.s32.totalorder %v2143, 2
        %vm2145 = vcmp.eq.s32.totalorder %v2143, 0
        %v2146 = vxor.u32 %v2140, 2147483648
        %v2147 = vsel %vm2145, %v2139, %v2146
        %vm2148 = vcmp.eq.s32.totalorder %v2143, 2
        %v2149 = vxor.u32 %v2139, 2147483648
        %v2150 = vsel %vm2148, %v2149, %v2140
        %v2151 = vsel %vm2144, %v2147, %v2150
        %v2152 = vsel %vm2141, nan, %v2151
        %v2153 = vand.u32 2147483647, %v1202
        %vm2154 = vcmp.le.f32.partialorder %v2153, 0.7853982
        %vm2155 = vcmp.lt.s32.totalorder %v1202, 0
        %v2156 = vand.u32 %v1202, 2139095040
        %v2157 = vshrl.u32 %v2156, 23
        %v2158 = vsub.s32 %v2157, 127
        %v2159 = vand.u32 2147483647, %v1202
        %v2160 = vand.u32 %v2159, 8388607
        %v2161 = vor.u32 %v2160, 8388608
        %v2162 = vsub.s32 0, %v2161
        %v2163 = vadd.s32 %v2158, 1
        %vm2164 = vcmp.gt.s32.totalorder %v2163, 0
        %v2165 = vsel %vm2164, %v2163, 0
        %v2166 = vshrl.u32 %v2165, 5
        %v2167 = vand.u32 %v2165, 31
        %v2168 = vsub.s32 32, %v2167
        %v2169 = vshrl.u32 683565275, %v2168
        %v2170 = vshll.u32 683565275, %v2167
        %v2171 = vshrl.u32 2475754826, %v2168
        %v2172 = vor.u32 %v2170, %v2171
        %v2173 = vshll.u32 2475754826, %v2167
        %v2174 = vshrl.u32 2131351028, %v2168
        %v2175 = vor.u32 %v2173, %v2174
        %v2176 = vshll.u32 2131351028, %v2167
        %v2177 = vshrl.u32 2102212464, %v2168
        %v2178 = vor.u32 %v2176, %v2177
        %v2179 = vshll.u32 2102212464, %v2167
        %v2180 = vshrl.u32 920167782, %v2168
        %v2181 = vor.u32 %v2179, %v2180
        %v2182 = vshll.u32 920167782, %v2167
        %v2183 = vshrl.u32 1326507024, %v2168
        %v2184 = vor.u32 %v2182, %v2183
        %vm2185 = vcmp.lt.s32.totalorder %v2166, 1
        %vm2186 = vcmp.lt.s32.totalorder %v2166, 2
        %vm2187 = vcmp.lt.s32.totalorder %v2166, 3
        %vm2188 = vcmp.lt.s32.totalorder %v2166, 4
        %v2189 = vsel %vm2185, %v2169, %v2172
        %v2190 = vsel %vm2188, %v2178, 2102212464
        %v2191 = vsel %vm2187, %v2175, %v2190
        %v2192 = vsel %vm2186, %v2189, %v2191
        %v2193 = vsel %vm2185, %v2172, %v2175
        %v2194 = vsel %vm2188, %v2181, 920167782
        %v2195 = vsel %vm2187, %v2178, %v2194
        %v2196 = vsel %vm2186, %v2193, %v2195
        %v2197 = vsel %vm2185, %v2175, %v2178
        %v2198 = vsel %vm2188, %v2184, 1326507024
        %v2199 = vsel %vm2187, %v2181, %v2198
        %v2200 = vsel %vm2186, %v2197, %v2199
        %v2201 = vshll.u32 %v2161, 8
        %v2202 = vmul.u32.u64.compose %v2201, %v2200
        %v2203 = vextract.low.u32 %v2202
        %v2204 = vextract.high.u32 %v2202
        %v2205 = vmul.u32.u64.compose %v2201, %v2196
        %v2206 = vextract.low.u32 %v2205
        %v2207 = vextract.high.u32 %v2205
        %v2208 = vmul.u32 %v2201, %v2192
        %v2209 = vadd.s32 %v2204, %v2206
        %vm2210 = vc.u32 %v2204, %v2206
        %v2211 = vadd.s32 %v2207, 1
        %v2212 = vsel %vm2210, %v2211, %v2207
        %v2213 = vadd.s32 %v2208, %v2212
        %v2214 = vadd.s32 %v2213, 536870912
        %v2215 = vshrl.u32 %v2214, 30
        %v2216 = vshll.u32 %v2215, 30
        %v2217 = vsub.s32 %v2213, %v2216
        %vm2218 = vcmp.lt.s32.totalorder %v2217, 0
        %v2219 = vsub.s32 0, %v2217
        %v2220 = vsel %vm2218, %v2219, %v2217
        %v2221 = vclz %v2220
        %v2222 = vsub.s32 %v2221, 2
        %vm2223 = vcmp.gt.s32.totalorder 0, %v2222
        %v2224 = vsel %vm2223, 0, %v2222
        %v2225 = vsub.s32 32, %v2224
        %v2226 = vshll.u32 %v2217, %v2224
        %v2227 = vshrl.u32 %v2209, %v2225
        %v2228 = vor.u32 %v2226, %v2227
        %v2229 = vsub.s32 4294967266, %v2224
        %v2230 = vadd.s32 %v2229, 127
        %v2231 = vshll.u32 %v2230, 23
        %v2232 = vor.u32 4788187, %v2231
        %v2233 = vand.u32 2147483647, %v2232
        %v2235 = vcvt.s32.f32 %v2228
        %v2236 = vmul.f32 %v2235, %v2233
        %v2237 = vxor.u32 %v2236, 2147483648
        %v2238 = vsel %vm2155, %v2237, %v2236
        %v2239 = vsub.s32 4, %v2215
        %v2240 = vsel %vm2155, %v2239, %v2215
        %v2241 = vsel %vm2154, %v1202, %v2238
        %v2242 = vsel %vm2154, 0, %v2240
        %v2243 = vcosq.f32.pop %v2241
        %v2244 = vsinq.f32.pop %v2241
        %vm2245 = vweird.f32 %v1202
        %v2246 = vadd.s32 %v2242, 3
        %v2247 = vand.u32 %v2246, 3
        %vm2248 = vcmp.lt.s32.totalorder %v2247, 2
        %vm2249 = vcmp.eq.s32.totalorder %v2247, 0
        %v2250 = vxor.u32 %v2244, 2147483648
        %v2251 = vsel %vm2249, %v2243, %v2250
        %vm2252 = vcmp.eq.s32.totalorder %v2247, 2
        %v2253 = vxor.u32 %v2243, 2147483648
        %v2254 = vsel %vm2252, %v2253, %v2244
        %v2255 = vsel %vm2248, %v2251, %v2254
        %v2256 = vsel %vm2245, nan, %v2255
        %v2257 = vand.u32 2147483647, %v1203
        %vm2258 = vcmp.le.f32.partialorder %v2257, 0.7853982
        %vm2259 = vcmp.lt.s32.totalorder %v1203, 0
        %v2260 = vand.u32 %v1203, 2139095040
        %v2261 = vshrl.u32 %v2260, 23
        %v2262 = vsub.s32 %v2261, 127
        %v2263 = vand.u32 2147483647, %v1203
        %v2264 = vand.u32 %v2263, 8388607
        %v2265 = vor.u32 %v2264, 8388608
        %v2266 = vsub.s32 0, %v2265
        %v2267 = vadd.s32 %v2262, 1
        %vm2268 = vcmp.gt.s32.totalorder %v2267, 0
        %v2269 = vsel %vm2268, %v2267, 0
        %v2270 = vshrl.u32 %v2269, 5
        %v2271 = vand.u32 %v2269, 31
        %v2272 = vsub.s32 32, %v2271
        %v2273 = vshrl.u32 683565275, %v2272
        %v2274 = vshll.u32 683565275, %v2271
        %v2275 = vshrl.u32 2475754826, %v2272
        %v2276 = vor.u32 %v2274, %v2275
        %v2277 = vshll.u32 2475754826, %v2271
        %v2278 = vshrl.u32 2131351028, %v2272
        %v2279 = vor.u32 %v2277, %v2278
        %v2280 = vshll.u32 2131351028, %v2271
        %v2281 = vshrl.u32 2102212464, %v2272
        %v2282 = vor.u32 %v2280, %v2281
        %v2283 = vshll.u32 2102212464, %v2271
        %v2284 = vshrl.u32 920167782, %v2272
        %v2285 = vor.u32 %v2283, %v2284
        %v2286 = vshll.u32 920167782, %v2271
        %v2287 = vshrl.u32 1326507024, %v2272
        %v2288 = vor.u32 %v2286, %v2287
        %vm2289 = vcmp.lt.s32.totalorder %v2270, 1
        %vm2290 = vcmp.lt.s32.totalorder %v2270, 2
        %vm2291 = vcmp.lt.s32.totalorder %v2270, 3
        %vm2292 = vcmp.lt.s32.totalorder %v2270, 4
        %v2293 = vsel %vm2289, %v2273, %v2276
        %v2294 = vsel %vm2292, %v2282, 2102212464
        %v2295 = vsel %vm2291, %v2279, %v2294
        %v2296 = vsel %vm2290, %v2293, %v2295
        %v2297 = vsel %vm2289, %v2276, %v2279
        %v2298 = vsel %vm2292, %v2285, 920167782
        %v2299 = vsel %vm2291, %v2282, %v2298
        %v2300 = vsel %vm2290, %v2297, %v2299
        %v2301 = vsel %vm2289, %v2279, %v2282
        %v2302 = vsel %vm2292, %v2288, 1326507024
        %v2303 = vsel %vm2291, %v2285, %v2302
        %v2304 = vsel %vm2290, %v2301, %v2303
        %v2305 = vshll.u32 %v2265, 8
        %v2306 = vmul.u32.u64.compose %v2305, %v2304
        %v2307 = vextract.low.u32 %v2306
        %v2308 = vextract.high.u32 %v2306
        %v2309 = vmul.u32.u64.compose %v2305, %v2300
        %v2310 = vextract.low.u32 %v2309
        %v2311 = vextract.high.u32 %v2309
        %v2312 = vmul.u32 %v2305, %v2296
        %v2313 = vadd.s32 %v2308, %v2310
        %vm2314 = vc.u32 %v2308, %v2310
        %v2315 = vadd.s32 %v2311, 1
        %v2316 = vsel %vm2314, %v2315, %v2311
        %v2317 = vadd.s32 %v2312, %v2316
        %v2318 = vadd.s32 %v2317, 536870912
        %v2319 = vshrl.u32 %v2318, 30
        %v2320 = vshll.u32 %v2319, 30
        %v2321 = vsub.s32 %v2317, %v2320
        %vm2322 = vcmp.lt.s32.totalorder %v2321, 0
        %v2323 = vsub.s32 0, %v2321
        %v2324 = vsel %vm2322, %v2323, %v2321
        %v2325 = vclz %v2324
        %v2326 = vsub.s32 %v2325, 2
        %vm2327 = vcmp.gt.s32.totalorder 0, %v2326
        %v2328 = vsel %vm2327, 0, %v2326
        %v2329 = vsub.s32 32, %v2328
        %v2330 = vshll.u32 %v2321, %v2328
        %v2331 = vshrl.u32 %v2313, %v2329
        %v2332 = vor.u32 %v2330, %v2331
        %v2333 = vsub.s32 4294967266, %v2328
        %v2334 = vadd.s32 %v2333, 127
        %v2335 = vshll.u32 %v2334, 23
        %v2336 = vor.u32 4788187, %v2335
        %v2337 = vand.u32 2147483647, %v2336
        %v2339 = vcvt.s32.f32 %v2332
        %v2340 = vmul.f32 %v2339, %v2337
        %v2341 = vxor.u32 %v2340, 2147483648
        %v2342 = vsel %vm2259, %v2341, %v2340
        %v2343 = vsub.s32 4, %v2319
        %v2344 = vsel %vm2259, %v2343, %v2319
        %v2345 = vsel %vm2258, %v1203, %v2342
        %v2346 = vsel %vm2258, 0, %v2344
        %v2347 = vcosq.f32.pop %v2345
        %v2348 = vsinq.f32.pop %v2345
        %vm2349 = vweird.f32 %v1203
        %v2350 = vadd.s32 %v2346, 3
        %v2351 = vand.u32 %v2350, 3
        %vm2352 = vcmp.lt.s32.totalorder %v2351, 2
        %vm2353 = vcmp.eq.s32.totalorder %v2351, 0
        %v2354 = vxor.u32 %v2348, 2147483648
        %v2355 = vsel %vm2353, %v2347, %v2354
        %vm2356 = vcmp.eq.s32.totalorder %v2351, 2
        %v2357 = vxor.u32 %v2347, 2147483648
        %v2358 = vsel %vm2356, %v2357, %v2348
        %v2359 = vsel %vm2352, %v2355, %v2358
        %v2360 = vsel %vm2349, nan, %v2359
        %v2361 = vand.u32 2147483647, %v1204
        %vm2362 = vcmp.le.f32.partialorder %v2361, 0.7853982
        %vm2363 = vcmp.lt.s32.totalorder %v1204, 0
        %v2364 = vand.u32 %v1204, 2139095040
        %v2365 = vshrl.u32 %v2364, 23
        %v2366 = vsub.s32 %v2365, 127
        %v2367 = vand.u32 2147483647, %v1204
        %v2368 = vand.u32 %v2367, 8388607
        %v2369 = vor.u32 %v2368, 8388608
        %v2370 = vsub.s32 0, %v2369
        %v2371 = vadd.s32 %v2366, 1
        %vm2372 = vcmp.gt.s32.totalorder %v2371, 0
        %v2373 = vsel %vm2372, %v2371, 0
        %v2374 = vshrl.u32 %v2373, 5
        %v2375 = vand.u32 %v2373, 31
        %v2376 = vsub.s32 32, %v2375
        %v2377 = vshrl.u32 683565275, %v2376
        %v2378 = vshll.u32 683565275, %v2375
        %v2379 = vshrl.u32 2475754826, %v2376
        %v2380 = vor.u32 %v2378, %v2379
        %v2381 = vshll.u32 2475754826, %v2375
        %v2382 = vshrl.u32 2131351028, %v2376
        %v2383 = vor.u32 %v2381, %v2382
        %v2384 = vshll.u32 2131351028, %v2375
        %v2385 = vshrl.u32 2102212464, %v2376
        %v2386 = vor.u32 %v2384, %v2385
        %v2387 = vshll.u32 2102212464, %v2375
        %v2388 = vshrl.u32 920167782, %v2376
        %v2389 = vor.u32 %v2387, %v2388
        %v2390 = vshll.u32 920167782, %v2375
        %v2391 = vshrl.u32 1326507024, %v2376
        %v2392 = vor.u32 %v2390, %v2391
        %vm2393 = vcmp.lt.s32.totalorder %v2374, 1
        %vm2394 = vcmp.lt.s32.totalorder %v2374, 2
        %vm2395 = vcmp.lt.s32.totalorder %v2374, 3
        %vm2396 = vcmp.lt.s32.totalorder %v2374, 4
        %v2397 = vsel %vm2393, %v2377, %v2380
        %v2398 = vsel %vm2396, %v2386, 2102212464
        %v2399 = vsel %vm2395, %v2383, %v2398
        %v2400 = vsel %vm2394, %v2397, %v2399
        %v2401 = vsel %vm2393, %v2380, %v2383
        %v2402 = vsel %vm2396, %v2389, 920167782
        %v2403 = vsel %vm2395, %v2386, %v2402
        %v2404 = vsel %vm2394, %v2401, %v2403
        %v2405 = vsel %vm2393, %v2383, %v2386
        %v2406 = vsel %vm2396, %v2392, 1326507024
        %v2407 = vsel %vm2395, %v2389, %v2406
        %v2408 = vsel %vm2394, %v2405, %v2407
        %v2409 = vshll.u32 %v2369, 8
        %v2410 = vmul.u32.u64.compose %v2409, %v2408
        %v2411 = vextract.low.u32 %v2410
        %v2412 = vextract.high.u32 %v2410
        %v2413 = vmul.u32.u64.compose %v2409, %v2404
        %v2414 = vextract.low.u32 %v2413
        %v2415 = vextract.high.u32 %v2413
        %v2416 = vmul.u32 %v2409, %v2400
        %v2417 = vadd.s32 %v2412, %v2414
        %vm2418 = vc.u32 %v2412, %v2414
        %v2419 = vadd.s32 %v2415, 1
        %v2420 = vsel %vm2418, %v2419, %v2415
        %v2421 = vadd.s32 %v2416, %v2420
        %v2422 = vadd.s32 %v2421, 536870912
        %v2423 = vshrl.u32 %v2422, 30
        %v2424 = vshll.u32 %v2423, 30
        %v2425 = vsub.s32 %v2421, %v2424
        %vm2426 = vcmp.lt.s32.totalorder %v2425, 0
        %v2427 = vsub.s32 0, %v2425
        %v2428 = vsel %vm2426, %v2427, %v2425
        %v2429 = vclz %v2428
        %v2430 = vsub.s32 %v2429, 2
        %vm2431 = vcmp.gt.s32.totalorder 0, %v2430
        %v2432 = vsel %vm2431, 0, %v2430
        %v2433 = vsub.s32 32, %v2432
        %v2434 = vshll.u32 %v2425, %v2432
        %v2435 = vshrl.u32 %v2417, %v2433
        %v2436 = vor.u32 %v2434, %v2435
        %v2437 = vsub.s32 4294967266, %v2432
        %v2438 = vadd.s32 %v2437, 127
        %v2439 = vshll.u32 %v2438, 23
        %v2440 = vor.u32 4788187, %v2439
        %v2441 = vand.u32 2147483647, %v2440
        %v2443 = vcvt.s32.f32 %v2436
        %v2444 = vmul.f32 %v2443, %v2441
        %v2445 = vxor.u32 %v2444, 2147483648
        %v2446 = vsel %vm2363, %v2445, %v2444
        %v2447 = vsub.s32 4, %v2423
        %v2448 = vsel %vm2363, %v2447, %v2423
        %v2449 = vsel %vm2362, %v1204, %v2446
        %v2450 = vsel %vm2362, 0, %v2448
        %v2451 = vcosq.f32.pop %v2449
        %v2452 = vsinq.f32.pop %v2449
        %vm2453 = vweird.f32 %v1204
        %v2454 = vadd.s32 %v2450, 3
        %v2455 = vand.u32 %v2454, 3
        %vm2456 = vcmp.lt.s32.totalorder %v2455, 2
        %vm2457 = vcmp.eq.s32.totalorder %v2455, 0
        %v2458 = vxor.u32 %v2452, 2147483648
        %v2459 = vsel %vm2457, %v2451, %v2458
        %vm2460 = vcmp.eq.s32.totalorder %v2455, 2
        %v2461 = vxor.u32 %v2451, 2147483648
        %v2462 = vsel %vm2460, %v2461, %v2452
        %v2463 = vsel %vm2456, %v2459, %v2462
        %v2464 = vsel %vm2453, nan, %v2463
        %v2465 = vand.u32 2147483647, %v1205
        %vm2466 = vcmp.le.f32.partialorder %v2465, 0.7853982
        %vm2467 = vcmp.lt.s32.totalorder %v1205, 0
        %v2468 = vand.u32 %v1205, 2139095040
        %v2469 = vshrl.u32 %v2468, 23
        %v2470 = vsub.s32 %v2469, 127
        %v2471 = vand.u32 2147483647, %v1205
        %v2472 = vand.u32 %v2471, 8388607
        %v2473 = vor.u32 %v2472, 8388608
        %v2474 = vsub.s32 0, %v2473
        %v2475 = vadd.s32 %v2470, 1
        %vm2476 = vcmp.gt.s32.totalorder %v2475, 0
        %v2477 = vsel %vm2476, %v2475, 0
        %v2478 = vshrl.u32 %v2477, 5
        %v2479 = vand.u32 %v2477, 31
        %v2480 = vsub.s32 32, %v2479
        %v2481 = vshrl.u32 683565275, %v2480
        %v2482 = vshll.u32 683565275, %v2479
        %v2483 = vshrl.u32 2475754826, %v2480
        %v2484 = vor.u32 %v2482, %v2483
        %v2485 = vshll.u32 2475754826, %v2479
        %v2486 = vshrl.u32 2131351028, %v2480
        %v2487 = vor.u32 %v2485, %v2486
        %v2488 = vshll.u32 2131351028, %v2479
        %v2489 = vshrl.u32 2102212464, %v2480
        %v2490 = vor.u32 %v2488, %v2489
        %v2491 = vshll.u32 2102212464, %v2479
        %v2492 = vshrl.u32 920167782, %v2480
        %v2493 = vor.u32 %v2491, %v2492
        %v2494 = vshll.u32 920167782, %v2479
        %v2495 = vshrl.u32 1326507024, %v2480
        %v2496 = vor.u32 %v2494, %v2495
        %vm2497 = vcmp.lt.s32.totalorder %v2478, 1
        %vm2498 = vcmp.lt.s32.totalorder %v2478, 2
        %vm2499 = vcmp.lt.s32.totalorder %v2478, 3
        %vm2500 = vcmp.lt.s32.totalorder %v2478, 4
        %v2501 = vsel %vm2497, %v2481, %v2484
        %v2502 = vsel %vm2500, %v2490, 2102212464
        %v2503 = vsel %vm2499, %v2487, %v2502
        %v2504 = vsel %vm2498, %v2501, %v2503
        %v2505 = vsel %vm2497, %v2484, %v2487
        %v2506 = vsel %vm2500, %v2493, 920167782
        %v2507 = vsel %vm2499, %v2490, %v2506
        %v2508 = vsel %vm2498, %v2505, %v2507
        %v2509 = vsel %vm2497, %v2487, %v2490
        %v2510 = vsel %vm2500, %v2496, 1326507024
        %v2511 = vsel %vm2499, %v2493, %v2510
        %v2512 = vsel %vm2498, %v2509, %v2511
        %v2513 = vshll.u32 %v2473, 8
        %v2514 = vmul.u32.u64.compose %v2513, %v2512
        %v2515 = vextract.low.u32 %v2514
        %v2516 = vextract.high.u32 %v2514
        %v2517 = vmul.u32.u64.compose %v2513, %v2508
        %v2518 = vextract.low.u32 %v2517
        %v2519 = vextract.high.u32 %v2517
        %v2520 = vmul.u32 %v2513, %v2504
        %v2521 = vadd.s32 %v2516, %v2518
        %vm2522 = vc.u32 %v2516, %v2518
        %v2523 = vadd.s32 %v2519, 1
        %v2524 = vsel %vm2522, %v2523, %v2519
        %v2525 = vadd.s32 %v2520, %v2524
        %v2526 = vadd.s32 %v2525, 536870912
        %v2527 = vshrl.u32 %v2526, 30
        %v2528 = vshll.u32 %v2527, 30
        %v2529 = vsub.s32 %v2525, %v2528
        %vm2530 = vcmp.lt.s32.totalorder %v2529, 0
        %v2531 = vsub.s32 0, %v2529
        %v2532 = vsel %vm2530, %v2531, %v2529
        %v2533 = vclz %v2532
        %v2534 = vsub.s32 %v2533, 2
        %vm2535 = vcmp.gt.s32.totalorder 0, %v2534
        %v2536 = vsel %vm2535, 0, %v2534
        %v2537 = vsub.s32 32, %v2536
        %v2538 = vshll.u32 %v2529, %v2536
        %v2539 = vshrl.u32 %v2521, %v2537
        %v2540 = vor.u32 %v2538, %v2539
        %v2541 = vsub.s32 4294967266, %v2536
        %v2542 = vadd.s32 %v2541, 127
        %v2543 = vshll.u32 %v2542, 23
        %v2544 = vor.u32 4788187, %v2543
        %v2545 = vand.u32 2147483647, %v2544
        %v2547 = vcvt.s32.f32 %v2540
        %v2548 = vmul.f32 %v2547, %v2545
        %v2549 = vxor.u32 %v2548, 2147483648
        %v2550 = vsel %vm2467, %v2549, %v2548
        %v2551 = vsub.s32 4, %v2527
        %v2552 = vsel %vm2467, %v2551, %v2527
        %v2553 = vsel %vm2466, %v1205, %v2550
        %v2554 = vsel %vm2466, 0, %v2552
        %v2555 = vcosq.f32.pop %v2553
        %v2556 = vsinq.f32.pop %v2553
        %vm2557 = vweird.f32 %v1205
        %v2558 = vadd.s32 %v2554, 3
        %v2559 = vand.u32 %v2558, 3
        %vm2560 = vcmp.lt.s32.totalorder %v2559, 2
        %vm2561 = vcmp.eq.s32.totalorder %v2559, 0
        %v2562 = vxor.u32 %v2556, 2147483648
        %v2563 = vsel %vm2561, %v2555, %v2562
        %vm2564 = vcmp.eq.s32.totalorder %v2559, 2
        %v2565 = vxor.u32 %v2555, 2147483648
        %v2566 = vsel %vm2564, %v2565, %v2556
        %v2567 = vsel %vm2560, %v2563, %v2566
        %v2568 = vsel %vm2557, nan, %v2567
        %v2569 = vand.u32 2147483647, %v1206
        %vm2570 = vcmp.le.f32.partialorder %v2569, 0.7853982
        %vm2571 = vcmp.lt.s32.totalorder %v1206, 0
        %v2572 = vand.u32 %v1206, 2139095040
        %v2573 = vshrl.u32 %v2572, 23
        %v2574 = vsub.s32 %v2573, 127
        %v2575 = vand.u32 2147483647, %v1206
        %v2576 = vand.u32 %v2575, 8388607
        %v2577 = vor.u32 %v2576, 8388608
        %v2578 = vsub.s32 0, %v2577
        %v2579 = vadd.s32 %v2574, 1
        %vm2580 = vcmp.gt.s32.totalorder %v2579, 0
        %v2581 = vsel %vm2580, %v2579, 0
        %v2582 = vshrl.u32 %v2581, 5
        %v2583 = vand.u32 %v2581, 31
        %v2584 = vsub.s32 32, %v2583
        %v2585 = vshrl.u32 683565275, %v2584
        %v2586 = vshll.u32 683565275, %v2583
        %v2587 = vshrl.u32 2475754826, %v2584
        %v2588 = vor.u32 %v2586, %v2587
        %v2589 = vshll.u32 2475754826, %v2583
        %v2590 = vshrl.u32 2131351028, %v2584
        %v2591 = vor.u32 %v2589, %v2590
        %v2592 = vshll.u32 2131351028, %v2583
        %v2593 = vshrl.u32 2102212464, %v2584
        %v2594 = vor.u32 %v2592, %v2593
        %v2595 = vshll.u32 2102212464, %v2583
        %v2596 = vshrl.u32 920167782, %v2584
        %v2597 = vor.u32 %v2595, %v2596
        %v2598 = vshll.u32 920167782, %v2583
        %v2599 = vshrl.u32 1326507024, %v2584
        %v2600 = vor.u32 %v2598, %v2599
        %vm2601 = vcmp.lt.s32.totalorder %v2582, 1
        %vm2602 = vcmp.lt.s32.totalorder %v2582, 2
        %vm2603 = vcmp.lt.s32.totalorder %v2582, 3
        %vm2604 = vcmp.lt.s32.totalorder %v2582, 4
        %v2605 = vsel %vm2601, %v2585, %v2588
        %v2606 = vsel %vm2604, %v2594, 2102212464
        %v2607 = vsel %vm2603, %v2591, %v2606
        %v2608 = vsel %vm2602, %v2605, %v2607
        %v2609 = vsel %vm2601, %v2588, %v2591
        %v2610 = vsel %vm2604, %v2597, 920167782
        %v2611 = vsel %vm2603, %v2594, %v2610
        %v2612 = vsel %vm2602, %v2609, %v2611
        %v2613 = vsel %vm2601, %v2591, %v2594
        %v2614 = vsel %vm2604, %v2600, 1326507024
        %v2615 = vsel %vm2603, %v2597, %v2614
        %v2616 = vsel %vm2602, %v2613, %v2615
        %v2617 = vshll.u32 %v2577, 8
        %v2618 = vmul.u32.u64.compose %v2617, %v2616
        %v2619 = vextract.low.u32 %v2618
        %v2620 = vextract.high.u32 %v2618
        %v2621 = vmul.u32.u64.compose %v2617, %v2612
        %v2622 = vextract.low.u32 %v2621
        %v2623 = vextract.high.u32 %v2621
        %v2624 = vmul.u32 %v2617, %v2608
        %v2625 = vadd.s32 %v2620, %v2622
        %vm2626 = vc.u32 %v2620, %v2622
        %v2627 = vadd.s32 %v2623, 1
        %v2628 = vsel %vm2626, %v2627, %v2623
        %v2629 = vadd.s32 %v2624, %v2628
        %v2630 = vadd.s32 %v2629, 536870912
        %v2631 = vshrl.u32 %v2630, 30
        %v2632 = vshll.u32 %v2631, 30
        %v2633 = vsub.s32 %v2629, %v2632
        %vm2634 = vcmp.lt.s32.totalorder %v2633, 0
        %v2635 = vsub.s32 0, %v2633
        %v2636 = vsel %vm2634, %v2635, %v2633
        %v2637 = vclz %v2636
        %v2638 = vsub.s32 %v2637, 2
        %vm2639 = vcmp.gt.s32.totalorder 0, %v2638
        %v2640 = vsel %vm2639, 0, %v2638
        %v2641 = vsub.s32 32, %v2640
        %v2642 = vshll.u32 %v2633, %v2640
        %v2643 = vshrl.u32 %v2625, %v2641
        %v2644 = vor.u32 %v2642, %v2643
        %v2645 = vsub.s32 4294967266, %v2640
        %v2646 = vadd.s32 %v2645, 127
        %v2647 = vshll.u32 %v2646, 23
        %v2648 = vor.u32 4788187, %v2647
        %v2649 = vand.u32 2147483647, %v2648
        %v2651 = vcvt.s32.f32 %v2644
        %v2652 = vmul.f32 %v2651, %v2649
        %v2653 = vxor.u32 %v2652, 2147483648
        %v2654 = vsel %vm2571, %v2653, %v2652
        %v2655 = vsub.s32 4, %v2631
        %v2656 = vsel %vm2571, %v2655, %v2631
        %v2657 = vsel %vm2570, %v1206, %v2654
        %v2658 = vsel %vm2570, 0, %v2656
        %v2659 = vcosq.f32.pop %v2657
        %v2660 = vsinq.f32.pop %v2657
        %vm2661 = vweird.f32 %v1206
        %v2662 = vadd.s32 %v2658, 3
        %v2663 = vand.u32 %v2662, 3
        %vm2664 = vcmp.lt.s32.totalorder %v2663, 2
        %vm2665 = vcmp.eq.s32.totalorder %v2663, 0
        %v2666 = vxor.u32 %v2660, 2147483648
        %v2667 = vsel %vm2665, %v2659, %v2666
        %vm2668 = vcmp.eq.s32.totalorder %v2663, 2
        %v2669 = vxor.u32 %v2659, 2147483648
        %v2670 = vsel %vm2668, %v2669, %v2660
        %v2671 = vsel %vm2664, %v2667, %v2670
        %v2672 = vsel %vm2661, nan, %v2671
        %v2673 = vand.u32 2147483647, %v1207
        %vm2674 = vcmp.le.f32.partialorder %v2673, 0.7853982
        %vm2675 = vcmp.lt.s32.totalorder %v1207, 0
        %v2676 = vand.u32 %v1207, 2139095040
        %v2677 = vshrl.u32 %v2676, 23
        %v2678 = vsub.s32 %v2677, 127
        %v2679 = vand.u32 2147483647, %v1207
        %v2680 = vand.u32 %v2679, 8388607
        %v2681 = vor.u32 %v2680, 8388608
        %v2682 = vsub.s32 0, %v2681
        %v2683 = vadd.s32 %v2678, 1
        %vm2684 = vcmp.gt.s32.totalorder %v2683, 0
        %v2685 = vsel %vm2684, %v2683, 0
        %v2686 = vshrl.u32 %v2685, 5
        %v2687 = vand.u32 %v2685, 31
        %v2688 = vsub.s32 32, %v2687
        %v2689 = vshrl.u32 683565275, %v2688
        %v2690 = vshll.u32 683565275, %v2687
        %v2691 = vshrl.u32 2475754826, %v2688
        %v2692 = vor.u32 %v2690, %v2691
        %v2693 = vshll.u32 2475754826, %v2687
        %v2694 = vshrl.u32 2131351028, %v2688
        %v2695 = vor.u32 %v2693, %v2694
        %v2696 = vshll.u32 2131351028, %v2687
        %v2697 = vshrl.u32 2102212464, %v2688
        %v2698 = vor.u32 %v2696, %v2697
        %v2699 = vshll.u32 2102212464, %v2687
        %v2700 = vshrl.u32 920167782, %v2688
        %v2701 = vor.u32 %v2699, %v2700
        %v2702 = vshll.u32 920167782, %v2687
        %v2703 = vshrl.u32 1326507024, %v2688
        %v2704 = vor.u32 %v2702, %v2703
        %vm2705 = vcmp.lt.s32.totalorder %v2686, 1
        %vm2706 = vcmp.lt.s32.totalorder %v2686, 2
        %vm2707 = vcmp.lt.s32.totalorder %v2686, 3
        %vm2708 = vcmp.lt.s32.totalorder %v2686, 4
        %v2709 = vsel %vm2705, %v2689, %v2692
        %v2710 = vsel %vm2708, %v2698, 2102212464
        %v2711 = vsel %vm2707, %v2695, %v2710
        %v2712 = vsel %vm2706, %v2709, %v2711
        %v2713 = vsel %vm2705, %v2692, %v2695
        %v2714 = vsel %vm2708, %v2701, 920167782
        %v2715 = vsel %vm2707, %v2698, %v2714
        %v2716 = vsel %vm2706, %v2713, %v2715
        %v2717 = vsel %vm2705, %v2695, %v2698
        %v2718 = vsel %vm2708, %v2704, 1326507024
        %v2719 = vsel %vm2707, %v2701, %v2718
        %v2720 = vsel %vm2706, %v2717, %v2719
        %v2721 = vshll.u32 %v2681, 8
        %v2722 = vmul.u32.u64.compose %v2721, %v2720
        %v2723 = vextract.low.u32 %v2722
        %v2724 = vextract.high.u32 %v2722
        %v2725 = vmul.u32.u64.compose %v2721, %v2716
        %v2726 = vextract.low.u32 %v2725
        %v2727 = vextract.high.u32 %v2725
        %v2728 = vmul.u32 %v2721, %v2712
        %v2729 = vadd.s32 %v2724, %v2726
        %vm2730 = vc.u32 %v2724, %v2726
        %v2731 = vadd.s32 %v2727, 1
        %v2732 = vsel %vm2730, %v2731, %v2727
        %v2733 = vadd.s32 %v2728, %v2732
        %v2734 = vadd.s32 %v2733, 536870912
        %v2735 = vshrl.u32 %v2734, 30
        %v2736 = vshll.u32 %v2735, 30
        %v2737 = vsub.s32 %v2733, %v2736
        %vm2738 = vcmp.lt.s32.totalorder %v2737, 0
        %v2739 = vsub.s32 0, %v2737
        %v2740 = vsel %vm2738, %v2739, %v2737
        %v2741 = vclz %v2740
        %v2742 = vsub.s32 %v2741, 2
        %vm2743 = vcmp.gt.s32.totalorder 0, %v2742
        %v2744 = vsel %vm2743, 0, %v2742
        %v2745 = vsub.s32 32, %v2744
        %v2746 = vshll.u32 %v2737, %v2744
        %v2747 = vshrl.u32 %v2729, %v2745
        %v2748 = vor.u32 %v2746, %v2747
        %v2749 = vsub.s32 4294967266, %v2744
        %v2750 = vadd.s32 %v2749, 127
        %v2751 = vshll.u32 %v2750, 23
        %v2752 = vor.u32 4788187, %v2751
        %v2753 = vand.u32 2147483647, %v2752
        %v2755 = vcvt.s32.f32 %v2748
        %v2756 = vmul.f32 %v2755, %v2753
        %v2757 = vxor.u32 %v2756, 2147483648
        %v2758 = vsel %vm2675, %v2757, %v2756
        %v2759 = vsub.s32 4, %v2735
        %v2760 = vsel %vm2675, %v2759, %v2735
        %v2761 = vsel %vm2674, %v1207, %v2758
        %v2762 = vsel %vm2674, 0, %v2760
        %v2763 = vcosq.f32.pop %v2761
        %v2764 = vsinq.f32.pop %v2761
        %vm2765 = vweird.f32 %v1207
        %v2766 = vadd.s32 %v2762, 3
        %v2767 = vand.u32 %v2766, 3
        %vm2768 = vcmp.lt.s32.totalorder %v2767, 2
        %vm2769 = vcmp.eq.s32.totalorder %v2767, 0
        %v2770 = vxor.u32 %v2764, 2147483648
        %v2771 = vsel %vm2769, %v2763, %v2770
        %vm2772 = vcmp.eq.s32.totalorder %v2767, 2
        %v2773 = vxor.u32 %v2763, 2147483648
        %v2774 = vsel %vm2772, %v2773, %v2764
        %v2775 = vsel %vm2768, %v2771, %v2774
        %v2776 = vsel %vm2765, nan, %v2775
        %v2777 = vand.u32 2147483647, %v1208
        %vm2778 = vcmp.le.f32.partialorder %v2777, 0.7853982
        %vm2779 = vcmp.lt.s32.totalorder %v1208, 0
        %v2780 = vand.u32 %v1208, 2139095040
        %v2781 = vshrl.u32 %v2780, 23
        %v2782 = vsub.s32 %v2781, 127
        %v2783 = vand.u32 2147483647, %v1208
        %v2784 = vand.u32 %v2783, 8388607
        %v2785 = vor.u32 %v2784, 8388608
        %v2786 = vsub.s32 0, %v2785
        %v2787 = vadd.s32 %v2782, 1
        %vm2788 = vcmp.gt.s32.totalorder %v2787, 0
        %v2789 = vsel %vm2788, %v2787, 0
        %v2790 = vshrl.u32 %v2789, 5
        %v2791 = vand.u32 %v2789, 31
        %v2792 = vsub.s32 32, %v2791
        %v2793 = vshrl.u32 683565275, %v2792
        %v2794 = vshll.u32 683565275, %v2791
        %v2795 = vshrl.u32 2475754826, %v2792
        %v2796 = vor.u32 %v2794, %v2795
        %v2797 = vshll.u32 2475754826, %v2791
        %v2798 = vshrl.u32 2131351028, %v2792
        %v2799 = vor.u32 %v2797, %v2798
        %v2800 = vshll.u32 2131351028, %v2791
        %v2801 = vshrl.u32 2102212464, %v2792
        %v2802 = vor.u32 %v2800, %v2801
        %v2803 = vshll.u32 2102212464, %v2791
        %v2804 = vshrl.u32 920167782, %v2792
        %v2805 = vor.u32 %v2803, %v2804
        %v2806 = vshll.u32 920167782, %v2791
        %v2807 = vshrl.u32 1326507024, %v2792
        %v2808 = vor.u32 %v2806, %v2807
        %vm2809 = vcmp.lt.s32.totalorder %v2790, 1
        %vm2810 = vcmp.lt.s32.totalorder %v2790, 2
        %vm2811 = vcmp.lt.s32.totalorder %v2790, 3
        %vm2812 = vcmp.lt.s32.totalorder %v2790, 4
        %v2813 = vsel %vm2809, %v2793, %v2796
        %v2814 = vsel %vm2812, %v2802, 2102212464
        %v2815 = vsel %vm2811, %v2799, %v2814
        %v2816 = vsel %vm2810, %v2813, %v2815
        %v2817 = vsel %vm2809, %v2796, %v2799
        %v2818 = vsel %vm2812, %v2805, 920167782
        %v2819 = vsel %vm2811, %v2802, %v2818
        %v2820 = vsel %vm2810, %v2817, %v2819
        %v2821 = vsel %vm2809, %v2799, %v2802
        %v2822 = vsel %vm2812, %v2808, 1326507024
        %v2823 = vsel %vm2811, %v2805, %v2822
        %v2824 = vsel %vm2810, %v2821, %v2823
        %v2825 = vshll.u32 %v2785, 8
        %v2826 = vmul.u32.u64.compose %v2825, %v2824
        %v2827 = vextract.low.u32 %v2826
        %v2828 = vextract.high.u32 %v2826
        %v2829 = vmul.u32.u64.compose %v2825, %v2820
        %v2830 = vextract.low.u32 %v2829
        %v2831 = vextract.high.u32 %v2829
        %v2832 = vmul.u32 %v2825, %v2816
        %v2833 = vadd.s32 %v2828, %v2830
        %vm2834 = vc.u32 %v2828, %v2830
        %v2835 = vadd.s32 %v2831, 1
        %v2836 = vsel %vm2834, %v2835, %v2831
        %v2837 = vadd.s32 %v2832, %v2836
        %v2838 = vadd.s32 %v2837, 536870912
        %v2839 = vshrl.u32 %v2838, 30
        %v2840 = vshll.u32 %v2839, 30
        %v2841 = vsub.s32 %v2837, %v2840
        %vm2842 = vcmp.lt.s32.totalorder %v2841, 0
        %v2843 = vsub.s32 0, %v2841
        %v2844 = vsel %vm2842, %v2843, %v2841
        %v2845 = vclz %v2844
        %v2846 = vsub.s32 %v2845, 2
        %vm2847 = vcmp.gt.s32.totalorder 0, %v2846
        %v2848 = vsel %vm2847, 0, %v2846
        %v2849 = vsub.s32 32, %v2848
        %v2850 = vshll.u32 %v2841, %v2848
        %v2851 = vshrl.u32 %v2833, %v2849
        %v2852 = vor.u32 %v2850, %v2851
        %v2853 = vsub.s32 4294967266, %v2848
        %v2854 = vadd.s32 %v2853, 127
        %v2855 = vshll.u32 %v2854, 23
        %v2856 = vor.u32 4788187, %v2855
        %v2857 = vand.u32 2147483647, %v2856
        %v2859 = vcvt.s32.f32 %v2852
        %v2860 = vmul.f32 %v2859, %v2857
        %v2861 = vxor.u32 %v2860, 2147483648
        %v2862 = vsel %vm2779, %v2861, %v2860
        %v2863 = vsub.s32 4, %v2839
        %v2864 = vsel %vm2779, %v2863, %v2839
        %v2865 = vsel %vm2778, %v1208, %v2862
        %v2866 = vsel %vm2778, 0, %v2864
        %v2867 = vcosq.f32.pop %v2865
        %v2868 = vsinq.f32.pop %v2865
        %vm2869 = vweird.f32 %v1208
        %v2870 = vadd.s32 %v2866, 3
        %v2871 = vand.u32 %v2870, 3
        %vm2872 = vcmp.lt.s32.totalorder %v2871, 2
        %vm2873 = vcmp.eq.s32.totalorder %v2871, 0
        %v2874 = vxor.u32 %v2868, 2147483648
        %v2875 = vsel %vm2873, %v2867, %v2874
        %vm2876 = vcmp.eq.s32.totalorder %v2871, 2
        %v2877 = vxor.u32 %v2867, 2147483648
        %v2878 = vsel %vm2876, %v2877, %v2868
        %v2879 = vsel %vm2872, %v2875, %v2878
        %v2880 = vsel %vm2869, nan, %v2879
        %v2881 = vand.u32 2147483647, %v1209
        %vm2882 = vcmp.le.f32.partialorder %v2881, 0.7853982
        %vm2883 = vcmp.lt.s32.totalorder %v1209, 0
        %v2884 = vand.u32 %v1209, 2139095040
        %v2885 = vshrl.u32 %v2884, 23
        %v2886 = vsub.s32 %v2885, 127
        %v2887 = vand.u32 2147483647, %v1209
        %v2888 = vand.u32 %v2887, 8388607
        %v2889 = vor.u32 %v2888, 8388608
        %v2890 = vsub.s32 0, %v2889
        %v2891 = vadd.s32 %v2886, 1
        %vm2892 = vcmp.gt.s32.totalorder %v2891, 0
        %v2893 = vsel %vm2892, %v2891, 0
        %v2894 = vshrl.u32 %v2893, 5
        %v2895 = vand.u32 %v2893, 31
        %v2896 = vsub.s32 32, %v2895
        %v2897 = vshrl.u32 683565275, %v2896
        %v2898 = vshll.u32 683565275, %v2895
        %v2899 = vshrl.u32 2475754826, %v2896
        %v2900 = vor.u32 %v2898, %v2899
        %v2901 = vshll.u32 2475754826, %v2895
        %v2902 = vshrl.u32 2131351028, %v2896
        %v2903 = vor.u32 %v2901, %v2902
        %v2904 = vshll.u32 2131351028, %v2895
        %v2905 = vshrl.u32 2102212464, %v2896
        %v2906 = vor.u32 %v2904, %v2905
        %v2907 = vshll.u32 2102212464, %v2895
        %v2908 = vshrl.u32 920167782, %v2896
        %v2909 = vor.u32 %v2907, %v2908
        %v2910 = vshll.u32 920167782, %v2895
        %v2911 = vshrl.u32 1326507024, %v2896
        %v2912 = vor.u32 %v2910, %v2911
        %vm2913 = vcmp.lt.s32.totalorder %v2894, 1
        %vm2914 = vcmp.lt.s32.totalorder %v2894, 2
        %vm2915 = vcmp.lt.s32.totalorder %v2894, 3
        %vm2916 = vcmp.lt.s32.totalorder %v2894, 4
        %v2917 = vsel %vm2913, %v2897, %v2900
        %v2918 = vsel %vm2916, %v2906, 2102212464
        %v2919 = vsel %vm2915, %v2903, %v2918
        %v2920 = vsel %vm2914, %v2917, %v2919
        %v2921 = vsel %vm2913, %v2900, %v2903
        %v2922 = vsel %vm2916, %v2909, 920167782
        %v2923 = vsel %vm2915, %v2906, %v2922
        %v2924 = vsel %vm2914, %v2921, %v2923
        %v2925 = vsel %vm2913, %v2903, %v2906
        %v2926 = vsel %vm2916, %v2912, 1326507024
        %v2927 = vsel %vm2915, %v2909, %v2926
        %v2928 = vsel %vm2914, %v2925, %v2927
        %v2929 = vshll.u32 %v2889, 8
        %v2930 = vmul.u32.u64.compose %v2929, %v2928
        %v2931 = vextract.low.u32 %v2930
        %v2932 = vextract.high.u32 %v2930
        %v2933 = vmul.u32.u64.compose %v2929, %v2924
        %v2934 = vextract.low.u32 %v2933
        %v2935 = vextract.high.u32 %v2933
        %v2936 = vmul.u32 %v2929, %v2920
        %v2937 = vadd.s32 %v2932, %v2934
        %vm2938 = vc.u32 %v2932, %v2934
        %v2939 = vadd.s32 %v2935, 1
        %v2940 = vsel %vm2938, %v2939, %v2935
        %v2941 = vadd.s32 %v2936, %v2940
        %v2942 = vadd.s32 %v2941, 536870912
        %v2943 = vshrl.u32 %v2942, 30
        %v2944 = vshll.u32 %v2943, 30
        %v2945 = vsub.s32 %v2941, %v2944
        %vm2946 = vcmp.lt.s32.totalorder %v2945, 0
        %v2947 = vsub.s32 0, %v2945
        %v2948 = vsel %vm2946, %v2947, %v2945
        %v2949 = vclz %v2948
        %v2950 = vsub.s32 %v2949, 2
        %vm2951 = vcmp.gt.s32.totalorder 0, %v2950
        %v2952 = vsel %vm2951, 0, %v2950
        %v2953 = vsub.s32 32, %v2952
        %v2954 = vshll.u32 %v2945, %v2952
        %v2955 = vshrl.u32 %v2937, %v2953
        %v2956 = vor.u32 %v2954, %v2955
        %v2957 = vsub.s32 4294967266, %v2952
        %v2958 = vadd.s32 %v2957, 127
        %v2959 = vshll.u32 %v2958, 23
        %v2960 = vor.u32 4788187, %v2959
        %v2961 = vand.u32 2147483647, %v2960
        %v2963 = vcvt.s32.f32 %v2956
        %v2964 = vmul.f32 %v2963, %v2961
        %v2965 = vxor.u32 %v2964, 2147483648
        %v2966 = vsel %vm2883, %v2965, %v2964
        %v2967 = vsub.s32 4, %v2943
        %v2968 = vsel %vm2883, %v2967, %v2943
        %v2969 = vsel %vm2882, %v1209, %v2966
        %v2970 = vsel %vm2882, 0, %v2968
        %v2971 = vcosq.f32.pop %v2969
        %v2972 = vsinq.f32.pop %v2969
        %vm2973 = vweird.f32 %v1209
        %v2974 = vadd.s32 %v2970, 3
        %v2975 = vand.u32 %v2974, 3
        %vm2976 = vcmp.lt.s32.totalorder %v2975, 2
        %vm2977 = vcmp.eq.s32.totalorder %v2975, 0
        %v2978 = vxor.u32 %v2972, 2147483648
        %v2979 = vsel %vm2977, %v2971, %v2978
        %vm2980 = vcmp.eq.s32.totalorder %v2975, 2
        %v2981 = vxor.u32 %v2971, 2147483648
        %v2982 = vsel %vm2980, %v2981, %v2972
        %v2983 = vsel %vm2976, %v2979, %v2982
        %v2984 = vsel %vm2973, nan, %v2983
        %v2985 = vand.u32 2147483647, %v1210
        %vm2986 = vcmp.le.f32.partialorder %v2985, 0.7853982
        %vm2987 = vcmp.lt.s32.totalorder %v1210, 0
        %v2988 = vand.u32 %v1210, 2139095040
        %v2989 = vshrl.u32 %v2988, 23
        %v2990 = vsub.s32 %v2989, 127
        %v2991 = vand.u32 2147483647, %v1210
        %v2992 = vand.u32 %v2991, 8388607
        %v2993 = vor.u32 %v2992, 8388608
        %v2994 = vsub.s32 0, %v2993
        %v2995 = vadd.s32 %v2990, 1
        %vm2996 = vcmp.gt.s32.totalorder %v2995, 0
        %v2997 = vsel %vm2996, %v2995, 0
        %v2998 = vshrl.u32 %v2997, 5
        %v2999 = vand.u32 %v2997, 31
        %v3000 = vsub.s32 32, %v2999
        %v3001 = vshrl.u32 683565275, %v3000
        %v3002 = vshll.u32 683565275, %v2999
        %v3003 = vshrl.u32 2475754826, %v3000
        %v3004 = vor.u32 %v3002, %v3003
        %v3005 = vshll.u32 2475754826, %v2999
        %v3006 = vshrl.u32 2131351028, %v3000
        %v3007 = vor.u32 %v3005, %v3006
        %v3008 = vshll.u32 2131351028, %v2999
        %v3009 = vshrl.u32 2102212464, %v3000
        %v3010 = vor.u32 %v3008, %v3009
        %v3011 = vshll.u32 2102212464, %v2999
        %v3012 = vshrl.u32 920167782, %v3000
        %v3013 = vor.u32 %v3011, %v3012
        %v3014 = vshll.u32 920167782, %v2999
        %v3015 = vshrl.u32 1326507024, %v3000
        %v3016 = vor.u32 %v3014, %v3015
        %vm3017 = vcmp.lt.s32.totalorder %v2998, 1
        %vm3018 = vcmp.lt.s32.totalorder %v2998, 2
        %vm3019 = vcmp.lt.s32.totalorder %v2998, 3
        %vm3020 = vcmp.lt.s32.totalorder %v2998, 4
        %v3021 = vsel %vm3017, %v3001, %v3004
        %v3022 = vsel %vm3020, %v3010, 2102212464
        %v3023 = vsel %vm3019, %v3007, %v3022
        %v3024 = vsel %vm3018, %v3021, %v3023
        %v3025 = vsel %vm3017, %v3004, %v3007
        %v3026 = vsel %vm3020, %v3013, 920167782
        %v3027 = vsel %vm3019, %v3010, %v3026
        %v3028 = vsel %vm3018, %v3025, %v3027
        %v3029 = vsel %vm3017, %v3007, %v3010
        %v3030 = vsel %vm3020, %v3016, 1326507024
        %v3031 = vsel %vm3019, %v3013, %v3030
        %v3032 = vsel %vm3018, %v3029, %v3031
        %v3033 = vshll.u32 %v2993, 8
        %v3034 = vmul.u32.u64.compose %v3033, %v3032
        %v3035 = vextract.low.u32 %v3034
        %v3036 = vextract.high.u32 %v3034
        %v3037 = vmul.u32.u64.compose %v3033, %v3028
        %v3038 = vextract.low.u32 %v3037
        %v3039 = vextract.high.u32 %v3037
        %v3040 = vmul.u32 %v3033, %v3024
        %v3041 = vadd.s32 %v3036, %v3038
        %vm3042 = vc.u32 %v3036, %v3038
        %v3043 = vadd.s32 %v3039, 1
        %v3044 = vsel %vm3042, %v3043, %v3039
        %v3045 = vadd.s32 %v3040, %v3044
        %v3046 = vadd.s32 %v3045, 536870912
        %v3047 = vshrl.u32 %v3046, 30
        %v3048 = vshll.u32 %v3047, 30
        %v3049 = vsub.s32 %v3045, %v3048
        %vm3050 = vcmp.lt.s32.totalorder %v3049, 0
        %v3051 = vsub.s32 0, %v3049
        %v3052 = vsel %vm3050, %v3051, %v3049
        %v3053 = vclz %v3052
        %v3054 = vsub.s32 %v3053, 2
        %vm3055 = vcmp.gt.s32.totalorder 0, %v3054
        %v3056 = vsel %vm3055, 0, %v3054
        %v3057 = vsub.s32 32, %v3056
        %v3058 = vshll.u32 %v3049, %v3056
        %v3059 = vshrl.u32 %v3041, %v3057
        %v3060 = vor.u32 %v3058, %v3059
        %v3061 = vsub.s32 4294967266, %v3056
        %v3062 = vadd.s32 %v3061, 127
        %v3063 = vshll.u32 %v3062, 23
        %v3064 = vor.u32 4788187, %v3063
        %v3065 = vand.u32 2147483647, %v3064
        %v3067 = vcvt.s32.f32 %v3060
        %v3068 = vmul.f32 %v3067, %v3065
        %v3069 = vxor.u32 %v3068, 2147483648
        %v3070 = vsel %vm2987, %v3069, %v3068
        %v3071 = vsub.s32 4, %v3047
        %v3072 = vsel %vm2987, %v3071, %v3047
        %v3073 = vsel %vm2986, %v1210, %v3070
        %v3074 = vsel %vm2986, 0, %v3072
        %v3075 = vcosq.f32.pop %v3073
        %v3076 = vsinq.f32.pop %v3073
        %vm3077 = vweird.f32 %v1210
        %v3078 = vadd.s32 %v3074, 3
        %v3079 = vand.u32 %v3078, 3
        %vm3080 = vcmp.lt.s32.totalorder %v3079, 2
        %vm3081 = vcmp.eq.s32.totalorder %v3079, 0
        %v3082 = vxor.u32 %v3076, 2147483648
        %v3083 = vsel %vm3081, %v3075, %v3082
        %vm3084 = vcmp.eq.s32.totalorder %v3079, 2
        %v3085 = vxor.u32 %v3075, 2147483648
        %v3086 = vsel %vm3084, %v3085, %v3076
        %v3087 = vsel %vm3080, %v3083, %v3086
        %v3088 = vsel %vm3077, nan, %v3087
        %v3089 = vand.u32 2147483647, %v1211
        %vm3090 = vcmp.le.f32.partialorder %v3089, 0.7853982
        %vm3091 = vcmp.lt.s32.totalorder %v1211, 0
        %v3092 = vand.u32 %v1211, 2139095040
        %v3093 = vshrl.u32 %v3092, 23
        %v3094 = vsub.s32 %v3093, 127
        %v3095 = vand.u32 2147483647, %v1211
        %v3096 = vand.u32 %v3095, 8388607
        %v3097 = vor.u32 %v3096, 8388608
        %v3098 = vsub.s32 0, %v3097
        %v3099 = vadd.s32 %v3094, 1
        %vm3100 = vcmp.gt.s32.totalorder %v3099, 0
        %v3101 = vsel %vm3100, %v3099, 0
        %v3102 = vshrl.u32 %v3101, 5
        %v3103 = vand.u32 %v3101, 31
        %v3104 = vsub.s32 32, %v3103
        %v3105 = vshrl.u32 683565275, %v3104
        %v3106 = vshll.u32 683565275, %v3103
        %v3107 = vshrl.u32 2475754826, %v3104
        %v3108 = vor.u32 %v3106, %v3107
        %v3109 = vshll.u32 2475754826, %v3103
        %v3110 = vshrl.u32 2131351028, %v3104
        %v3111 = vor.u32 %v3109, %v3110
        %v3112 = vshll.u32 2131351028, %v3103
        %v3113 = vshrl.u32 2102212464, %v3104
        %v3114 = vor.u32 %v3112, %v3113
        %v3115 = vshll.u32 2102212464, %v3103
        %v3116 = vshrl.u32 920167782, %v3104
        %v3117 = vor.u32 %v3115, %v3116
        %v3118 = vshll.u32 920167782, %v3103
        %v3119 = vshrl.u32 1326507024, %v3104
        %v3120 = vor.u32 %v3118, %v3119
        %vm3121 = vcmp.lt.s32.totalorder %v3102, 1
        %vm3122 = vcmp.lt.s32.totalorder %v3102, 2
        %vm3123 = vcmp.lt.s32.totalorder %v3102, 3
        %vm3124 = vcmp.lt.s32.totalorder %v3102, 4
        %v3125 = vsel %vm3121, %v3105, %v3108
        %v3126 = vsel %vm3124, %v3114, 2102212464
        %v3127 = vsel %vm3123, %v3111, %v3126
        %v3128 = vsel %vm3122, %v3125, %v3127
        %v3129 = vsel %vm3121, %v3108, %v3111
        %v3130 = vsel %vm3124, %v3117, 920167782
        %v3131 = vsel %vm3123, %v3114, %v3130
        %v3132 = vsel %vm3122, %v3129, %v3131
        %v3133 = vsel %vm3121, %v3111, %v3114
        %v3134 = vsel %vm3124, %v3120, 1326507024
        %v3135 = vsel %vm3123, %v3117, %v3134
        %v3136 = vsel %vm3122, %v3133, %v3135
        %v3137 = vshll.u32 %v3097, 8
        %v3138 = vmul.u32.u64.compose %v3137, %v3136
        %v3139 = vextract.low.u32 %v3138
        %v3140 = vextract.high.u32 %v3138
        %v3141 = vmul.u32.u64.compose %v3137, %v3132
        %v3142 = vextract.low.u32 %v3141
        %v3143 = vextract.high.u32 %v3141
        %v3144 = vmul.u32 %v3137, %v3128
        %v3145 = vadd.s32 %v3140, %v3142
        %vm3146 = vc.u32 %v3140, %v3142
        %v3147 = vadd.s32 %v3143, 1
        %v3148 = vsel %vm3146, %v3147, %v3143
        %v3149 = vadd.s32 %v3144, %v3148
        %v3150 = vadd.s32 %v3149, 536870912
        %v3151 = vshrl.u32 %v3150, 30
        %v3152 = vshll.u32 %v3151, 30
        %v3153 = vsub.s32 %v3149, %v3152
        %vm3154 = vcmp.lt.s32.totalorder %v3153, 0
        %v3155 = vsub.s32 0, %v3153
        %v3156 = vsel %vm3154, %v3155, %v3153
        %v3157 = vclz %v3156
        %v3158 = vsub.s32 %v3157, 2
        %vm3159 = vcmp.gt.s32.totalorder 0, %v3158
        %v3160 = vsel %vm3159, 0, %v3158
        %v3161 = vsub.s32 32, %v3160
        %v3162 = vshll.u32 %v3153, %v3160
        %v3163 = vshrl.u32 %v3145, %v3161
        %v3164 = vor.u32 %v3162, %v3163
        %v3165 = vsub.s32 4294967266, %v3160
        %v3166 = vadd.s32 %v3165, 127
        %v3167 = vshll.u32 %v3166, 23
        %v3168 = vor.u32 4788187, %v3167
        %v3169 = vand.u32 2147483647, %v3168
        %v3171 = vcvt.s32.f32 %v3164
        %v3172 = vmul.f32 %v3171, %v3169
        %v3173 = vxor.u32 %v3172, 2147483648
        %v3174 = vsel %vm3091, %v3173, %v3172
        %v3175 = vsub.s32 4, %v3151
        %v3176 = vsel %vm3091, %v3175, %v3151
        %v3177 = vsel %vm3090, %v1211, %v3174
        %v3178 = vsel %vm3090, 0, %v3176
        %v3179 = vcosq.f32.pop %v3177
        %v3180 = vsinq.f32.pop %v3177
        %vm3181 = vweird.f32 %v1211
        %v3182 = vadd.s32 %v3178, 3
        %v3183 = vand.u32 %v3182, 3
        %vm3184 = vcmp.lt.s32.totalorder %v3183, 2
        %vm3185 = vcmp.eq.s32.totalorder %v3183, 0
        %v3186 = vxor.u32 %v3180, 2147483648
        %v3187 = vsel %vm3185, %v3179, %v3186
        %vm3188 = vcmp.eq.s32.totalorder %v3183, 2
        %v3189 = vxor.u32 %v3179, 2147483648
        %v3190 = vsel %vm3188, %v3189, %v3180
        %v3191 = vsel %vm3184, %v3187, %v3190
        %v3192 = vsel %vm3181, nan, %v3191
        %v3193 = vand.u32 2147483647, %v1212
        %vm3194 = vcmp.le.f32.partialorder %v3193, 0.7853982
        %vm3195 = vcmp.lt.s32.totalorder %v1212, 0
        %v3196 = vand.u32 %v1212, 2139095040
        %v3197 = vshrl.u32 %v3196, 23
        %v3198 = vsub.s32 %v3197, 127
        %v3199 = vand.u32 2147483647, %v1212
        %v3200 = vand.u32 %v3199, 8388607
        %v3201 = vor.u32 %v3200, 8388608
        %v3202 = vsub.s32 0, %v3201
        %v3203 = vadd.s32 %v3198, 1
        %vm3204 = vcmp.gt.s32.totalorder %v3203, 0
        %v3205 = vsel %vm3204, %v3203, 0
        %v3206 = vshrl.u32 %v3205, 5
        %v3207 = vand.u32 %v3205, 31
        %v3208 = vsub.s32 32, %v3207
        %v3209 = vshrl.u32 683565275, %v3208
        %v3210 = vshll.u32 683565275, %v3207
        %v3211 = vshrl.u32 2475754826, %v3208
        %v3212 = vor.u32 %v3210, %v3211
        %v3213 = vshll.u32 2475754826, %v3207
        %v3214 = vshrl.u32 2131351028, %v3208
        %v3215 = vor.u32 %v3213, %v3214
        %v3216 = vshll.u32 2131351028, %v3207
        %v3217 = vshrl.u32 2102212464, %v3208
        %v3218 = vor.u32 %v3216, %v3217
        %v3219 = vshll.u32 2102212464, %v3207
        %v3220 = vshrl.u32 920167782, %v3208
        %v3221 = vor.u32 %v3219, %v3220
        %v3222 = vshll.u32 920167782, %v3207
        %v3223 = vshrl.u32 1326507024, %v3208
        %v3224 = vor.u32 %v3222, %v3223
        %vm3225 = vcmp.lt.s32.totalorder %v3206, 1
        %vm3226 = vcmp.lt.s32.totalorder %v3206, 2
        %vm3227 = vcmp.lt.s32.totalorder %v3206, 3
        %vm3228 = vcmp.lt.s32.totalorder %v3206, 4
        %v3229 = vsel %vm3225, %v3209, %v3212
        %v3230 = vsel %vm3228, %v3218, 2102212464
        %v3231 = vsel %vm3227, %v3215, %v3230
        %v3232 = vsel %vm3226, %v3229, %v3231
        %v3233 = vsel %vm3225, %v3212, %v3215
        %v3234 = vsel %vm3228, %v3221, 920167782
        %v3235 = vsel %vm3227, %v3218, %v3234
        %v3236 = vsel %vm3226, %v3233, %v3235
        %v3237 = vsel %vm3225, %v3215, %v3218
        %v3238 = vsel %vm3228, %v3224, 1326507024
        %v3239 = vsel %vm3227, %v3221, %v3238
        %v3240 = vsel %vm3226, %v3237, %v3239
        %v3241 = vshll.u32 %v3201, 8
        %v3242 = vmul.u32.u64.compose %v3241, %v3240
        %v3243 = vextract.low.u32 %v3242
        %v3244 = vextract.high.u32 %v3242
        %v3245 = vmul.u32.u64.compose %v3241, %v3236
        %v3246 = vextract.low.u32 %v3245
        %v3247 = vextract.high.u32 %v3245
        %v3248 = vmul.u32 %v3241, %v3232
        %v3249 = vadd.s32 %v3244, %v3246
        %vm3250 = vc.u32 %v3244, %v3246
        %v3251 = vadd.s32 %v3247, 1
        %v3252 = vsel %vm3250, %v3251, %v3247
        %v3253 = vadd.s32 %v3248, %v3252
        %v3254 = vadd.s32 %v3253, 536870912
        %v3255 = vshrl.u32 %v3254, 30
        %v3256 = vshll.u32 %v3255, 30
        %v3257 = vsub.s32 %v3253, %v3256
        %vm3258 = vcmp.lt.s32.totalorder %v3257, 0
        %v3259 = vsub.s32 0, %v3257
        %v3260 = vsel %vm3258, %v3259, %v3257
        %v3261 = vclz %v3260
        %v3262 = vsub.s32 %v3261, 2
        %vm3263 = vcmp.gt.s32.totalorder 0, %v3262
        %v3264 = vsel %vm3263, 0, %v3262
        %v3265 = vsub.s32 32, %v3264
        %v3266 = vshll.u32 %v3257, %v3264
        %v3267 = vshrl.u32 %v3249, %v3265
        %v3268 = vor.u32 %v3266, %v3267
        %v3269 = vsub.s32 4294967266, %v3264
        %v3270 = vadd.s32 %v3269, 127
        %v3271 = vshll.u32 %v3270, 23
        %v3272 = vor.u32 4788187, %v3271
        %v3273 = vand.u32 2147483647, %v3272
        %v3275 = vcvt.s32.f32 %v3268
        %v3276 = vmul.f32 %v3275, %v3273
        %v3277 = vxor.u32 %v3276, 2147483648
        %v3278 = vsel %vm3195, %v3277, %v3276
        %v3279 = vsub.s32 4, %v3255
        %v3280 = vsel %vm3195, %v3279, %v3255
        %v3281 = vsel %vm3194, %v1212, %v3278
        %v3282 = vsel %vm3194, 0, %v3280
        %v3283 = vcosq.f32.pop %v3281
        %v3284 = vsinq.f32.pop %v3281
        %vm3285 = vweird.f32 %v1212
        %v3286 = vadd.s32 %v3282, 3
        %v3287 = vand.u32 %v3286, 3
        %vm3288 = vcmp.lt.s32.totalorder %v3287, 2
        %vm3289 = vcmp.eq.s32.totalorder %v3287, 0
        %v3290 = vxor.u32 %v3284, 2147483648
        %v3291 = vsel %vm3289, %v3283, %v3290
        %vm3292 = vcmp.eq.s32.totalorder %v3287, 2
        %v3293 = vxor.u32 %v3283, 2147483648
        %v3294 = vsel %vm3292, %v3293, %v3284
        %v3295 = vsel %vm3288, %v3291, %v3294
        %v3296 = vsel %vm3285, nan, %v3295
        %v3297 = vand.u32 2147483647, %v1213
        %vm3298 = vcmp.le.f32.partialorder %v3297, 0.7853982
        %vm3299 = vcmp.lt.s32.totalorder %v1213, 0
        %v3300 = vand.u32 %v1213, 2139095040
        %v3301 = vshrl.u32 %v3300, 23
        %v3302 = vsub.s32 %v3301, 127
        %v3303 = vand.u32 2147483647, %v1213
        %v3304 = vand.u32 %v3303, 8388607
        %v3305 = vor.u32 %v3304, 8388608
        %v3306 = vsub.s32 0, %v3305
        %v3307 = vadd.s32 %v3302, 1
        %vm3308 = vcmp.gt.s32.totalorder %v3307, 0
        %v3309 = vsel %vm3308, %v3307, 0
        %v3310 = vshrl.u32 %v3309, 5
        %v3311 = vand.u32 %v3309, 31
        %v3312 = vsub.s32 32, %v3311
        %v3313 = vshrl.u32 683565275, %v3312
        %v3314 = vshll.u32 683565275, %v3311
        %v3315 = vshrl.u32 2475754826, %v3312
        %v3316 = vor.u32 %v3314, %v3315
        %v3317 = vshll.u32 2475754826, %v3311
        %v3318 = vshrl.u32 2131351028, %v3312
        %v3319 = vor.u32 %v3317, %v3318
        %v3320 = vshll.u32 2131351028, %v3311
        %v3321 = vshrl.u32 2102212464, %v3312
        %v3322 = vor.u32 %v3320, %v3321
        %v3323 = vshll.u32 2102212464, %v3311
        %v3324 = vshrl.u32 920167782, %v3312
        %v3325 = vor.u32 %v3323, %v3324
        %v3326 = vshll.u32 920167782, %v3311
        %v3327 = vshrl.u32 1326507024, %v3312
        %v3328 = vor.u32 %v3326, %v3327
        %vm3329 = vcmp.lt.s32.totalorder %v3310, 1
        %vm3330 = vcmp.lt.s32.totalorder %v3310, 2
        %vm3331 = vcmp.lt.s32.totalorder %v3310, 3
        %vm3332 = vcmp.lt.s32.totalorder %v3310, 4
        %v3333 = vsel %vm3329, %v3313, %v3316
        %v3334 = vsel %vm3332, %v3322, 2102212464
        %v3335 = vsel %vm3331, %v3319, %v3334
        %v3336 = vsel %vm3330, %v3333, %v3335
        %v3337 = vsel %vm3329, %v3316, %v3319
        %v3338 = vsel %vm3332, %v3325, 920167782
        %v3339 = vsel %vm3331, %v3322, %v3338
        %v3340 = vsel %vm3330, %v3337, %v3339
        %v3341 = vsel %vm3329, %v3319, %v3322
        %v3342 = vsel %vm3332, %v3328, 1326507024
        %v3343 = vsel %vm3331, %v3325, %v3342
        %v3344 = vsel %vm3330, %v3341, %v3343
        %v3345 = vshll.u32 %v3305, 8
        %v3346 = vmul.u32.u64.compose %v3345, %v3344
        %v3347 = vextract.low.u32 %v3346
        %v3348 = vextract.high.u32 %v3346
        %v3349 = vmul.u32.u64.compose %v3345, %v3340
        %v3350 = vextract.low.u32 %v3349
        %v3351 = vextract.high.u32 %v3349
        %v3352 = vmul.u32 %v3345, %v3336
        %v3353 = vadd.s32 %v3348, %v3350
        %vm3354 = vc.u32 %v3348, %v3350
        %v3355 = vadd.s32 %v3351, 1
        %v3356 = vsel %vm3354, %v3355, %v3351
        %v3357 = vadd.s32 %v3352, %v3356
        %v3358 = vadd.s32 %v3357, 536870912
        %v3359 = vshrl.u32 %v3358, 30
        %v3360 = vshll.u32 %v3359, 30
        %v3361 = vsub.s32 %v3357, %v3360
        %vm3362 = vcmp.lt.s32.totalorder %v3361, 0
        %v3363 = vsub.s32 0, %v3361
        %v3364 = vsel %vm3362, %v3363, %v3361
        %v3365 = vclz %v3364
        %v3366 = vsub.s32 %v3365, 2
        %vm3367 = vcmp.gt.s32.totalorder 0, %v3366
        %v3368 = vsel %vm3367, 0, %v3366
        %v3369 = vsub.s32 32, %v3368
        %v3370 = vshll.u32 %v3361, %v3368
        %v3371 = vshrl.u32 %v3353, %v3369
        %v3372 = vor.u32 %v3370, %v3371
        %v3373 = vsub.s32 4294967266, %v3368
        %v3374 = vadd.s32 %v3373, 127
        %v3375 = vshll.u32 %v3374, 23
        %v3376 = vor.u32 4788187, %v3375
        %v3377 = vand.u32 2147483647, %v3376
        %v3379 = vcvt.s32.f32 %v3372
        %v3380 = vmul.f32 %v3379, %v3377
        %v3381 = vxor.u32 %v3380, 2147483648
        %v3382 = vsel %vm3299, %v3381, %v3380
        %v3383 = vsub.s32 4, %v3359
        %v3384 = vsel %vm3299, %v3383, %v3359
        %v3385 = vsel %vm3298, %v1213, %v3382
        %v3386 = vsel %vm3298, 0, %v3384
        %v3387 = vcosq.f32.pop %v3385
        %v3388 = vsinq.f32.pop %v3385
        %vm3389 = vweird.f32 %v1213
        %v3390 = vadd.s32 %v3386, 3
        %v3391 = vand.u32 %v3390, 3
        %vm3392 = vcmp.lt.s32.totalorder %v3391, 2
        %vm3393 = vcmp.eq.s32.totalorder %v3391, 0
        %v3394 = vxor.u32 %v3388, 2147483648
        %v3395 = vsel %vm3393, %v3387, %v3394
        %vm3396 = vcmp.eq.s32.totalorder %v3391, 2
        %v3397 = vxor.u32 %v3387, 2147483648
        %v3398 = vsel %vm3396, %v3397, %v3388
        %v3399 = vsel %vm3392, %v3395, %v3398
        %v3400 = vsel %vm3389, nan, %v3399
        %v3401 = vand.u32 2147483647, %v1214
        %vm3402 = vcmp.le.f32.partialorder %v3401, 0.7853982
        %vm3403 = vcmp.lt.s32.totalorder %v1214, 0
        %v3404 = vand.u32 %v1214, 2139095040
        %v3405 = vshrl.u32 %v3404, 23
        %v3406 = vsub.s32 %v3405, 127
        %v3407 = vand.u32 2147483647, %v1214
        %v3408 = vand.u32 %v3407, 8388607
        %v3409 = vor.u32 %v3408, 8388608
        %v3410 = vsub.s32 0, %v3409
        %v3411 = vadd.s32 %v3406, 1
        %vm3412 = vcmp.gt.s32.totalorder %v3411, 0
        %v3413 = vsel %vm3412, %v3411, 0
        %v3414 = vshrl.u32 %v3413, 5
        %v3415 = vand.u32 %v3413, 31
        %v3416 = vsub.s32 32, %v3415
        %v3417 = vshrl.u32 683565275, %v3416
        %v3418 = vshll.u32 683565275, %v3415
        %v3419 = vshrl.u32 2475754826, %v3416
        %v3420 = vor.u32 %v3418, %v3419
        %v3421 = vshll.u32 2475754826, %v3415
        %v3422 = vshrl.u32 2131351028, %v3416
        %v3423 = vor.u32 %v3421, %v3422
        %v3424 = vshll.u32 2131351028, %v3415
        %v3425 = vshrl.u32 2102212464, %v3416
        %v3426 = vor.u32 %v3424, %v3425
        %v3427 = vshll.u32 2102212464, %v3415
        %v3428 = vshrl.u32 920167782, %v3416
        %v3429 = vor.u32 %v3427, %v3428
        %v3430 = vshll.u32 920167782, %v3415
        %v3431 = vshrl.u32 1326507024, %v3416
        %v3432 = vor.u32 %v3430, %v3431
        %vm3433 = vcmp.lt.s32.totalorder %v3414, 1
        %vm3434 = vcmp.lt.s32.totalorder %v3414, 2
        %vm3435 = vcmp.lt.s32.totalorder %v3414, 3
        %vm3436 = vcmp.lt.s32.totalorder %v3414, 4
        %v3437 = vsel %vm3433, %v3417, %v3420
        %v3438 = vsel %vm3436, %v3426, 2102212464
        %v3439 = vsel %vm3435, %v3423, %v3438
        %v3440 = vsel %vm3434, %v3437, %v3439
        %v3441 = vsel %vm3433, %v3420, %v3423
        %v3442 = vsel %vm3436, %v3429, 920167782
        %v3443 = vsel %vm3435, %v3426, %v3442
        %v3444 = vsel %vm3434, %v3441, %v3443
        %v3445 = vsel %vm3433, %v3423, %v3426
        %v3446 = vsel %vm3436, %v3432, 1326507024
        %v3447 = vsel %vm3435, %v3429, %v3446
        %v3448 = vsel %vm3434, %v3445, %v3447
        %v3449 = vshll.u32 %v3409, 8
        %v3450 = vmul.u32.u64.compose %v3449, %v3448
        %v3451 = vextract.low.u32 %v3450
        %v3452 = vextract.high.u32 %v3450
        %v3453 = vmul.u32.u64.compose %v3449, %v3444
        %v3454 = vextract.low.u32 %v3453
        %v3455 = vextract.high.u32 %v3453
        %v3456 = vmul.u32 %v3449, %v3440
        %v3457 = vadd.s32 %v3452, %v3454
        %vm3458 = vc.u32 %v3452, %v3454
        %v3459 = vadd.s32 %v3455, 1
        %v3460 = vsel %vm3458, %v3459, %v3455
        %v3461 = vadd.s32 %v3456, %v3460
        %v3462 = vadd.s32 %v3461, 536870912
        %v3463 = vshrl.u32 %v3462, 30
        %v3464 = vshll.u32 %v3463, 30
        %v3465 = vsub.s32 %v3461, %v3464
        %vm3466 = vcmp.lt.s32.totalorder %v3465, 0
        %v3467 = vsub.s32 0, %v3465
        %v3468 = vsel %vm3466, %v3467, %v3465
        %v3469 = vclz %v3468
        %v3470 = vsub.s32 %v3469, 2
        %vm3471 = vcmp.gt.s32.totalorder 0, %v3470
        %v3472 = vsel %vm3471, 0, %v3470
        %v3473 = vsub.s32 32, %v3472
        %v3474 = vshll.u32 %v3465, %v3472
        %v3475 = vshrl.u32 %v3457, %v3473
        %v3476 = vor.u32 %v3474, %v3475
        %v3477 = vsub.s32 4294967266, %v3472
        %v3478 = vadd.s32 %v3477, 127
        %v3479 = vshll.u32 %v3478, 23
        %v3480 = vor.u32 4788187, %v3479
        %v3481 = vand.u32 2147483647, %v3480
        %v3483 = vcvt.s32.f32 %v3476
        %v3484 = vmul.f32 %v3483, %v3481
        %v3485 = vxor.u32 %v3484, 2147483648
        %v3486 = vsel %vm3403, %v3485, %v3484
        %v3487 = vsub.s32 4, %v3463
        %v3488 = vsel %vm3403, %v3487, %v3463
        %v3489 = vsel %vm3402, %v1214, %v3486
        %v3490 = vsel %vm3402, 0, %v3488
        %v3491 = vcosq.f32.pop %v3489
        %v3492 = vsinq.f32.pop %v3489
        %vm3493 = vweird.f32 %v1214
        %v3494 = vadd.s32 %v3490, 3
        %v3495 = vand.u32 %v3494, 3
        %vm3496 = vcmp.lt.s32.totalorder %v3495, 2
        %vm3497 = vcmp.eq.s32.totalorder %v3495, 0
        %v3498 = vxor.u32 %v3492, 2147483648
        %v3499 = vsel %vm3497, %v3491, %v3498
        %vm3500 = vcmp.eq.s32.totalorder %v3495, 2
        %v3501 = vxor.u32 %v3491, 2147483648
        %v3502 = vsel %vm3500, %v3501, %v3492
        %v3503 = vsel %vm3496, %v3499, %v3502
        %v3504 = vsel %vm3493, nan, %v3503
        %v3505 = vand.u32 2147483647, %v1215
        %vm3506 = vcmp.le.f32.partialorder %v3505, 0.7853982
        %vm3507 = vcmp.lt.s32.totalorder %v1215, 0
        %v3508 = vand.u32 %v1215, 2139095040
        %v3509 = vshrl.u32 %v3508, 23
        %v3510 = vsub.s32 %v3509, 127
        %v3511 = vand.u32 2147483647, %v1215
        %v3512 = vand.u32 %v3511, 8388607
        %v3513 = vor.u32 %v3512, 8388608
        %v3514 = vsub.s32 0, %v3513
        %v3515 = vadd.s32 %v3510, 1
        %vm3516 = vcmp.gt.s32.totalorder %v3515, 0
        %v3517 = vsel %vm3516, %v3515, 0
        %v3518 = vshrl.u32 %v3517, 5
        %v3519 = vand.u32 %v3517, 31
        %v3520 = vsub.s32 32, %v3519
        %v3521 = vshrl.u32 683565275, %v3520
        %v3522 = vshll.u32 683565275, %v3519
        %v3523 = vshrl.u32 2475754826, %v3520
        %v3524 = vor.u32 %v3522, %v3523
        %v3525 = vshll.u32 2475754826, %v3519
        %v3526 = vshrl.u32 2131351028, %v3520
        %v3527 = vor.u32 %v3525, %v3526
        %v3528 = vshll.u32 2131351028, %v3519
        %v3529 = vshrl.u32 2102212464, %v3520
        %v3530 = vor.u32 %v3528, %v3529
        %v3531 = vshll.u32 2102212464, %v3519
        %v3532 = vshrl.u32 920167782, %v3520
        %v3533 = vor.u32 %v3531, %v3532
        %v3534 = vshll.u32 920167782, %v3519
        %v3535 = vshrl.u32 1326507024, %v3520
        %v3536 = vor.u32 %v3534, %v3535
        %vm3537 = vcmp.lt.s32.totalorder %v3518, 1
        %vm3538 = vcmp.lt.s32.totalorder %v3518, 2
        %vm3539 = vcmp.lt.s32.totalorder %v3518, 3
        %vm3540 = vcmp.lt.s32.totalorder %v3518, 4
        %v3541 = vsel %vm3537, %v3521, %v3524
        %v3542 = vsel %vm3540, %v3530, 2102212464
        %v3543 = vsel %vm3539, %v3527, %v3542
        %v3544 = vsel %vm3538, %v3541, %v3543
        %v3545 = vsel %vm3537, %v3524, %v3527
        %v3546 = vsel %vm3540, %v3533, 920167782
        %v3547 = vsel %vm3539, %v3530, %v3546
        %v3548 = vsel %vm3538, %v3545, %v3547
        %v3549 = vsel %vm3537, %v3527, %v3530
        %v3550 = vsel %vm3540, %v3536, 1326507024
        %v3551 = vsel %vm3539, %v3533, %v3550
        %v3552 = vsel %vm3538, %v3549, %v3551
        %v3553 = vshll.u32 %v3513, 8
        %v3554 = vmul.u32.u64.compose %v3553, %v3552
        %v3555 = vextract.low.u32 %v3554
        %v3556 = vextract.high.u32 %v3554
        %v3557 = vmul.u32.u64.compose %v3553, %v3548
        %v3558 = vextract.low.u32 %v3557
        %v3559 = vextract.high.u32 %v3557
        %v3560 = vmul.u32 %v3553, %v3544
        %v3561 = vadd.s32 %v3556, %v3558
        %vm3562 = vc.u32 %v3556, %v3558
        %v3563 = vadd.s32 %v3559, 1
        %v3564 = vsel %vm3562, %v3563, %v3559
        %v3565 = vadd.s32 %v3560, %v3564
        %v3566 = vadd.s32 %v3565, 536870912
        %v3567 = vshrl.u32 %v3566, 30
        %v3568 = vshll.u32 %v3567, 30
        %v3569 = vsub.s32 %v3565, %v3568
        %vm3570 = vcmp.lt.s32.totalorder %v3569, 0
        %v3571 = vsub.s32 0, %v3569
        %v3572 = vsel %vm3570, %v3571, %v3569
        %v3573 = vclz %v3572
        %v3574 = vsub.s32 %v3573, 2
        %vm3575 = vcmp.gt.s32.totalorder 0, %v3574
        %v3576 = vsel %vm3575, 0, %v3574
        %v3577 = vsub.s32 32, %v3576
        %v3578 = vshll.u32 %v3569, %v3576
        %v3579 = vshrl.u32 %v3561, %v3577
        %v3580 = vor.u32 %v3578, %v3579
        %v3581 = vsub.s32 4294967266, %v3576
        %v3582 = vadd.s32 %v3581, 127
        %v3583 = vshll.u32 %v3582, 23
        %v3584 = vor.u32 4788187, %v3583
        %v3585 = vand.u32 2147483647, %v3584
        %v3587 = vcvt.s32.f32 %v3580
        %v3588 = vmul.f32 %v3587, %v3585
        %v3589 = vxor.u32 %v3588, 2147483648
        %v3590 = vsel %vm3507, %v3589, %v3588
        %v3591 = vsub.s32 4, %v3567
        %v3592 = vsel %vm3507, %v3591, %v3567
        %v3593 = vsel %vm3506, %v1215, %v3590
        %v3594 = vsel %vm3506, 0, %v3592
        %v3595 = vcosq.f32.pop %v3593
        %v3596 = vsinq.f32.pop %v3593
        %vm3597 = vweird.f32 %v1215
        %v3598 = vadd.s32 %v3594, 3
        %v3599 = vand.u32 %v3598, 3
        %vm3600 = vcmp.lt.s32.totalorder %v3599, 2
        %vm3601 = vcmp.eq.s32.totalorder %v3599, 0
        %v3602 = vxor.u32 %v3596, 2147483648
        %v3603 = vsel %vm3601, %v3595, %v3602
        %vm3604 = vcmp.eq.s32.totalorder %v3599, 2
        %v3605 = vxor.u32 %v3595, 2147483648
        %v3606 = vsel %vm3604, %v3605, %v3596
        %v3607 = vsel %vm3600, %v3603, %v3606
        %v3608 = vsel %vm3597, nan, %v3607
        %v3609 = vand.u32 2147483647, %v1216
        %vm3610 = vcmp.le.f32.partialorder %v3609, 0.7853982
        %vm3611 = vcmp.lt.s32.totalorder %v1216, 0
        %v3612 = vand.u32 %v1216, 2139095040
        %v3613 = vshrl.u32 %v3612, 23
        %v3614 = vsub.s32 %v3613, 127
        %v3615 = vand.u32 2147483647, %v1216
        %v3616 = vand.u32 %v3615, 8388607
        %v3617 = vor.u32 %v3616, 8388608
        %v3618 = vsub.s32 0, %v3617
        %v3619 = vadd.s32 %v3614, 1
        %vm3620 = vcmp.gt.s32.totalorder %v3619, 0
        %v3621 = vsel %vm3620, %v3619, 0
        %v3622 = vshrl.u32 %v3621, 5
        %v3623 = vand.u32 %v3621, 31
        %v3624 = vsub.s32 32, %v3623
        %v3625 = vshrl.u32 683565275, %v3624
        %v3626 = vshll.u32 683565275, %v3623
        %v3627 = vshrl.u32 2475754826, %v3624
        %v3628 = vor.u32 %v3626, %v3627
        %v3629 = vshll.u32 2475754826, %v3623
        %v3630 = vshrl.u32 2131351028, %v3624
        %v3631 = vor.u32 %v3629, %v3630
        %v3632 = vshll.u32 2131351028, %v3623
        %v3633 = vshrl.u32 2102212464, %v3624
        %v3634 = vor.u32 %v3632, %v3633
        %v3635 = vshll.u32 2102212464, %v3623
        %v3636 = vshrl.u32 920167782, %v3624
        %v3637 = vor.u32 %v3635, %v3636
        %v3638 = vshll.u32 920167782, %v3623
        %v3639 = vshrl.u32 1326507024, %v3624
        %v3640 = vor.u32 %v3638, %v3639
        %vm3641 = vcmp.lt.s32.totalorder %v3622, 1
        %vm3642 = vcmp.lt.s32.totalorder %v3622, 2
        %vm3643 = vcmp.lt.s32.totalorder %v3622, 3
        %vm3644 = vcmp.lt.s32.totalorder %v3622, 4
        %v3645 = vsel %vm3641, %v3625, %v3628
        %v3646 = vsel %vm3644, %v3634, 2102212464
        %v3647 = vsel %vm3643, %v3631, %v3646
        %v3648 = vsel %vm3642, %v3645, %v3647
        %v3649 = vsel %vm3641, %v3628, %v3631
        %v3650 = vsel %vm3644, %v3637, 920167782
        %v3651 = vsel %vm3643, %v3634, %v3650
        %v3652 = vsel %vm3642, %v3649, %v3651
        %v3653 = vsel %vm3641, %v3631, %v3634
        %v3654 = vsel %vm3644, %v3640, 1326507024
        %v3655 = vsel %vm3643, %v3637, %v3654
        %v3656 = vsel %vm3642, %v3653, %v3655
        %v3657 = vshll.u32 %v3617, 8
        %v3658 = vmul.u32.u64.compose %v3657, %v3656
        %v3659 = vextract.low.u32 %v3658
        %v3660 = vextract.high.u32 %v3658
        %v3661 = vmul.u32.u64.compose %v3657, %v3652
        %v3662 = vextract.low.u32 %v3661
        %v3663 = vextract.high.u32 %v3661
        %v3664 = vmul.u32 %v3657, %v3648
        %v3665 = vadd.s32 %v3660, %v3662
        %vm3666 = vc.u32 %v3660, %v3662
        %v3667 = vadd.s32 %v3663, 1
        %v3668 = vsel %vm3666, %v3667, %v3663
        %v3669 = vadd.s32 %v3664, %v3668
        %v3670 = vadd.s32 %v3669, 536870912
        %v3671 = vshrl.u32 %v3670, 30
        %v3672 = vshll.u32 %v3671, 30
        %v3673 = vsub.s32 %v3669, %v3672
        %vm3674 = vcmp.lt.s32.totalorder %v3673, 0
        %v3675 = vsub.s32 0, %v3673
        %v3676 = vsel %vm3674, %v3675, %v3673
        %v3677 = vclz %v3676
        %v3678 = vsub.s32 %v3677, 2
        %vm3679 = vcmp.gt.s32.totalorder 0, %v3678
        %v3680 = vsel %vm3679, 0, %v3678
        %v3681 = vsub.s32 32, %v3680
        %v3682 = vshll.u32 %v3673, %v3680
        %v3683 = vshrl.u32 %v3665, %v3681
        %v3684 = vor.u32 %v3682, %v3683
        %v3685 = vsub.s32 4294967266, %v3680
        %v3686 = vadd.s32 %v3685, 127
        %v3687 = vshll.u32 %v3686, 23
        %v3688 = vor.u32 4788187, %v3687
        %v3689 = vand.u32 2147483647, %v3688
        %v3691 = vcvt.s32.f32 %v3684
        %v3692 = vmul.f32 %v3691, %v3689
        %v3693 = vxor.u32 %v3692, 2147483648
        %v3694 = vsel %vm3611, %v3693, %v3692
        %v3695 = vsub.s32 4, %v3671
        %v3696 = vsel %vm3611, %v3695, %v3671
        %v3697 = vsel %vm3610, %v1216, %v3694
        %v3698 = vsel %vm3610, 0, %v3696
        %v3699 = vcosq.f32.pop %v3697
        %v3700 = vsinq.f32.pop %v3697
        %vm3701 = vweird.f32 %v1216
        %v3702 = vadd.s32 %v3698, 3
        %v3703 = vand.u32 %v3702, 3
        %vm3704 = vcmp.lt.s32.totalorder %v3703, 2
        %vm3705 = vcmp.eq.s32.totalorder %v3703, 0
        %v3706 = vxor.u32 %v3700, 2147483648
        %v3707 = vsel %vm3705, %v3699, %v3706
        %vm3708 = vcmp.eq.s32.totalorder %v3703, 2
        %v3709 = vxor.u32 %v3699, 2147483648
        %v3710 = vsel %vm3708, %v3709, %v3700
        %v3711 = vsel %vm3704, %v3707, %v3710
        %v3712 = vsel %vm3701, nan, %v3711
        %v3713 = vadd.f32 %v810, %v1320
        %v3714 = vadd.f32 %v812, %v1424
        %v3715 = vadd.f32 %v923, %v1528
        %v3716 = vadd.f32 %v816, %v1632
        %v3717 = vadd.f32 %v818, %v1736
        %v3718 = vadd.f32 %v928, %v1840
        %v3719 = vadd.f32 %v822, %v1944
        %v3720 = vadd.f32 %v824, %v2048
        %v3721 = vadd.f32 %v933, %v2152
        %v3722 = vadd.f32 %v828, %v2256
        %v3723 = vadd.f32 %v830, %v2360
        %v3724 = vadd.f32 %v938, %v2464
        %v3725 = vadd.f32 %v834, %v2568
        %v3726 = vadd.f32 %v836, %v2672
        %v3727 = vadd.f32 %v943, %v2776
        %v3728 = vadd.f32 %v840, %v2880
        %v3729 = vadd.f32 %v842, %v2984
        %v3730 = vadd.f32 %v948, %v3088
        %v3731 = vadd.f32 %v846, %v3192
        %v3732 = vadd.f32 %v848, %v3296
        %v3733 = vadd.f32 %v953, %v3400
        %v3734 = vadd.f32 %v852, %v3504
        %v3735 = vadd.f32 %v854, %v3608
        %v3736 = vadd.f32 %v958, %v3712
        %v3737 = vld [vmem:[%s289] sm:$0xff]
        %v3738 = vld [vmem:[%s289 + $0x8] sm:$0xff]
        %v3739 = vld [vmem:[%s289 + $0x10] sm:$0xff]
        %v3740 = vld [vmem:[%s289 + $0x18] sm:$0xff]
        %v3741 = vld [vmem:[%s289 + $0x20] sm:$0xff]
        %v3742 = vld [vmem:[%s289 + $0x28] sm:$0xff]
        %v3743 = vld [vmem:[%s289 + $0x30] sm:$0xff]
        %v3744 = vld [vmem:[%s289 + $0x38] sm:$0xff]
        %v3745 = vld [vmem:[%s289 + $0x40] sm:$0xff]
        %v3746 = vld [vmem:[%s289 + $0x48] sm:$0xff]
        %v3747 = vld [vmem:[%s289 + $0x50] sm:$0xff]
        %v3748 = vld [vmem:[%s289 + $0x58] sm:$0xff]
        %v3749 = vld [vmem:[%s289 + $0x60] sm:$0xff]
        %v3750 = vld [vmem:[%s289 + $0x68] sm:$0xff]
        %v3751 = vld [vmem:[%s289 + $0x70] sm:$0xff]
        %v3752 = vld [vmem:[%s289 + $0x78] sm:$0xff]
        %v3753 = vld [vmem:[%s289 + $0x80] sm:$0xff]
        %v3754 = vld [vmem:[%s289 + $0x88] sm:$0xff]
        %v3755 = vld [vmem:[%s289 + $0x90] sm:$0xff]
        %v3756 = vld [vmem:[%s289 + $0x98] sm:$0xff]
        %v3757 = vld [vmem:[%s289 + $0xa0] sm:$0xff]
        %v3758 = vld [vmem:[%s289 + $0xa8] sm:$0xff]
        %v3759 = vld [vmem:[%s289 + $0xb0] sm:$0xff]
        %v3760 = vld [vmem:[%s289 + $0xb8] sm:$0xff]
        %v3761 = vadd.f32 %v3737, %v3713
        %v3762 = vadd.f32 %v3738, %v3714
        %v3763 = vadd.f32 %v3739, %v3715
        %v3764 = vadd.f32 %v3740, %v3716
        %v3765 = vadd.f32 %v3741, %v3717
        %v3766 = vadd.f32 %v3742, %v3718
        %v3767 = vadd.f32 %v3743, %v3719
        %v3768 = vadd.f32 %v3744, %v3720
        %v3769 = vadd.f32 %v3745, %v3721
        %v3770 = vadd.f32 %v3746, %v3722
        %v3771 = vadd.f32 %v3747, %v3723
        %v3772 = vadd.f32 %v3748, %v3724
        %v3773 = vadd.f32 %v3749, %v3725
        %v3774 = vadd.f32 %v3750, %v3726
        %v3775 = vadd.f32 %v3751, %v3727
        %v3776 = vadd.f32 %v3752, %v3728
        %v3777 = vadd.f32 %v3753, %v3729
        %v3778 = vadd.f32 %v3754, %v3730
        %v3779 = vadd.f32 %v3755, %v3731
        %v3780 = vadd.f32 %v3756, %v3732
        %v3781 = vadd.f32 %v3757, %v3733
        %v3782 = vadd.f32 %v3758, %v3734
        %v3783 = vadd.f32 %v3759, %v3735
        %v3784 = vadd.f32 %v3760, %v3736
        %3785 = vst [vmem:[%s328] sm:$0xff] %v3761
        %3786 = vst [vmem:[%s328 + $0x8] sm:$0xff] %v3762
        %3787 = vst [vmem:[%s328 + $0x10] sm:$0xff] %v3763
        %3788 = vst [vmem:[%s328 + $0x18] sm:$0xff] %v3764
        %3789 = vst [vmem:[%s328 + $0x20] sm:$0xff] %v3765
        %3790 = vst [vmem:[%s328 + $0x28] sm:$0xff] %v3766
        %3791 = vst [vmem:[%s328 + $0x30] sm:$0xff] %v3767
        %3792 = vst [vmem:[%s328 + $0x38] sm:$0xff] %v3768
        %3793 = vst [vmem:[%s328 + $0x40] sm:$0xff] %v3769
        %3794 = vst [vmem:[%s328 + $0x48] sm:$0xff] %v3770
        %3795 = vst [vmem:[%s328 + $0x50] sm:$0xff] %v3771
        %3796 = vst [vmem:[%s328 + $0x58] sm:$0xff] %v3772
        %3797 = vst [vmem:[%s328 + $0x60] sm:$0xff] %v3773
        %3798 = vst [vmem:[%s328 + $0x68] sm:$0xff] %v3774
        %3799 = vst [vmem:[%s328 + $0x70] sm:$0xff] %v3775
        %3800 = vst [vmem:[%s328 + $0x78] sm:$0xff] %v3776
        %3801 = vst [vmem:[%s328 + $0x80] sm:$0xff] %v3777
        %3802 = vst [vmem:[%s328 + $0x88] sm:$0xff] %v3778
        %3803 = vst [vmem:[%s328 + $0x90] sm:$0xff] %v3779
        %3804 = vst [vmem:[%s328 + $0x98] sm:$0xff] %v3780
        %3805 = vst [vmem:[%s328 + $0xa0] sm:$0xff] %v3781
        %3806 = vst [vmem:[%s328 + $0xa8] sm:$0xff] %v3782
        %3807 = vst [vmem:[%s328 + $0xb0] sm:$0xff] %v3783
        %3808 = vst [vmem:[%s328 + $0xb8] sm:$0xff] %v3784
        %s3809 = sand.u32 %s190, 1
        %s3810 = scalar_lea.sflag [#allocation4], %s3809
        %s3811 = sand.u32 %s190, 1
        %s3812 = smul.addr %s3811, 192
        %s3813 = scalar_lea.vmem [#allocation7], %s3812
        // Predicated region
        $region57: #{tpu_custom_call.1} parent=47 // pred_check
          %p3814 = pneg %p200
        $region58: #{tpu_custom_call.1} parent=47 // pred_check_branch
          %3816 = sbr.rel (%p3814) target = $region60
        $region59: #{tpu_custom_call.1} parent=47 // pred_region
          %s3817 = smul.u32 8, %s25
          %s3819 = ssub.s32 3072, 3072
          %3820 = vsyncadd %s3810, %s3819
          %s3821 = smul.addr %s3817, 3
          %s3822 = smul.addr %s3821, 128
          %s3823 = scalar_lea.hbm %s7, %s3822
          %s3824 = sshll.u32 %s3813, 4
          %s3825 = int_to_ptr.vmem [resolvable:$true] %s3824
          %3830 = dma.vmem_to_hbm [thread:$0]  %s3825, 3072, %s3823, %s3810, 384, 384, 24
        $region60: #{tpu_custom_call.1} parent=47 // pred_fallthru
          _
      $region48: #{tpu_custom_call.1} parent=5 // pred_fallthru
        _
      %p3831 = scmp.le.s32.totalorder 2, %s20
      // Predicated region
      $region61: #{tpu_custom_call.1} parent=5 // pred_check
        %p3832 = pneg %p3831
      $region62: #{tpu_custom_call.1} parent=5 // pred_check_branch
        %3834 = sbr.rel (%p3832) target = $region64
      $region63: #{tpu_custom_call.1} parent=5 // pred_region
        %s3835 = ssub.s32 %s20, 2
        // Predicated region
        $region65: #{tpu_custom_call.1} parent=63 // pred_check
          %p3836 = pneg %p206
        $region66: #{tpu_custom_call.1} parent=63 // pred_check_branch
          %3838 = sbr.rel (%p3836) target = $region68
        $region67: #{tpu_custom_call.1} parent=63 // pred_region
          %s3839 = sand.u32 %s191, 1
          %s3840 = scalar_lea.sflag [#allocation4], %s3839
          %s3841 = sand.u32 %s191, 1
          %s3842 = smul.addr %s3841, 192
          %s3843 = scalar_lea.vmem [#allocation7], %s3842
          %3844 = dma.done %s3840, 3072
        $region68: #{tpu_custom_call.1} parent=63 // pred_fallthru
          _
      $region64: #{tpu_custom_call.1} parent=5 // pred_fallthru
        _
    $region6: #{tpu_custom_call.1} parent=1 // loop_footer
      %s24 = sadd.s32 1, %s20
    $region7: #{tpu_custom_call.1} parent=1 // loop_footer_branch
      %19 = sbr.rel target = $region3
    $region8: #{tpu_custom_call.1} parent=1 // loop_exit
      _
    %3845 = vsyncpa [#allocation3], 1
    %s3846 = scalar_lea.sflag [#allocation3], 1
    %3847 = vsyncpa %s3846, 1
    %3848 = vsyncpa [#allocation6], 1
    %3849 = vsyncpa [#allocation4], 1
    %s3850 = scalar_lea.sflag [#allocation4], 1
    %3851 = vsyncpa %s3850, 1

</llo_original>
